<compile_context>
chip_gen: v5e
topology: v5e:2x2
jax: 0.10.0
libtpu: 0.0.40
codegen_flags: <defaults>
</compile_context>

<pallas_src>
import jax
import jax.numpy as jnp
from jax.experimental import pallas as pl
from jax.experimental.pallas import tpu as pltpu

# Static SimpleCNN sizes (16x16 RGB input, as the test shapes imply).
H0, W0, CIN = 16, 16, 3
C1, C2, KS = 32, 64, 3
H1, W1 = H0 - KS + 1, W0 - KS + 1        # 14, 14  conv1 output
HP, WP = H1 // 2, W1 // 2                # 7, 7    maxpool output
H2, W2 = HP - KS + 1, WP - KS + 1        # 5, 5    conv2 output
HO, WO = H2 // 2, W2 // 2                # 2, 2    avgpool output (floor mode)
WMAX = W1 - 1                            # 13      width positions after pair-max

B_TILE = 8                               # images per grid step (conv1 M = 112 rows)


# ---------------------------------------------------------------------------
# The single fused kernel (one grid step = B_TILE images)
# ---------------------------------------------------------------------------
def _simple_cnn_kernel(xsh_ref, w1_ref, b1_ref, s1_ref, w2_ref, b2_ref,
                       t2_ref, s2_ref, out_ref):
    f32, bf16 = jnp.float32, jnp.bfloat16
    bh1 = xsh_ref.shape[1]                                          # B*H1 rows

    # ---- conv1 + ReLU: 3 wide MXU matmuls, M = B*14 rows -------------------
    acc1 = jnp.dot(xsh_ref[0], w1_ref[0], preferred_element_type=f32)
    for kh in range(1, KS):
        acc1 = acc1 + jnp.dot(xsh_ref[kh], w1_ref[kh], preferred_element_type=f32)
    a1 = jnp.maximum(acc1 + b1_ref[...], 0.0)                       # (B*14, 448) f32

    # ---- maxpool 2x2 --------------------------------------------------------
    # Row half: pairwise row max at pitch 14; rows with i%14 == 13 mix two
    # adjacent images but are never selected by S1 below.
    rmax = jnp.maximum(a1[0:bh1 - 1, :], a1[1:bh1, :])              # (B*14-1, 448)
    # Width half: pairwise max of adjacent 32-lane width blocks (a 32-lane
    # shift; does the job of the old T1 select matmuls on the XLU/VPU).
    cmax = jnp.maximum(rmax[:, 0:WMAX * C1], rmax[:, C1:W1 * C1])   # (B*14-1, 416)
    cmax = cmax.astype(bf16)

    # ---- conv2 + ReLU -------------------------------------------------------
    # S1[kh] picks rmax row b*14 + 2*(i2+kh) per image (maxpool row down-select
    # fused with conv2's row alignment); the stride-2 width down-select is
    # folded into the zero-interleaved Toeplitz W2 (K = 416).
    acc2 = None
    for kh in range(KS):
        p1 = jnp.dot(s1_ref[kh], cmax, preferred_element_type=f32).astype(bf16)
        t = jnp.dot(p1, w2_ref[kh], preferred_element_type=f32)
        acc2 = t if acc2 is None else acc2 + t
    a2 = jnp.maximum(acc2 + b2_ref[...], 0.0)                       # (B*5, 320) f32

    # ---- avgpool 2x2 (floor) ------------------------------------------------
    # One width pair-sum+select matmul (T2sum) and one row pair-avg matmul
    # (S2, 0.25 folded in).
    csum = jnp.dot(a2.astype(bf16), t2_ref[...], preferred_element_type=f32)   # (B*5, 128)
    out_ref[...] = jnp.dot(s2_ref[...], csum.astype(bf16),
                           preferred_element_type=f32)                          # (B*2, 128)


# ---------------------------------------------------------------------------
# One-time weight / constant packing (wrapper side, tiny)
# ---------------------------------------------------------------------------
def torch_conv_weight(w_oihw):
    """PyTorch Conv2d weight (Cout, Cin, KH, KW) -> this kernel's (KH, KW, Cin, Cout)."""
    return jnp.transpose(jnp.asarray(w_oihw), (2, 3, 1, 0))


def _toeplitz_weights(w, in_w, out_w, stride=1):
    """(KH,KW,Cin,Cout) -> (KH, in_w*Cin, out_w*Cout) width-Toeplitz matmul operand.

    out[kh, wp*Cin+ci, j*Cout+co] = w[kh, (wp - stride*j)//stride, ci, co] when
    wp - stride*j is a non-negative multiple of `stride` below stride*KW, else 0.
    stride=2 additionally folds the maxpool's stride-2 width down-select.
    """
    kh, kw, cin, cout = w.shape
    wp = jnp.arange(in_w)[:, None]
    j = jnp.arange(out_w)[None, :]
    diff = wp - stride * j
    valid = (diff >= 0) & (diff < stride * kw) & (diff % stride == 0)
    tap = jnp.clip(diff // stride, 0, kw - 1)
    g = w[:, tap]                                        # (KH, in_w, out_w, Cin, Cout)
    g = jnp.where(valid[None, :, :, None, None], g, 0.0)
    g = jnp.transpose(g, (0, 1, 3, 2, 4))                # (KH, in_w, Cin, out_w, Cout)
    return g.reshape(kh, in_w * cin, out_w * cout)


def _maxpool_row_select(batch, kh):
    """(B*H2, B*H1-1) 0/1 matrix: row b*H2+i2 picks rmax row b*H1 + 2*(i2+kh)."""
    r = jnp.arange(batch * H2)
    tgt = (r // H2) * H1 + 2 * (r % H2 + kh)
    cols = jnp.arange(batch * H1 - 1)
    return (cols[None, :] == tgt[:, None]).astype(jnp.float32)


def _avgpool_row_select(batch):
    """(B*HO, B*H2): row b*HO+i averages conv2 rows {2i, 2i+1} with the 2x2 factor 0.25."""
    r = jnp.arange(batch * HO)
    base = (r // HO) * H2 + 2 * (r % HO)
    cols = jnp.arange(batch * H2)
    hit = (cols[None, :] == base[:, None]) | (cols[None, :] == base[:, None] + 1)
    return hit.astype(jnp.float32) * 0.25


def _avgpool_col_select():
    """(W2*C2, WO*C2): lane block j sums width blocks {2j, 2j+1} (width 4 dropped)."""
    w = jnp.arange(W2)[:, None]
    j = jnp.arange(WO)[None, :]
    sel = ((w // 2) == j) & (w < 2 * WO)
    return jnp.kron(sel.astype(jnp.float32), jnp.eye(C2, dtype=jnp.float32))


def init_params(key):
    # SimpleCNN: conv1 = Conv2d(3, 32, 3); conv2 = Conv2d(32, 64, 3).
    # Weights are generated directly in (KH, KW, Cin, Cout); use
    # torch_conv_weight() when importing real PyTorch (Cout, Cin, KH, KW) weights.
    k1, k2, k3, k4 = jax.random.split(key, 4)
    return {
        "w1": jax.random.normal(k1, (KS, KS, CIN, C1), jnp.float32) * 0.1,
        "b1": jax.random.normal(k2, (C1,), jnp.float32) * 0.1,
        "w2": jax.random.normal(k3, (KS, KS, C1, C2), jnp.float32) * 0.1,
        "b2": jax.random.normal(k4, (C2,), jnp.float32) * 0.1,
    }


def pack_params(params, batch_tile=B_TILE):
    """One-time repack into the kernel's matmul operands.

    MXU operands are bf16 (f32 accumulation in-kernel); biases stay f32.
    """
    bf16 = jnp.bfloat16
    return {
        "W1": _toeplitz_weights(params["w1"], W0, W1).astype(bf16),              # (3, 48, 448)
        "b1": jnp.tile(params["b1"], W1)[None, :].astype(jnp.float32),           # (1, 448)
        "S1": jnp.stack([_maxpool_row_select(batch_tile, kh)
                         for kh in range(KS)]).astype(bf16),                     # (3, B*5, B*14-1)
        "W2": _toeplitz_weights(params["w2"], WMAX, W2, stride=2).astype(bf16),  # (3, 416, 320)
        "b2": jnp.tile(params["b2"], W2)[None, :].astype(jnp.float32),           # (1, 320)
        "T2": _avgpool_col_select().astype(bf16),                                # (320, 128)
        "S2": _avgpool_row_select(batch_tile).astype(bf16),                      # (B*2, B*5)
    }


# ---------------------------------------------------------------------------
# Forward pass: NCHW in, NCHW out (PyTorch convention)
# ---------------------------------------------------------------------------
def simple_cnn_forward(x_nchw, packed):
    n = x_nchw.shape[0]
    b = packed["S2"].shape[0] // HO               # images per grid step (static)
    npad = pl.cdiv(n, b) * b

    x = jnp.transpose(x_nchw, (0, 2, 3, 1)).reshape(n, H0, W0 * CIN)
    if npad != n:                                 # pad batch to a multiple of b
        x = jnp.concatenate(
            [x, jnp.zeros((npad - n, H0, W0 * CIN), x.dtype)], axis=0)
    # Per-kernel-row shifted input slabs so conv1 is three full-width MXU
    # matmuls with M = B*14 rows; built once per call on the tiny input,
    # outside the kernel (no intermediate ever round-trips HBM).
    xsh = jnp.stack([x[:, kh:kh + H1, :].reshape(npad * H1, W0 * CIN)
                     for kh in range(KS)], axis=0).astype(jnp.bfloat16)

    out = pl.pallas_call(
        _simple_cnn_kernel,
        grid=(npad // b,),
        in_specs=[
            pl.BlockSpec((KS, b * H1, W0 * CIN), lambda i: (0, i, 0)),    # shifted input
            pl.BlockSpec((KS, W0 * CIN, W1 * C1), lambda i: (0, 0, 0)),   # W1 Toeplitz
            pl.BlockSpec((1, W1 * C1), lambda i: (0, 0)),                 # b1 (tiled)
            pl.BlockSpec((KS, b * H2, b * H1 - 1), lambda i: (0, 0, 0)),  # maxpool row sel
            pl.BlockSpec((KS, WMAX * C1, W2 * C2), lambda i: (0, 0, 0)),  # W2 Toeplitz (stride 2)
            pl.BlockSpec((1, W2 * C2), lambda i: (0, 0)),                 # b2 (tiled)
            pl.BlockSpec((W2 * C2, WO * C2), lambda i: (0, 0)),           # avgpool col sum
            pl.BlockSpec((b * HO, b * H2), lambda i: (0, 0)),             # avgpool row avg
        ],
        out_specs=pl.BlockSpec((b * HO, WO * C2), lambda i: (i, 0)),      # (16, 128) lane-dense
        out_shape=jax.ShapeDtypeStruct((npad * HO, WO * C2), jnp.float32),
        compiler_params=pltpu.CompilerParams(
            dimension_semantics=("parallel",)),                           # v7x: 2 TCs
    )(xsh, packed["W1"], packed["b1"], packed["S1"],
      packed["W2"], packed["b2"], packed["T2"], packed["S2"])

    out = out.reshape(npad, HO, WO, C2)[:n]                               # drop batch padding
    return jnp.transpose(out, (0, 3, 1, 2))                               # NCHW


if __name__ == "__main__":
    key = jax.random.PRNGKey(0)
    kx, kp = jax.random.split(key)
    x = jax.random.normal(kx, (2, CIN, H0, W0), jnp.float32)   # NCHW, like PyTorch
    params = init_params(kp)
    packed = pack_params(params)            # one-time repack, outside the hot path

    out = jax.jit(simple_cnn_forward)(x, packed)
    out = jax.block_until_ready(out)

    assert out.shape == (2, C2, HO, WO), out.shape
    assert out.dtype == jnp.float32
    assert bool(jnp.all(jnp.isfinite(out)))
    print("KERNEL_OK")
</pallas_src>

<mosaic_0001>
module attributes {stable_mosaic.version = 11 : i64} {
  func.func @_simple_cnn_kernel(%arg0: i32, %arg1: memref<3x112x48xbf16, #tpu.memory_space<vmem>>, %arg2: memref<3x48x448xbf16, #tpu.memory_space<vmem>>, %arg3: memref<1x448xf32, #tpu.memory_space<vmem>>, %arg4: memref<3x40x111xbf16, #tpu.memory_space<vmem>>, %arg5: memref<3x416x320xbf16, #tpu.memory_space<vmem>>, %arg6: memref<1x320xf32, #tpu.memory_space<vmem>>, %arg7: memref<320x128xbf16, #tpu.memory_space<vmem>>, %arg8: memref<16x40xbf16, #tpu.memory_space<vmem>>, %arg9: memref<16x128xf32, #tpu.memory_space<vmem>>) attributes {dimension_semantics = [#tpu.dimension_semantics<parallel>], iteration_bounds = array<i64: 1>, scalar_prefetch = 0 : i64, scratch_operands = 0 : i64, tpu.core_type = #tpu.core_type<tc>, window_params = [{transform_indices = @transform_0, window_bounds = array<i64: 3, 112, 48>}, {pipeline_mode = #tpu.pipeline_mode<synchronous>, transform_indices = @transform_1, window_bounds = array<i64: 3, 48, 448>}, {pipeline_mode = #tpu.pipeline_mode<synchronous>, transform_indices = @transform_2, window_bounds = array<i64: 1, 448>}, {pipeline_mode = #tpu.pipeline_mode<synchronous>, transform_indices = @transform_3, window_bounds = array<i64: 3, 40, 111>}, {pipeline_mode = #tpu.pipeline_mode<synchronous>, transform_indices = @transform_4, window_bounds = array<i64: 3, 416, 320>}, {pipeline_mode = #tpu.pipeline_mode<synchronous>, transform_indices = @transform_5, window_bounds = array<i64: 1, 320>}, {pipeline_mode = #tpu.pipeline_mode<synchronous>, transform_indices = @transform_6, window_bounds = array<i64: 320, 128>}, {pipeline_mode = #tpu.pipeline_mode<synchronous>, transform_indices = @transform_7, window_bounds = array<i64: 16, 40>}, {transform_indices = @transform_8, window_bounds = array<i64: 16, 128>}]} {
    %c0 = arith.constant 0 : index
    %c0_0 = arith.constant 0 : index
    %c0_1 = arith.constant 0 : index
    %0 = vector.load %arg1[%c0, %c0_0, %c0_1] : memref<3x112x48xbf16, #tpu.memory_space<vmem>>, vector<1x112x48xbf16>
    %1 = vector.shape_cast %0 : vector<1x112x48xbf16> to vector<112x48xbf16>
    %c0_2 = arith.constant 0 : index
    %c0_3 = arith.constant 0 : index
    %c0_4 = arith.constant 0 : index
    %2 = vector.load %arg2[%c0_2, %c0_3, %c0_4] : memref<3x48x448xbf16, #tpu.memory_space<vmem>>, vector<1x48x448xbf16>
    %3 = vector.shape_cast %2 : vector<1x48x448xbf16> to vector<48x448xbf16>
    %cst = arith.constant dense<0.000000e+00> : vector<112x448xf32>
    %4 = tpu.matmul %1, %3, %cst {dimension_numbers = #tpu.dot_dimension_numbers<[1], [0], [0], [1], [0, 0, 1, 1], [], []>} : vector<112x48xbf16>, vector<48x448xbf16>, vector<112x448xf32> -> vector<112x448xf32>
    %c1 = arith.constant 1 : index
    %c0_5 = arith.constant 0 : index
    %c0_6 = arith.constant 0 : index
    %5 = vector.load %arg1[%c1, %c0_5, %c0_6] : memref<3x112x48xbf16, #tpu.memory_space<vmem>>, vector<1x112x48xbf16>
    %6 = vector.shape_cast %5 : vector<1x112x48xbf16> to vector<112x48xbf16>
    %c1_7 = arith.constant 1 : index
    %c0_8 = arith.constant 0 : index
    %c0_9 = arith.constant 0 : index
    %7 = vector.load %arg2[%c1_7, %c0_8, %c0_9] : memref<3x48x448xbf16, #tpu.memory_space<vmem>>, vector<1x48x448xbf16>
    %8 = vector.shape_cast %7 : vector<1x48x448xbf16> to vector<48x448xbf16>
    %cst_10 = arith.constant dense<0.000000e+00> : vector<112x448xf32>
    %9 = tpu.matmul %6, %8, %cst_10 {dimension_numbers = #tpu.dot_dimension_numbers<[1], [0], [0], [1], [0, 0, 1, 1], [], []>} : vector<112x48xbf16>, vector<48x448xbf16>, vector<112x448xf32> -> vector<112x448xf32>
    %10 = arith.addf %4, %9 : vector<112x448xf32>
    %c2 = arith.constant 2 : index
    %c0_11 = arith.constant 0 : index
    %c0_12 = arith.constant 0 : index
    %11 = vector.load %arg1[%c2, %c0_11, %c0_12] : memref<3x112x48xbf16, #tpu.memory_space<vmem>>, vector<1x112x48xbf16>
    %12 = vector.shape_cast %11 : vector<1x112x48xbf16> to vector<112x48xbf16>
    %c2_13 = arith.constant 2 : index
    %c0_14 = arith.constant 0 : index
    %c0_15 = arith.constant 0 : index
    %13 = vector.load %arg2[%c2_13, %c0_14, %c0_15] : memref<3x48x448xbf16, #tpu.memory_space<vmem>>, vector<1x48x448xbf16>
    %14 = vector.shape_cast %13 : vector<1x48x448xbf16> to vector<48x448xbf16>
    %cst_16 = arith.constant dense<0.000000e+00> : vector<112x448xf32>
    %15 = tpu.matmul %12, %14, %cst_16 {dimension_numbers = #tpu.dot_dimension_numbers<[1], [0], [0], [1], [0, 0, 1, 1], [], []>} : vector<112x48xbf16>, vector<48x448xbf16>, vector<112x448xf32> -> vector<112x448xf32>
    %16 = arith.addf %10, %15 : vector<112x448xf32>
    %c0_17 = arith.constant 0 : index
    %c0_18 = arith.constant 0 : index
    %17 = vector.load %arg3[%c0_17, %c0_18] : memref<1x448xf32, #tpu.memory_space<vmem>>, vector<1x448xf32>
    %18 = vector.broadcast %17 : vector<1x448xf32> to vector<112x448xf32>
    %19 = arith.addf %16, %18 : vector<112x448xf32>
    %cst_19 = arith.constant 0.000000e+00 : f32
    %20 = vector.broadcast %cst_19 : f32 to vector<112x448xf32>
    %21 = arith.maximumf %19, %20 : vector<112x448xf32>
    %22 = vector.extract_strided_slice %21 {offsets = [0, 0], sizes = [111, 448], strides = [1, 1]} : vector<112x448xf32> to vector<111x448xf32>
    %23 = vector.extract_strided_slice %21 {offsets = [1, 0], sizes = [111, 448], strides = [1, 1]} : vector<112x448xf32> to vector<111x448xf32>
    %24 = arith.maximumf %22, %23 : vector<111x448xf32>
    %25 = vector.extract_strided_slice %24 {offsets = [0, 0], sizes = [111, 416], strides = [1, 1]} : vector<111x448xf32> to vector<111x416xf32>
    %26 = vector.extract_strided_slice %24 {offsets = [0, 32], sizes = [111, 416], strides = [1, 1]} : vector<111x448xf32> to vector<111x416xf32>
    %27 = arith.maximumf %25, %26 : vector<111x416xf32>
    %28 = arith.truncf %27 : vector<111x416xf32> to vector<111x416xbf16>
    %c0_20 = arith.constant 0 : index
    %c0_21 = arith.constant 0 : index
    %c0_22 = arith.constant 0 : index
    %29 = vector.load %arg4[%c0_20, %c0_21, %c0_22] : memref<3x40x111xbf16, #tpu.memory_space<vmem>>, vector<1x40x111xbf16>
    %30 = vector.shape_cast %29 : vector<1x40x111xbf16> to vector<40x111xbf16>
    %cst_23 = arith.constant dense<0.000000e+00> : vector<40x416xf32>
    %31 = tpu.matmul %30, %28, %cst_23 {dimension_numbers = #tpu.dot_dimension_numbers<[1], [0], [0], [1], [0, 0, 1, 1], [], []>} : vector<40x111xbf16>, vector<111x416xbf16>, vector<40x416xf32> -> vector<40x416xf32>
    %32 = arith.truncf %31 : vector<40x416xf32> to vector<40x416xbf16>
    %c0_24 = arith.constant 0 : index
    %c0_25 = arith.constant 0 : index
    %c0_26 = arith.constant 0 : index
    %33 = vector.load %arg5[%c0_24, %c0_25, %c0_26] : memref<3x416x320xbf16, #tpu.memory_space<vmem>>, vector<1x416x320xbf16>
    %34 = vector.shape_cast %33 : vector<1x416x320xbf16> to vector<416x320xbf16>
    %cst_27 = arith.constant dense<0.000000e+00> : vector<40x320xf32>
    %35 = tpu.matmul %32, %34, %cst_27 {dimension_numbers = #tpu.dot_dimension_numbers<[1], [0], [0], [1], [0, 0, 1, 1], [], []>} : vector<40x416xbf16>, vector<416x320xbf16>, vector<40x320xf32> -> vector<40x320xf32>
    %c1_28 = arith.constant 1 : index
    %c0_29 = arith.constant 0 : index
    %c0_30 = arith.constant 0 : index
    %36 = vector.load %arg4[%c1_28, %c0_29, %c0_30] : memref<3x40x111xbf16, #tpu.memory_space<vmem>>, vector<1x40x111xbf16>
    %37 = vector.shape_cast %36 : vector<1x40x111xbf16> to vector<40x111xbf16>
    %cst_31 = arith.constant dense<0.000000e+00> : vector<40x416xf32>
    %38 = tpu.matmul %37, %28, %cst_31 {dimension_numbers = #tpu.dot_dimension_numbers<[1], [0], [0], [1], [0, 0, 1, 1], [], []>} : vector<40x111xbf16>, vector<111x416xbf16>, vector<40x416xf32> -> vector<40x416xf32>
    %39 = arith.truncf %38 : vector<40x416xf32> to vector<40x416xbf16>
    %c1_32 = arith.constant 1 : index
    %c0_33 = arith.constant 0 : index
    %c0_34 = arith.constant 0 : index
    %40 = vector.load %arg5[%c1_32, %c0_33, %c0_34] : memref<3x416x320xbf16, #tpu.memory_space<vmem>>, vector<1x416x320xbf16>
    %41 = vector.shape_cast %40 : vector<1x416x320xbf16> to vector<416x320xbf16>
    %cst_35 = arith.constant dense<0.000000e+00> : vector<40x320xf32>
    %42 = tpu.matmul %39, %41, %cst_35 {dimension_numbers = #tpu.dot_dimension_numbers<[1], [0], [0], [1], [0, 0, 1, 1], [], []>} : vector<40x416xbf16>, vector<416x320xbf16>, vector<40x320xf32> -> vector<40x320xf32>
    %43 = arith.addf %35, %42 : vector<40x320xf32>
    %c2_36 = arith.constant 2 : index
    %c0_37 = arith.constant 0 : index
    %c0_38 = arith.constant 0 : index
    %44 = vector.load %arg4[%c2_36, %c0_37, %c0_38] : memref<3x40x111xbf16, #tpu.memory_space<vmem>>, vector<1x40x111xbf16>
    %45 = vector.shape_cast %44 : vector<1x40x111xbf16> to vector<40x111xbf16>
    %cst_39 = arith.constant dense<0.000000e+00> : vector<40x416xf32>
    %46 = tpu.matmul %45, %28, %cst_39 {dimension_numbers = #tpu.dot_dimension_numbers<[1], [0], [0], [1], [0, 0, 1, 1], [], []>} : vector<40x111xbf16>, vector<111x416xbf16>, vector<40x416xf32> -> vector<40x416xf32>
    %47 = arith.truncf %46 : vector<40x416xf32> to vector<40x416xbf16>
    %c2_40 = arith.constant 2 : index
    %c0_41 = arith.constant 0 : index
    %c0_42 = arith.constant 0 : index
    %48 = vector.load %arg5[%c2_40, %c0_41, %c0_42] : memref<3x416x320xbf16, #tpu.memory_space<vmem>>, vector<1x416x320xbf16>
    %49 = vector.shape_cast %48 : vector<1x416x320xbf16> to vector<416x320xbf16>
    %cst_43 = arith.constant dense<0.000000e+00> : vector<40x320xf32>
    %50 = tpu.matmul %47, %49, %cst_43 {dimension_numbers = #tpu.dot_dimension_numbers<[1], [0], [0], [1], [0, 0, 1, 1], [], []>} : vector<40x416xbf16>, vector<416x320xbf16>, vector<40x320xf32> -> vector<40x320xf32>
    %51 = arith.addf %43, %50 : vector<40x320xf32>
    %c0_44 = arith.constant 0 : index
    %c0_45 = arith.constant 0 : index
    %52 = vector.load %arg6[%c0_44, %c0_45] : memref<1x320xf32, #tpu.memory_space<vmem>>, vector<1x320xf32>
    %53 = vector.broadcast %52 : vector<1x320xf32> to vector<40x320xf32>
    %54 = arith.addf %51, %53 : vector<40x320xf32>
    %cst_46 = arith.constant 0.000000e+00 : f32
    %55 = vector.broadcast %cst_46 : f32 to vector<40x320xf32>
    %56 = arith.maximumf %54, %55 : vector<40x320xf32>
    %57 = arith.truncf %56 : vector<40x320xf32> to vector<40x320xbf16>
    %c0_47 = arith.constant 0 : index
    %c0_48 = arith.constant 0 : index
    %58 = vector.load %arg7[%c0_47, %c0_48] : memref<320x128xbf16, #tpu.memory_space<vmem>>, vector<320x128xbf16>
    %cst_49 = arith.constant dense<0.000000e+00> : vector<40x128xf32>
    %59 = tpu.matmul %57, %58, %cst_49 {dimension_numbers = #tpu.dot_dimension_numbers<[1], [0], [0], [1], [0, 0, 1, 1], [], []>} : vector<40x320xbf16>, vector<320x128xbf16>, vector<40x128xf32> -> vector<40x128xf32>
    %c0_50 = arith.constant 0 : index
    %c0_51 = arith.constant 0 : index
    %60 = vector.load %arg8[%c0_50, %c0_51] : memref<16x40xbf16, #tpu.memory_space<vmem>>, vector<16x40xbf16>
    %61 = arith.truncf %59 : vector<40x128xf32> to vector<40x128xbf16>
    %cst_52 = arith.constant dense<0.000000e+00> : vector<16x128xf32>
    %62 = tpu.matmul %60, %61, %cst_52 {dimension_numbers = #tpu.dot_dimension_numbers<[1], [0], [0], [1], [0, 0, 1, 1], [], []>} : vector<16x40xbf16>, vector<40x128xbf16>, vector<16x128xf32> -> vector<16x128xf32>
    %c0_53 = arith.constant 0 : index
    %c0_54 = arith.constant 0 : index
    %63 = vector.load %arg9[%c0_53, %c0_54] : memref<16x128xf32, #tpu.memory_space<vmem>>, vector<16x128xf32>
    tpu.vector_store %arg9[%c0_53, %c0_54], %62 {strides = array<i32>} : memref<16x128xf32, #tpu.memory_space<vmem>>, vector<16x128xf32>,
    return
  }
  func.func @transform_0(%arg0: i32) -> (i32, i32, i32) {
    %c0_i32 = arith.constant 0 : i32
    %c0_i32_0 = arith.constant 0 : i32
    %c0_i32_1 = arith.constant 0 : i32
    return %c0_i32, %arg0, %c0_i32_0 : i32, i32, i32
  }
  func.func @transform_1(%arg0: i32) -> (i32, i32, i32) {
    %c0_i32 = arith.constant 0 : i32
    %c0_i32_0 = arith.constant 0 : i32
    %c0_i32_1 = arith.constant 0 : i32
    %c0_i32_2 = arith.constant 0 : i32
    return %c0_i32, %c0_i32_0, %c0_i32_1 : i32, i32, i32
  }
  func.func @transform_2(%arg0: i32) -> (i32, i32) {
    %c0_i32 = arith.constant 0 : i32
    %c0_i32_0 = arith.constant 0 : i32
    %c0_i32_1 = arith.constant 0 : i32
    return %c0_i32, %c0_i32_0 : i32, i32
  }
  func.func @transform_3(%arg0: i32) -> (i32, i32, i32) {
    %c0_i32 = arith.constant 0 : i32
    %c0_i32_0 = arith.constant 0 : i32
    %c0_i32_1 = arith.constant 0 : i32
    %c0_i32_2 = arith.constant 0 : i32
    return %c0_i32, %c0_i32_0, %c0_i32_1 : i32, i32, i32
  }
  func.func @transform_4(%arg0: i32) -> (i32, i32, i32) {
    %c0_i32 = arith.constant 0 : i32
    %c0_i32_0 = arith.constant 0 : i32
    %c0_i32_1 = arith.constant 0 : i32
    %c0_i32_2 = arith.constant 0 : i32
    return %c0_i32, %c0_i32_0, %c0_i32_1 : i32, i32, i32
  }
  func.func @transform_5(%arg0: i32) -> (i32, i32) {
    %c0_i32 = arith.constant 0 : i32
    %c0_i32_0 = arith.constant 0 : i32
    %c0_i32_1 = arith.constant 0 : i32
    return %c0_i32, %c0_i32_0 : i32, i32
  }
  func.func @transform_6(%arg0: i32) -> (i32, i32) {
    %c0_i32 = arith.constant 0 : i32
    %c0_i32_0 = arith.constant 0 : i32
    %c0_i32_1 = arith.constant 0 : i32
    return %c0_i32, %c0_i32_0 : i32, i32
  }
  func.func @transform_7(%arg0: i32) -> (i32, i32) {
    %c0_i32 = arith.constant 0 : i32
    %c0_i32_0 = arith.constant 0 : i32
    %c0_i32_1 = arith.constant 0 : i32
    return %c0_i32, %c0_i32_0 : i32, i32
  }
  func.func @transform_8(%arg0: i32) -> (i32, i32) {
    %c0_i32 = arith.constant 0 : i32
    %c0_i32_0 = arith.constant 0 : i32
    return %arg0, %c0_i32 : i32, i32
  }
}

</mosaic_0001>

<llo_original>
// kernel: simple_cnn_forward.1
$region0: #{simple_cnn_forward.1}
  #allocation0 [shape = 'u32[]', space=smem, size = 0x4, offset = 0x4, fixed_abs, tag = 'smem constant byte address 0x4 - core index']
  #allocation1 [shape = 'u32[72,128]{1,0:T(1,128)}', space=vmem, size = 0x9000, scoped, tag = 'internal scratch']
  %s0 = inlined_call_operand.vmem [shape: bf16[3,112,48], index: 0, kind: input, shape index: {}]
  %s1 = inlined_call_operand.vmem [shape: bf16[3,48,448], index: 1, kind: input, shape index: {}]
  %s2 = inlined_call_operand.vmem [shape: f32[1,448], index: 2, kind: input, shape index: {}]
  %s3 = inlined_call_operand.vmem [shape: bf16[3,40,111], index: 3, kind: input, shape index: {}]
  %s4 = inlined_call_operand.vmem [shape: bf16[3,416,320], index: 4, kind: input, shape index: {}]
  %s5 = inlined_call_operand.vmem [shape: f32[1,320], index: 5, kind: input, shape index: {}]
  %s6 = inlined_call_operand.vmem [shape: bf16[320,128], index: 6, kind: input, shape index: {}]
  %s7 = inlined_call_operand.vmem [shape: bf16[16,40], index: 7, kind: input, shape index: {}]
  %s8 = inlined_call_operand.vmem [shape: f32[16,128], index: 8, kind: output, shape index: {}]
  %s9 = sld [smem:[#allocation0]]
  $region42: #{simple_cnn_forward.1} parent=0
    _
  %s11 = ssub.s32 1, %s9
  %s12 = scalar_select 0, %s11, %s9
  // Predicated region
  $region2: #{simple_cnn_forward.1} parent=0 // pred_check
    _
  $region3: #{simple_cnn_forward.1} parent=0 // pred_check_branch
    %14 = sbr.rel (0) target = $region5
  $region4: #{simple_cnn_forward.1} parent=0 // pred_region
    _
  $region5: #{simple_cnn_forward.1} parent=0 // pred_fallthru
    _
  // Predicated region
  $region6: #{simple_cnn_forward.1} parent=0 // pred_check
    _
  $region7: #{simple_cnn_forward.1} parent=0 // pred_check_branch
    %16 = sbr.rel (0) target = $region9
  $region8: #{simple_cnn_forward.1} parent=0 // pred_region
    _
  $region9: #{simple_cnn_forward.1} parent=0 // pred_fallthru
    _
  // Predicated region
  $region10: #{simple_cnn_forward.1} parent=0 // pred_check
    _
  $region11: #{simple_cnn_forward.1} parent=0 // pred_check_branch
    %18 = sbr.rel (0) target = $region13
  $region12: #{simple_cnn_forward.1} parent=0 // pred_region
    _
  $region13: #{simple_cnn_forward.1} parent=0 // pred_fallthru
    _
  // Predicated region
  $region14: #{simple_cnn_forward.1} parent=0 // pred_check
    _
  $region15: #{simple_cnn_forward.1} parent=0 // pred_check_branch
    %20 = sbr.rel (0) target = $region17
  $region16: #{simple_cnn_forward.1} parent=0 // pred_region
    _
  $region17: #{simple_cnn_forward.1} parent=0 // pred_fallthru
    _
  // Predicated region
  $region18: #{simple_cnn_forward.1} parent=0 // pred_check
    _
  $region19: #{simple_cnn_forward.1} parent=0 // pred_check_branch
    %22 = sbr.rel (0) target = $region21
  $region20: #{simple_cnn_forward.1} parent=0 // pred_region
    _
  $region21: #{simple_cnn_forward.1} parent=0 // pred_fallthru
    _
  // Predicated region
  $region22: #{simple_cnn_forward.1} parent=0 // pred_check
    _
  $region23: #{simple_cnn_forward.1} parent=0 // pred_check_branch
    %24 = sbr.rel (0) target = $region25
  $region24: #{simple_cnn_forward.1} parent=0 // pred_region
    _
  $region25: #{simple_cnn_forward.1} parent=0 // pred_fallthru
    _
  // Predicated region
  $region26: #{simple_cnn_forward.1} parent=0 // pred_check
    _
  $region27: #{simple_cnn_forward.1} parent=0 // pred_check_branch
    %26 = sbr.rel (0) target = $region29
  $region28: #{simple_cnn_forward.1} parent=0 // pred_region
    _
  $region29: #{simple_cnn_forward.1} parent=0 // pred_fallthru
    _
  // Predicated region
  $region30: #{simple_cnn_forward.1} parent=0 // pred_check
    _
  $region31: #{simple_cnn_forward.1} parent=0 // pred_check_branch
    %28 = sbr.rel (0) target = $region33
  $region32: #{simple_cnn_forward.1} parent=0 // pred_region
    _
  $region33: #{simple_cnn_forward.1} parent=0 // pred_fallthru
    _
  %v30 = vld [vmem:[%s0] sm:$0xf]
  %v31 = vld [vmem:[%s0 + $0x4] sm:$0xf]
  %v32 = vld [vmem:[%s0 + $0x8] sm:$0xf]
  %v33 = vld [vmem:[%s0 + $0xc] sm:$0xf]
  %v34 = vld [vmem:[%s0 + $0x10] sm:$0xf]
  %v35 = vld [vmem:[%s0 + $0x14] sm:$0xf]
  %v36 = vld [vmem:[%s0 + $0x18] sm:$0xf]
  %v37 = vld [vmem:[%s0 + $0x1c] sm:$0xf]
  %v38 = vld [vmem:[%s0 + $0x20] sm:$0xf]
  %v39 = vld [vmem:[%s0 + $0x24] sm:$0xf]
  %v40 = vld [vmem:[%s0 + $0x28] sm:$0xf]
  %v41 = vld [vmem:[%s0 + $0x2c] sm:$0xf]
  %v42 = vld [vmem:[%s0 + $0x30] sm:$0xf]
  %v43 = vld [vmem:[%s0 + $0x34] sm:$0xf]
  %v44 = vld [vmem:[%s1] sm:$0xff]
  %v45 = vld [vmem:[%s1 + $0x8] sm:$0xff]
  %v46 = vld [vmem:[%s1 + $0x10] sm:$0xff]
  %v47 = vld [vmem:[%s1 + $0x18] sm:$0xff]
  %v48 = vld [vmem:[%s1 + $0x20] sm:$0xff]
  %v49 = vld [vmem:[%s1 + $0x28] sm:$0xff]
  %v50 = vld [vmem:[%s1 + $0x30] sm:$0xff]
  %v51 = vld [vmem:[%s1 + $0x38] sm:$0xff]
  %v52 = vld [vmem:[%s1 + $0x40] sm:$0xff]
  %v53 = vld [vmem:[%s1 + $0x48] sm:$0xff]
  %v54 = vld [vmem:[%s1 + $0x50] sm:$0xff]
  %v55 = vld [vmem:[%s1 + $0x58] sm:$0xff]
  %s56 = scalar_lea.vmem %s0, 56
  %v57 = vld [vmem:[%s56] sm:$0xf]
  %v58 = vld [vmem:[%s56 + $0x4] sm:$0xf]
  %v59 = vld [vmem:[%s56 + $0x8] sm:$0xf]
  %v60 = vld [vmem:[%s56 + $0xc] sm:$0xf]
  %v61 = vld [vmem:[%s56 + $0x10] sm:$0xf]
  %v62 = vld [vmem:[%s56 + $0x14] sm:$0xf]
  %v63 = vld [vmem:[%s56 + $0x18] sm:$0xf]
  %v64 = vld [vmem:[%s56 + $0x1c] sm:$0xf]
  %v65 = vld [vmem:[%s56 + $0x20] sm:$0xf]
  %v66 = vld [vmem:[%s56 + $0x24] sm:$0xf]
  %v67 = vld [vmem:[%s56 + $0x28] sm:$0xf]
  %v68 = vld [vmem:[%s56 + $0x2c] sm:$0xf]
  %v69 = vld [vmem:[%s56 + $0x30] sm:$0xf]
  %v70 = vld [vmem:[%s56 + $0x34] sm:$0xf]
  %s71 = scalar_lea.vmem %s1, 96
  %v72 = vld [vmem:[%s71] sm:$0xff]
  %v73 = vld [vmem:[%s71 + $0x8] sm:$0xff]
  %v74 = vld [vmem:[%s71 + $0x10] sm:$0xff]
  %v75 = vld [vmem:[%s71 + $0x18] sm:$0xff]
  %v76 = vld [vmem:[%s71 + $0x20] sm:$0xff]
  %v77 = vld [vmem:[%s71 + $0x28] sm:$0xff]
  %v78 = vld [vmem:[%s71 + $0x30] sm:$0xff]
  %v79 = vld [vmem:[%s71 + $0x38] sm:$0xff]
  %v80 = vld [vmem:[%s71 + $0x40] sm:$0xff]
  %v81 = vld [vmem:[%s71 + $0x48] sm:$0xff]
  %v82 = vld [vmem:[%s71 + $0x50] sm:$0xff]
  %v83 = vld [vmem:[%s71 + $0x58] sm:$0xff]
  %v98 = vunpack.c.l.b16 %v57
  %v99 = vunpack.c.l.b16 %v58
  %v100 = vunpack.c.l.b16 %v59
  %v101 = vunpack.c.l.b16 %v60
  %v102 = vunpack.c.l.b16 %v61
  %v103 = vunpack.c.l.b16 %v62
  %v104 = vunpack.c.l.b16 %v63
  %v105 = vunpack.c.l.b16 %v64
  %v106 = vunpack.c.l.b16 %v65
  %v107 = vunpack.c.l.b16 %v66
  %v108 = vunpack.c.l.b16 %v67
  %v109 = vunpack.c.l.b16 %v68
  %v110 = vunpack.c.l.b16 %v69
  %v111 = vunpack.c.l.b16 %v70
  %v112 = vpack.c.b16 %v99, %v98
  %v113 = vpack.c.b16 %v101, %v100
  %v114 = vpack.c.b16 %v103, %v102
  %v115 = vpack.c.b16 %v105, %v104
  %v116 = vpack.c.b16 %v107, %v106
  %v117 = vpack.c.b16 %v109, %v108
  %v118 = vpack.c.b16 %v111, %v110
  %v131 = vunpack.c.l.b16 %v72
  %v132 = vunpack.c.h.b16 %v72
  %v133 = vunpack.c.l.b16 %v73
  %v134 = vunpack.c.h.b16 %v73
  %v135 = vunpack.c.l.b16 %v74
  %v136 = vunpack.c.h.b16 %v74
  %v137 = vunpack.c.l.b16 %v75
  %v138 = vunpack.c.h.b16 %v75
  %v139 = vunpack.c.l.b16 %v76
  %v140 = vunpack.c.h.b16 %v76
  %v141 = vunpack.c.l.b16 %v77
  %v142 = vunpack.c.h.b16 %v77
  %v143 = vunpack.c.l.b16 %v78
  %v144 = vunpack.c.h.b16 %v78
  %v145 = vunpack.c.l.b16 %v79
  %v146 = vunpack.c.h.b16 %v79
  %v147 = vunpack.c.l.b16 %v80
  %v148 = vunpack.c.h.b16 %v80
  %v149 = vunpack.c.l.b16 %v81
  %v150 = vunpack.c.h.b16 %v81
  %v151 = vunpack.c.l.b16 %v82
  %v152 = vunpack.c.h.b16 %v82
  %v153 = vunpack.c.l.b16 %v83
  %v154 = vunpack.c.h.b16 %v83
  %v155 = vpack.c.b16 %v135, %v131
  %v156 = vpack.c.b16 %v136, %v132
  %v157 = vpack.c.b16 %v137, %v133
  %v158 = vpack.c.b16 %v138, %v134
  %v159 = vpack.c.b16 %v143, %v139
  %v160 = vpack.c.b16 %v144, %v140
  %v161 = vpack.c.b16 %v145, %v141
  %v162 = vpack.c.b16 %v146, %v142
  %v163 = vpack.c.b16 %v151, %v147
  %v164 = vpack.c.b16 %v152, %v148
  %v165 = vpack.c.b16 %v153, %v149
  %v166 = vpack.c.b16 %v154, %v150
  %vm179 = vcmask 392192
  %v181 = vsel %vm179, %v112, 0
  %v184 = vsel %vm179, %v113, 0
  %v187 = vsel %vm179, %v114, 0
  %v190 = vsel %vm179, %v115, 0
  %v193 = vsel %vm179, %v116, 0
  %v196 = vsel %vm179, %v117, 0
  %v199 = vsel %vm179, %v118, 0
  %201 = vmatpush.bf16.msra.mxu0 0
  %202 = vmatpush.bf16.msra.mxu0 0
  %203 = vmatpush.bf16.msra.mxu0 0
  %204 = vmatpush.bf16.msra.mxu0 0
  %205 = vmatpush.bf16.msra.mxu0 0
  %206 = vmatpush.bf16.msra.mxu0 %v163
  %207 = vmatpush.bf16.msra.mxu0 %v159
  %208 = vmatpush.bf16.msra.mxu0 %v155
  %209 = vmatmul.bf16.gmra.mxu0 %v181
  %v210 = vpop.f32.mrf.mxu0
  %v211 = vadd.f32 0.0, %v210
  %v212 = vpop.f32.mrf.mxu0
  %v213 = vadd.f32 0.0, %v212
  %214 = vmatmul.bf16.gmra.mxu0 %v184
  %v215 = vpop.f32.mrf.mxu0
  %v216 = vadd.f32 0.0, %v215
  %v217 = vpop.f32.mrf.mxu0
  %v218 = vadd.f32 0.0, %v217
  %219 = vmatmul.bf16.gmra.mxu0 %v187
  %v220 = vpop.f32.mrf.mxu0
  %v221 = vadd.f32 0.0, %v220
  %v222 = vpop.f32.mrf.mxu0
  %v223 = vadd.f32 0.0, %v222
  %224 = vmatmul.bf16.gmra.mxu0 %v190
  %v225 = vpop.f32.mrf.mxu0
  %v226 = vadd.f32 0.0, %v225
  %v227 = vpop.f32.mrf.mxu0
  %v228 = vadd.f32 0.0, %v227
  %229 = vmatmul.bf16.gmra.mxu0 %v193
  %v230 = vpop.f32.mrf.mxu0
  %v231 = vadd.f32 0.0, %v230
  %v232 = vpop.f32.mrf.mxu0
  %v233 = vadd.f32 0.0, %v232
  %234 = vmatmul.bf16.gmra.mxu0 %v196
  %v235 = vpop.f32.mrf.mxu0
  %v236 = vadd.f32 0.0, %v235
  %v237 = vpop.f32.mrf.mxu0
  %v238 = vadd.f32 0.0, %v237
  %239 = vmatmul.bf16.gmra.mxu0 %v199
  %v240 = vpop.f32.mrf.mxu0
  %v241 = vadd.f32 0.0, %v240
  %v242 = vpop.f32.mrf.mxu0
  %v243 = vadd.f32 0.0, %v242
  %244 = vdwg.mxu0
  %245 = vmatpush.bf16.msra.mxu0 0
  %246 = vmatpush.bf16.msra.mxu0 0
  %247 = vmatpush.bf16.msra.mxu0 0
  %248 = vmatpush.bf16.msra.mxu0 0
  %249 = vmatpush.bf16.msra.mxu0 0
  %250 = vmatpush.bf16.msra.mxu0 %v164
  %251 = vmatpush.bf16.msra.mxu0 %v160
  %252 = vmatpush.bf16.msra.mxu0 %v156
  %253 = vmatmul.bf16.gmra.mxu0 %v181
  %v254 = vpop.f32.mrf.mxu0
  %v255 = vadd.f32 0.0, %v254
  %v256 = vpop.f32.mrf.mxu0
  %v257 = vadd.f32 0.0, %v256
  %258 = vmatmul.bf16.gmra.mxu0 %v184
  %v259 = vpop.f32.mrf.mxu0
  %v260 = vadd.f32 0.0, %v259
  %v261 = vpop.f32.mrf.mxu0
  %v262 = vadd.f32 0.0, %v261
  %263 = vmatmul.bf16.gmra.mxu0 %v187
  %v264 = vpop.f32.mrf.mxu0
  %v265 = vadd.f32 0.0, %v264
  %v266 = vpop.f32.mrf.mxu0
  %v267 = vadd.f32 0.0, %v266
  %268 = vmatmul.bf16.gmra.mxu0 %v190
  %v269 = vpop.f32.mrf.mxu0
  %v270 = vadd.f32 0.0, %v269
  %v271 = vpop.f32.mrf.mxu0
  %v272 = vadd.f32 0.0, %v271
  %273 = vmatmul.bf16.gmra.mxu0 %v193
  %v274 = vpop.f32.mrf.mxu0
  %v275 = vadd.f32 0.0, %v274
  %v276 = vpop.f32.mrf.mxu0
  %v277 = vadd.f32 0.0, %v276
  %278 = vmatmul.bf16.gmra.mxu0 %v196
  %v279 = vpop.f32.mrf.mxu0
  %v280 = vadd.f32 0.0, %v279
  %v281 = vpop.f32.mrf.mxu0
  %v282 = vadd.f32 0.0, %v281
  %283 = vmatmul.bf16.gmra.mxu0 %v199
  %v284 = vpop.f32.mrf.mxu0
  %v285 = vadd.f32 0.0, %v284
  %v286 = vpop.f32.mrf.mxu0
  %v287 = vadd.f32 0.0, %v286
  %288 = vdwg.mxu0
  %289 = vmatpush.bf16.msra.mxu0 0
  %290 = vmatpush.bf16.msra.mxu0 0
  %291 = vmatpush.bf16.msra.mxu0 0
  %292 = vmatpush.bf16.msra.mxu0 0
  %293 = vmatpush.bf16.msra.mxu0 0
  %294 = vmatpush.bf16.msra.mxu0 %v165
  %295 = vmatpush.bf16.msra.mxu0 %v161
  %296 = vmatpush.bf16.msra.mxu0 %v157
  %297 = vmatmul.bf16.gmra.mxu0 %v181
  %v298 = vpop.f32.mrf.mxu0
  %v299 = vadd.f32 0.0, %v298
  %v300 = vpop.f32.mrf.mxu0
  %v301 = vadd.f32 0.0, %v300
  %302 = vmatmul.bf16.gmra.mxu0 %v184
  %v303 = vpop.f32.mrf.mxu0
  %v304 = vadd.f32 0.0, %v303
  %v305 = vpop.f32.mrf.mxu0
  %v306 = vadd.f32 0.0, %v305
  %307 = vmatmul.bf16.gmra.mxu0 %v187
  %v308 = vpop.f32.mrf.mxu0
  %v309 = vadd.f32 0.0, %v308
  %v310 = vpop.f32.mrf.mxu0
  %v311 = vadd.f32 0.0, %v310
  %312 = vmatmul.bf16.gmra.mxu0 %v190
  %v313 = vpop.f32.mrf.mxu0
  %v314 = vadd.f32 0.0, %v313
  %v315 = vpop.f32.mrf.mxu0
  %v316 = vadd.f32 0.0, %v315
  %317 = vmatmul.bf16.gmra.mxu0 %v193
  %v318 = vpop.f32.mrf.mxu0
  %v319 = vadd.f32 0.0, %v318
  %v320 = vpop.f32.mrf.mxu0
  %v321 = vadd.f32 0.0, %v320
  %322 = vmatmul.bf16.gmra.mxu0 %v196
  %v323 = vpop.f32.mrf.mxu0
  %v324 = vadd.f32 0.0, %v323
  %v325 = vpop.f32.mrf.mxu0
  %v326 = vadd.f32 0.0, %v325
  %327 = vmatmul.bf16.gmra.mxu0 %v199
  %v328 = vpop.f32.mrf.mxu0
  %v329 = vadd.f32 0.0, %v328
  %v330 = vpop.f32.mrf.mxu0
  %v331 = vadd.f32 0.0, %v330
  %332 = vdwg.mxu0
  %333 = vmatpush.bf16.msra.mxu0 0
  %334 = vmatpush.bf16.msra.mxu0 0
  %335 = vmatpush.bf16.msra.mxu0 0
  %336 = vmatpush.bf16.msra.mxu0 0
  %337 = vmatpush.bf16.msra.mxu0 0
  %338 = vmatpush.bf16.msra.mxu0 %v166
  %339 = vmatpush.bf16.msra.mxu0 %v162
  %340 = vmatpush.bf16.msra.mxu0 %v158
  %341 = vmatmul.bf16.gmra.mxu0 %v181
  %v342 = vpop.f32.mrf.mxu0
  %v343 = vadd.f32 0.0, %v342
  %v344 = vpop.f32.mrf.mxu0
  %v345 = vadd.f32 0.0, %v344
  %346 = vmatmul.bf16.gmra.mxu0 %v184
  %v347 = vpop.f32.mrf.mxu0
  %v348 = vadd.f32 0.0, %v347
  %v349 = vpop.f32.mrf.mxu0
  %v350 = vadd.f32 0.0, %v349
  %351 = vmatmul.bf16.gmra.mxu0 %v187
  %v352 = vpop.f32.mrf.mxu0
  %v353 = vadd.f32 0.0, %v352
  %v354 = vpop.f32.mrf.mxu0
  %v355 = vadd.f32 0.0, %v354
  %356 = vmatmul.bf16.gmra.mxu0 %v190
  %v357 = vpop.f32.mrf.mxu0
  %v358 = vadd.f32 0.0, %v357
  %v359 = vpop.f32.mrf.mxu0
  %v360 = vadd.f32 0.0, %v359
  %361 = vmatmul.bf16.gmra.mxu0 %v193
  %v362 = vpop.f32.mrf.mxu0
  %v363 = vadd.f32 0.0, %v362
  %v364 = vpop.f32.mrf.mxu0
  %v365 = vadd.f32 0.0, %v364
  %366 = vmatmul.bf16.gmra.mxu0 %v196
  %v367 = vpop.f32.mrf.mxu0
  %v368 = vadd.f32 0.0, %v367
  %v369 = vpop.f32.mrf.mxu0
  %v370 = vadd.f32 0.0, %v369
  %371 = vmatmul.bf16.gmra.mxu0 %v199
  %v372 = vpop.f32.mrf.mxu0
  %v373 = vadd.f32 0.0, %v372
  %v374 = vpop.f32.mrf.mxu0
  %v375 = vadd.f32 0.0, %v374
  %376 = vdwg.mxu0
  %v391 = vunpack.c.l.b16 %v30
  %v392 = vunpack.c.l.b16 %v31
  %v393 = vunpack.c.l.b16 %v32
  %v394 = vunpack.c.l.b16 %v33
  %v395 = vunpack.c.l.b16 %v34
  %v396 = vunpack.c.l.b16 %v35
  %v397 = vunpack.c.l.b16 %v36
  %v398 = vunpack.c.l.b16 %v37
  %v399 = vunpack.c.l.b16 %v38
  %v400 = vunpack.c.l.b16 %v39
  %v401 = vunpack.c.l.b16 %v40
  %v402 = vunpack.c.l.b16 %v41
  %v403 = vunpack.c.l.b16 %v42
  %v404 = vunpack.c.l.b16 %v43
  %v405 = vpack.c.b16 %v392, %v391
  %v406 = vpack.c.b16 %v394, %v393
  %v407 = vpack.c.b16 %v396, %v395
  %v408 = vpack.c.b16 %v398, %v397
  %v409 = vpack.c.b16 %v400, %v399
  %v410 = vpack.c.b16 %v402, %v401
  %v411 = vpack.c.b16 %v404, %v403
  %v424 = vunpack.c.l.b16 %v44
  %v425 = vunpack.c.h.b16 %v44
  %v426 = vunpack.c.l.b16 %v45
  %v427 = vunpack.c.h.b16 %v45
  %v428 = vunpack.c.l.b16 %v46
  %v429 = vunpack.c.h.b16 %v46
  %v430 = vunpack.c.l.b16 %v47
  %v431 = vunpack.c.h.b16 %v47
  %v432 = vunpack.c.l.b16 %v48
  %v433 = vunpack.c.h.b16 %v48
  %v434 = vunpack.c.l.b16 %v49
  %v435 = vunpack.c.h.b16 %v49
  %v436 = vunpack.c.l.b16 %v50
  %v437 = vunpack.c.h.b16 %v50
  %v438 = vunpack.c.l.b16 %v51
  %v439 = vunpack.c.h.b16 %v51
  %v440 = vunpack.c.l.b16 %v52
  %v441 = vunpack.c.h.b16 %v52
  %v442 = vunpack.c.l.b16 %v53
  %v443 = vunpack.c.h.b16 %v53
  %v444 = vunpack.c.l.b16 %v54
  %v445 = vunpack.c.h.b16 %v54
  %v446 = vunpack.c.l.b16 %v55
  %v447 = vunpack.c.h.b16 %v55
  %v448 = vpack.c.b16 %v428, %v424
  %v449 = vpack.c.b16 %v429, %v425
  %v450 = vpack.c.b16 %v430, %v426
  %v451 = vpack.c.b16 %v431, %v427
  %v452 = vpack.c.b16 %v436, %v432
  %v453 = vpack.c.b16 %v437, %v433
  %v454 = vpack.c.b16 %v438, %v434
  %v455 = vpack.c.b16 %v439, %v435
  %v456 = vpack.c.b16 %v444, %v440
  %v457 = vpack.c.b16 %v445, %v441
  %v458 = vpack.c.b16 %v446, %v442
  %v459 = vpack.c.b16 %v447, %v443
  %v473 = vsel %vm179, %v405, 0
  %v476 = vsel %vm179, %v406, 0
  %v479 = vsel %vm179, %v407, 0
  %v482 = vsel %vm179, %v408, 0
  %v485 = vsel %vm179, %v409, 0
  %v488 = vsel %vm179, %v410, 0
  %v491 = vsel %vm179, %v411, 0
  %493 = vmatpush.bf16.msra.mxu0 0
  %494 = vmatpush.bf16.msra.mxu0 0
  %495 = vmatpush.bf16.msra.mxu0 0
  %496 = vmatpush.bf16.msra.mxu0 0
  %497 = vmatpush.bf16.msra.mxu0 0
  %498 = vmatpush.bf16.msra.mxu0 %v456
  %499 = vmatpush.bf16.msra.mxu0 %v452
  %500 = vmatpush.bf16.msra.mxu0 %v448
  %501 = vmatmul.bf16.gmra.mxu0 %v473
  %v502 = vpop.f32.mrf.mxu0
  %v503 = vadd.f32 %v211, %v502
  %v504 = vpop.f32.mrf.mxu0
  %v505 = vadd.f32 %v213, %v504
  %506 = vmatmul.bf16.gmra.mxu0 %v476
  %v507 = vpop.f32.mrf.mxu0
  %v508 = vadd.f32 %v216, %v507
  %v509 = vpop.f32.mrf.mxu0
  %v510 = vadd.f32 %v218, %v509
  %511 = vmatmul.bf16.gmra.mxu0 %v479
  %v512 = vpop.f32.mrf.mxu0
  %v513 = vadd.f32 %v221, %v512
  %v514 = vpop.f32.mrf.mxu0
  %v515 = vadd.f32 %v223, %v514
  %516 = vmatmul.bf16.gmra.mxu0 %v482
  %v517 = vpop.f32.mrf.mxu0
  %v518 = vadd.f32 %v226, %v517
  %v519 = vpop.f32.mrf.mxu0
  %v520 = vadd.f32 %v228, %v519
  %521 = vmatmul.bf16.gmra.mxu0 %v485
  %v522 = vpop.f32.mrf.mxu0
  %v523 = vadd.f32 %v231, %v522
  %v524 = vpop.f32.mrf.mxu0
  %v525 = vadd.f32 %v233, %v524
  %526 = vmatmul.bf16.gmra.mxu0 %v488
  %v527 = vpop.f32.mrf.mxu0
  %v528 = vadd.f32 %v236, %v527
  %v529 = vpop.f32.mrf.mxu0
  %v530 = vadd.f32 %v238, %v529
  %531 = vmatmul.bf16.gmra.mxu0 %v491
  %v532 = vpop.f32.mrf.mxu0
  %v533 = vadd.f32 %v241, %v532
  %v534 = vpop.f32.mrf.mxu0
  %v535 = vadd.f32 %v243, %v534
  %536 = vdwg.mxu0
  %537 = vmatpush.bf16.msra.mxu0 0
  %538 = vmatpush.bf16.msra.mxu0 0
  %539 = vmatpush.bf16.msra.mxu0 0
  %540 = vmatpush.bf16.msra.mxu0 0
  %541 = vmatpush.bf16.msra.mxu0 0
  %542 = vmatpush.bf16.msra.mxu0 %v457
  %543 = vmatpush.bf16.msra.mxu0 %v453
  %544 = vmatpush.bf16.msra.mxu0 %v449
  %545 = vmatmul.bf16.gmra.mxu0 %v473
  %v546 = vpop.f32.mrf.mxu0
  %v547 = vadd.f32 %v255, %v546
  %v548 = vpop.f32.mrf.mxu0
  %v549 = vadd.f32 %v257, %v548
  %550 = vmatmul.bf16.gmra.mxu0 %v476
  %v551 = vpop.f32.mrf.mxu0
  %v552 = vadd.f32 %v260, %v551
  %v553 = vpop.f32.mrf.mxu0
  %v554 = vadd.f32 %v262, %v553
  %555 = vmatmul.bf16.gmra.mxu0 %v479
  %v556 = vpop.f32.mrf.mxu0
  %v557 = vadd.f32 %v265, %v556
  %v558 = vpop.f32.mrf.mxu0
  %v559 = vadd.f32 %v267, %v558
  %560 = vmatmul.bf16.gmra.mxu0 %v482
  %v561 = vpop.f32.mrf.mxu0
  %v562 = vadd.f32 %v270, %v561
  %v563 = vpop.f32.mrf.mxu0
  %v564 = vadd.f32 %v272, %v563
  %565 = vmatmul.bf16.gmra.mxu0 %v485
  %v566 = vpop.f32.mrf.mxu0
  %v567 = vadd.f32 %v275, %v566
  %v568 = vpop.f32.mrf.mxu0
  %v569 = vadd.f32 %v277, %v568
  %570 = vmatmul.bf16.gmra.mxu0 %v488
  %v571 = vpop.f32.mrf.mxu0
  %v572 = vadd.f32 %v280, %v571
  %v573 = vpop.f32.mrf.mxu0
  %v574 = vadd.f32 %v282, %v573
  %575 = vmatmul.bf16.gmra.mxu0 %v491
  %v576 = vpop.f32.mrf.mxu0
  %v577 = vadd.f32 %v285, %v576
  %v578 = vpop.f32.mrf.mxu0
  %v579 = vadd.f32 %v287, %v578
  %580 = vdwg.mxu0
  %581 = vmatpush.bf16.msra.mxu0 0
  %582 = vmatpush.bf16.msra.mxu0 0
  %583 = vmatpush.bf16.msra.mxu0 0
  %584 = vmatpush.bf16.msra.mxu0 0
  %585 = vmatpush.bf16.msra.mxu0 0
  %586 = vmatpush.bf16.msra.mxu0 %v458
  %587 = vmatpush.bf16.msra.mxu0 %v454
  %588 = vmatpush.bf16.msra.mxu0 %v450
  %589 = vmatmul.bf16.gmra.mxu0 %v473
  %v590 = vpop.f32.mrf.mxu0
  %v591 = vadd.f32 %v299, %v590
  %v592 = vpop.f32.mrf.mxu0
  %v593 = vadd.f32 %v301, %v592
  %594 = vmatmul.bf16.gmra.mxu0 %v476
  %v595 = vpop.f32.mrf.mxu0
  %v596 = vadd.f32 %v304, %v595
  %v597 = vpop.f32.mrf.mxu0
  %v598 = vadd.f32 %v306, %v597
  %599 = vmatmul.bf16.gmra.mxu0 %v479
  %v600 = vpop.f32.mrf.mxu0
  %v601 = vadd.f32 %v309, %v600
  %v602 = vpop.f32.mrf.mxu0
  %v603 = vadd.f32 %v311, %v602
  %604 = vmatmul.bf16.gmra.mxu0 %v482
  %v605 = vpop.f32.mrf.mxu0
  %v606 = vadd.f32 %v314, %v605
  %v607 = vpop.f32.mrf.mxu0
  %v608 = vadd.f32 %v316, %v607
  %609 = vmatmul.bf16.gmra.mxu0 %v485
  %v610 = vpop.f32.mrf.mxu0
  %v611 = vadd.f32 %v319, %v610
  %v612 = vpop.f32.mrf.mxu0
  %v613 = vadd.f32 %v321, %v612
  %614 = vmatmul.bf16.gmra.mxu0 %v488
  %v615 = vpop.f32.mrf.mxu0
  %v616 = vadd.f32 %v324, %v615
  %v617 = vpop.f32.mrf.mxu0
  %v618 = vadd.f32 %v326, %v617
  %619 = vmatmul.bf16.gmra.mxu0 %v491
  %v620 = vpop.f32.mrf.mxu0
  %v621 = vadd.f32 %v329, %v620
  %v622 = vpop.f32.mrf.mxu0
  %v623 = vadd.f32 %v331, %v622
  %624 = vdwg.mxu0
  %625 = vmatpush.bf16.msra.mxu0 0
  %626 = vmatpush.bf16.msra.mxu0 0
  %627 = vmatpush.bf16.msra.mxu0 0
  %628 = vmatpush.bf16.msra.mxu0 0
  %629 = vmatpush.bf16.msra.mxu0 0
  %630 = vmatpush.bf16.msra.mxu0 %v459
  %631 = vmatpush.bf16.msra.mxu0 %v455
  %632 = vmatpush.bf16.msra.mxu0 %v451
  %633 = vmatmul.bf16.gmra.mxu0 %v473
  %v634 = vpop.f32.mrf.mxu0
  %v635 = vadd.f32 %v343, %v634
  %v636 = vpop.f32.mrf.mxu0
  %v637 = vadd.f32 %v345, %v636
  %638 = vmatmul.bf16.gmra.mxu0 %v476
  %v639 = vpop.f32.mrf.mxu0
  %v640 = vadd.f32 %v348, %v639
  %v641 = vpop.f32.mrf.mxu0
  %v642 = vadd.f32 %v350, %v641
  %643 = vmatmul.bf16.gmra.mxu0 %v479
  %v644 = vpop.f32.mrf.mxu0
  %v645 = vadd.f32 %v353, %v644
  %v646 = vpop.f32.mrf.mxu0
  %v647 = vadd.f32 %v355, %v646
  %648 = vmatmul.bf16.gmra.mxu0 %v482
  %v649 = vpop.f32.mrf.mxu0
  %v650 = vadd.f32 %v358, %v649
  %v651 = vpop.f32.mrf.mxu0
  %v652 = vadd.f32 %v360, %v651
  %653 = vmatmul.bf16.gmra.mxu0 %v485
  %v654 = vpop.f32.mrf.mxu0
  %v655 = vadd.f32 %v363, %v654
  %v656 = vpop.f32.mrf.mxu0
  %v657 = vadd.f32 %v365, %v656
  %658 = vmatmul.bf16.gmra.mxu0 %v488
  %v659 = vpop.f32.mrf.mxu0
  %v660 = vadd.f32 %v368, %v659
  %v661 = vpop.f32.mrf.mxu0
  %v662 = vadd.f32 %v370, %v661
  %663 = vmatmul.bf16.gmra.mxu0 %v491
  %v664 = vpop.f32.mrf.mxu0
  %v665 = vadd.f32 %v373, %v664
  %v666 = vpop.f32.mrf.mxu0
  %v667 = vadd.f32 %v375, %v666
  %668 = vdwg.mxu0
  %s669 = scalar_lea.vmem %s0, 112
  %v670 = vld [vmem:[%s669] sm:$0xf]
  %v671 = vld [vmem:[%s669 + $0x4] sm:$0xf]
  %v672 = vld [vmem:[%s669 + $0x8] sm:$0xf]
  %v673 = vld [vmem:[%s669 + $0xc] sm:$0xf]
  %v674 = vld [vmem:[%s669 + $0x10] sm:$0xf]
  %v675 = vld [vmem:[%s669 + $0x14] sm:$0xf]
  %v676 = vld [vmem:[%s669 + $0x18] sm:$0xf]
  %v677 = vld [vmem:[%s669 + $0x1c] sm:$0xf]
  %v678 = vld [vmem:[%s669 + $0x20] sm:$0xf]
  %v679 = vld [vmem:[%s669 + $0x24] sm:$0xf]
  %v680 = vld [vmem:[%s669 + $0x28] sm:$0xf]
  %v681 = vld [vmem:[%s669 + $0x2c] sm:$0xf]
  %v682 = vld [vmem:[%s669 + $0x30] sm:$0xf]
  %v683 = vld [vmem:[%s669 + $0x34] sm:$0xf]
  %s684 = scalar_lea.vmem %s1, 192
  %v685 = vld [vmem:[%s684] sm:$0xff]
  %v686 = vld [vmem:[%s684 + $0x8] sm:$0xff]
  %v687 = vld [vmem:[%s684 + $0x10] sm:$0xff]
  %v688 = vld [vmem:[%s684 + $0x18] sm:$0xff]
  %v689 = vld [vmem:[%s684 + $0x20] sm:$0xff]
  %v690 = vld [vmem:[%s684 + $0x28] sm:$0xff]
  %v691 = vld [vmem:[%s684 + $0x30] sm:$0xff]
  %v692 = vld [vmem:[%s684 + $0x38] sm:$0xff]
  %v693 = vld [vmem:[%s684 + $0x40] sm:$0xff]
  %v694 = vld [vmem:[%s684 + $0x48] sm:$0xff]
  %v695 = vld [vmem:[%s684 + $0x50] sm:$0xff]
  %v696 = vld [vmem:[%s684 + $0x58] sm:$0xff]
  %v711 = vunpack.c.l.b16 %v670
  %v712 = vunpack.c.l.b16 %v671
  %v713 = vunpack.c.l.b16 %v672
  %v714 = vunpack.c.l.b16 %v673
  %v715 = vunpack.c.l.b16 %v674
  %v716 = vunpack.c.l.b16 %v675
  %v717 = vunpack.c.l.b16 %v676
  %v718 = vunpack.c.l.b16 %v677
  %v719 = vunpack.c.l.b16 %v678
  %v720 = vunpack.c.l.b16 %v679
  %v721 = vunpack.c.l.b16 %v680
  %v722 = vunpack.c.l.b16 %v681
  %v723 = vunpack.c.l.b16 %v682
  %v724 = vunpack.c.l.b16 %v683
  %v725 = vpack.c.b16 %v712, %v711
  %v726 = vpack.c.b16 %v714, %v713
  %v727 = vpack.c.b16 %v716, %v715
  %v728 = vpack.c.b16 %v718, %v717
  %v729 = vpack.c.b16 %v720, %v719
  %v730 = vpack.c.b16 %v722, %v721
  %v731 = vpack.c.b16 %v724, %v723
  %v744 = vunpack.c.l.b16 %v685
  %v745 = vunpack.c.h.b16 %v685
  %v746 = vunpack.c.l.b16 %v686
  %v747 = vunpack.c.h.b16 %v686
  %v748 = vunpack.c.l.b16 %v687
  %v749 = vunpack.c.h.b16 %v687
  %v750 = vunpack.c.l.b16 %v688
  %v751 = vunpack.c.h.b16 %v688
  %v752 = vunpack.c.l.b16 %v689
  %v753 = vunpack.c.h.b16 %v689
  %v754 = vunpack.c.l.b16 %v690
  %v755 = vunpack.c.h.b16 %v690
  %v756 = vunpack.c.l.b16 %v691
  %v757 = vunpack.c.h.b16 %v691
  %v758 = vunpack.c.l.b16 %v692
  %v759 = vunpack.c.h.b16 %v692
  %v760 = vunpack.c.l.b16 %v693
  %v761 = vunpack.c.h.b16 %v693
  %v762 = vunpack.c.l.b16 %v694
  %v763 = vunpack.c.h.b16 %v694
  %v764 = vunpack.c.l.b16 %v695
  %v765 = vunpack.c.h.b16 %v695
  %v766 = vunpack.c.l.b16 %v696
  %v767 = vunpack.c.h.b16 %v696
  %v768 = vpack.c.b16 %v748, %v744
  %v769 = vpack.c.b16 %v749, %v745
  %v770 = vpack.c.b16 %v750, %v746
  %v771 = vpack.c.b16 %v751, %v747
  %v772 = vpack.c.b16 %v756, %v752
  %v773 = vpack.c.b16 %v757, %v753
  %v774 = vpack.c.b16 %v758, %v754
  %v775 = vpack.c.b16 %v759, %v755
  %v776 = vpack.c.b16 %v764, %v760
  %v777 = vpack.c.b16 %v765, %v761
  %v778 = vpack.c.b16 %v766, %v762
  %v779 = vpack.c.b16 %v767, %v763
  %v793 = vsel %vm179, %v725, 0
  %v796 = vsel %vm179, %v726, 0
  %v799 = vsel %vm179, %v727, 0
  %v802 = vsel %vm179, %v728, 0
  %v805 = vsel %vm179, %v729, 0
  %v808 = vsel %vm179, %v730, 0
  %v811 = vsel %vm179, %v731, 0
  %813 = vmatpush.bf16.msra.mxu0 0
  %814 = vmatpush.bf16.msra.mxu0 0
  %815 = vmatpush.bf16.msra.mxu0 0
  %816 = vmatpush.bf16.msra.mxu0 0
  %817 = vmatpush.bf16.msra.mxu0 0
  %818 = vmatpush.bf16.msra.mxu0 %v776
  %819 = vmatpush.bf16.msra.mxu0 %v772
  %820 = vmatpush.bf16.msra.mxu0 %v768
  %821 = vmatmul.bf16.gmra.mxu0 %v793
  %v822 = vpop.f32.mrf.mxu0
  %v823 = vadd.f32 0.0, %v822
  %v824 = vpop.f32.mrf.mxu0
  %v825 = vadd.f32 0.0, %v824
  %826 = vmatmul.bf16.gmra.mxu0 %v796
  %v827 = vpop.f32.mrf.mxu0
  %v828 = vadd.f32 0.0, %v827
  %v829 = vpop.f32.mrf.mxu0
  %v830 = vadd.f32 0.0, %v829
  %831 = vmatmul.bf16.gmra.mxu0 %v799
  %v832 = vpop.f32.mrf.mxu0
  %v833 = vadd.f32 0.0, %v832
  %v834 = vpop.f32.mrf.mxu0
  %v835 = vadd.f32 0.0, %v834
  %836 = vmatmul.bf16.gmra.mxu0 %v802
  %v837 = vpop.f32.mrf.mxu0
  %v838 = vadd.f32 0.0, %v837
  %v839 = vpop.f32.mrf.mxu0
  %v840 = vadd.f32 0.0, %v839
  %841 = vmatmul.bf16.gmra.mxu0 %v805
  %v842 = vpop.f32.mrf.mxu0
  %v843 = vadd.f32 0.0, %v842
  %v844 = vpop.f32.mrf.mxu0
  %v845 = vadd.f32 0.0, %v844
  %846 = vmatmul.bf16.gmra.mxu0 %v808
  %v847 = vpop.f32.mrf.mxu0
  %v848 = vadd.f32 0.0, %v847
  %v849 = vpop.f32.mrf.mxu0
  %v850 = vadd.f32 0.0, %v849
  %851 = vmatmul.bf16.gmra.mxu0 %v811
  %v852 = vpop.f32.mrf.mxu0
  %v853 = vadd.f32 0.0, %v852
  %v854 = vpop.f32.mrf.mxu0
  %v855 = vadd.f32 0.0, %v854
  %856 = vdwg.mxu0
  %857 = vmatpush.bf16.msra.mxu0 0
  %858 = vmatpush.bf16.msra.mxu0 0
  %859 = vmatpush.bf16.msra.mxu0 0
  %860 = vmatpush.bf16.msra.mxu0 0
  %861 = vmatpush.bf16.msra.mxu0 0
  %862 = vmatpush.bf16.msra.mxu0 %v777
  %863 = vmatpush.bf16.msra.mxu0 %v773
  %864 = vmatpush.bf16.msra.mxu0 %v769
  %865 = vmatmul.bf16.gmra.mxu0 %v793
  %v866 = vpop.f32.mrf.mxu0
  %v867 = vadd.f32 0.0, %v866
  %v868 = vpop.f32.mrf.mxu0
  %v869 = vadd.f32 0.0, %v868
  %870 = vmatmul.bf16.gmra.mxu0 %v796
  %v871 = vpop.f32.mrf.mxu0
  %v872 = vadd.f32 0.0, %v871
  %v873 = vpop.f32.mrf.mxu0
  %v874 = vadd.f32 0.0, %v873
  %875 = vmatmul.bf16.gmra.mxu0 %v799
  %v876 = vpop.f32.mrf.mxu0
  %v877 = vadd.f32 0.0, %v876
  %v878 = vpop.f32.mrf.mxu0
  %v879 = vadd.f32 0.0, %v878
  %880 = vmatmul.bf16.gmra.mxu0 %v802
  %v881 = vpop.f32.mrf.mxu0
  %v882 = vadd.f32 0.0, %v881
  %v883 = vpop.f32.mrf.mxu0
  %v884 = vadd.f32 0.0, %v883
  %885 = vmatmul.bf16.gmra.mxu0 %v805
  %v886 = vpop.f32.mrf.mxu0
  %v887 = vadd.f32 0.0, %v886
  %v888 = vpop.f32.mrf.mxu0
  %v889 = vadd.f32 0.0, %v888
  %890 = vmatmul.bf16.gmra.mxu0 %v808
  %v891 = vpop.f32.mrf.mxu0
  %v892 = vadd.f32 0.0, %v891
  %v893 = vpop.f32.mrf.mxu0
  %v894 = vadd.f32 0.0, %v893
  %895 = vmatmul.bf16.gmra.mxu0 %v811
  %v896 = vpop.f32.mrf.mxu0
  %v897 = vadd.f32 0.0, %v896
  %v898 = vpop.f32.mrf.mxu0
  %v899 = vadd.f32 0.0, %v898
  %900 = vdwg.mxu0
  %901 = vmatpush.bf16.msra.mxu0 0
  %902 = vmatpush.bf16.msra.mxu0 0
  %903 = vmatpush.bf16.msra.mxu0 0
  %904 = vmatpush.bf16.msra.mxu0 0
  %905 = vmatpush.bf16.msra.mxu0 0
  %906 = vmatpush.bf16.msra.mxu0 %v778
  %907 = vmatpush.bf16.msra.mxu0 %v774
  %908 = vmatpush.bf16.msra.mxu0 %v770
  %909 = vmatmul.bf16.gmra.mxu0 %v793
  %v910 = vpop.f32.mrf.mxu0
  %v911 = vadd.f32 0.0, %v910
  %v912 = vpop.f32.mrf.mxu0
  %v913 = vadd.f32 0.0, %v912
  %914 = vmatmul.bf16.gmra.mxu0 %v796
  %v915 = vpop.f32.mrf.mxu0
  %v916 = vadd.f32 0.0, %v915
  %v917 = vpop.f32.mrf.mxu0
  %v918 = vadd.f32 0.0, %v917
  %919 = vmatmul.bf16.gmra.mxu0 %v799
  %v920 = vpop.f32.mrf.mxu0
  %v921 = vadd.f32 0.0, %v920
  %v922 = vpop.f32.mrf.mxu0
  %v923 = vadd.f32 0.0, %v922
  %924 = vmatmul.bf16.gmra.mxu0 %v802
  %v925 = vpop.f32.mrf.mxu0
  %v926 = vadd.f32 0.0, %v925
  %v927 = vpop.f32.mrf.mxu0
  %v928 = vadd.f32 0.0, %v927
  %929 = vmatmul.bf16.gmra.mxu0 %v805
  %v930 = vpop.f32.mrf.mxu0
  %v931 = vadd.f32 0.0, %v930
  %v932 = vpop.f32.mrf.mxu0
  %v933 = vadd.f32 0.0, %v932
  %934 = vmatmul.bf16.gmra.mxu0 %v808
  %v935 = vpop.f32.mrf.mxu0
  %v936 = vadd.f32 0.0, %v935
  %v937 = vpop.f32.mrf.mxu0
  %v938 = vadd.f32 0.0, %v937
  %939 = vmatmul.bf16.gmra.mxu0 %v811
  %v940 = vpop.f32.mrf.mxu0
  %v941 = vadd.f32 0.0, %v940
  %v942 = vpop.f32.mrf.mxu0
  %v943 = vadd.f32 0.0, %v942
  %944 = vdwg.mxu0
  %945 = vmatpush.bf16.msra.mxu0 0
  %946 = vmatpush.bf16.msra.mxu0 0
  %947 = vmatpush.bf16.msra.mxu0 0
  %948 = vmatpush.bf16.msra.mxu0 0
  %949 = vmatpush.bf16.msra.mxu0 0
  %950 = vmatpush.bf16.msra.mxu0 %v779
  %951 = vmatpush.bf16.msra.mxu0 %v775
  %952 = vmatpush.bf16.msra.mxu0 %v771
  %953 = vmatmul.bf16.gmra.mxu0 %v793
  %v954 = vpop.f32.mrf.mxu0
  %v955 = vadd.f32 0.0, %v954
  %v956 = vpop.f32.mrf.mxu0
  %v957 = vadd.f32 0.0, %v956
  %958 = vmatmul.bf16.gmra.mxu0 %v796
  %v959 = vpop.f32.mrf.mxu0
  %v960 = vadd.f32 0.0, %v959
  %v961 = vpop.f32.mrf.mxu0
  %v962 = vadd.f32 0.0, %v961
  %963 = vmatmul.bf16.gmra.mxu0 %v799
  %v964 = vpop.f32.mrf.mxu0
  %v965 = vadd.f32 0.0, %v964
  %v966 = vpop.f32.mrf.mxu0
  %v967 = vadd.f32 0.0, %v966
  %968 = vmatmul.bf16.gmra.mxu0 %v802
  %v969 = vpop.f32.mrf.mxu0
  %v970 = vadd.f32 0.0, %v969
  %v971 = vpop.f32.mrf.mxu0
  %v972 = vadd.f32 0.0, %v971
  %973 = vmatmul.bf16.gmra.mxu0 %v805
  %v974 = vpop.f32.mrf.mxu0
  %v975 = vadd.f32 0.0, %v974
  %v976 = vpop.f32.mrf.mxu0
  %v977 = vadd.f32 0.0, %v976
  %978 = vmatmul.bf16.gmra.mxu0 %v808
  %v979 = vpop.f32.mrf.mxu0
  %v980 = vadd.f32 0.0, %v979
  %v981 = vpop.f32.mrf.mxu0
  %v982 = vadd.f32 0.0, %v981
  %983 = vmatmul.bf16.gmra.mxu0 %v811
  %v984 = vpop.f32.mrf.mxu0
  %v985 = vadd.f32 0.0, %v984
  %v986 = vpop.f32.mrf.mxu0
  %v987 = vadd.f32 0.0, %v986
  %988 = vdwg.mxu0
  %v989 = vadd.f32 %v503, %v823
  %v990 = vadd.f32 %v547, %v867
  %v991 = vadd.f32 %v591, %v911
  %v992 = vadd.f32 %v635, %v955
  %v993 = vadd.f32 %v505, %v825
  %v994 = vadd.f32 %v549, %v869
  %v995 = vadd.f32 %v593, %v913
  %v996 = vadd.f32 %v637, %v957
  %v997 = vadd.f32 %v508, %v828
  %v998 = vadd.f32 %v552, %v872
  %v999 = vadd.f32 %v596, %v916
  %v1000 = vadd.f32 %v640, %v960
  %v1001 = vadd.f32 %v510, %v830
  %v1002 = vadd.f32 %v554, %v874
  %v1003 = vadd.f32 %v598, %v918
  %v1004 = vadd.f32 %v642, %v962
  %v1005 = vadd.f32 %v513, %v833
  %v1006 = vadd.f32 %v557, %v877
  %v1007 = vadd.f32 %v601, %v921
  %v1008 = vadd.f32 %v645, %v965
  %v1009 = vadd.f32 %v515, %v835
  %v1010 = vadd.f32 %v559, %v879
  %v1011 = vadd.f32 %v603, %v923
  %v1012 = vadd.f32 %v647, %v967
  %v1013 = vadd.f32 %v518, %v838
  %v1014 = vadd.f32 %v562, %v882
  %v1015 = vadd.f32 %v606, %v926
  %v1016 = vadd.f32 %v650, %v970
  %v1017 = vadd.f32 %v520, %v840
  %v1018 = vadd.f32 %v564, %v884
  %v1019 = vadd.f32 %v608, %v928
  %v1020 = vadd.f32 %v652, %v972
  %v1021 = vadd.f32 %v523, %v843
  %v1022 = vadd.f32 %v567, %v887
  %v1023 = vadd.f32 %v611, %v931
  %v1024 = vadd.f32 %v655, %v975
  %v1025 = vadd.f32 %v525, %v845
  %v1026 = vadd.f32 %v569, %v889
  %v1027 = vadd.f32 %v613, %v933
  %v1028 = vadd.f32 %v657, %v977
  %v1029 = vadd.f32 %v528, %v848
  %v1030 = vadd.f32 %v572, %v892
  %v1031 = vadd.f32 %v616, %v936
  %v1032 = vadd.f32 %v660, %v980
  %v1033 = vadd.f32 %v530, %v850
  %v1034 = vadd.f32 %v574, %v894
  %v1035 = vadd.f32 %v618, %v938
  %v1036 = vadd.f32 %v662, %v982
  %v1037 = vadd.f32 %v533, %v853
  %v1038 = vadd.f32 %v577, %v897
  %v1039 = vadd.f32 %v621, %v941
  %v1040 = vadd.f32 %v665, %v985
  %v1041 = vadd.f32 %v535, %v855
  %v1042 = vadd.f32 %v579, %v899
  %v1043 = vadd.f32 %v623, %v943
  %v1044 = vadd.f32 %v667, %v987
  %v1045 = vld [vmem:[%s2] sm:$0xf]
  %v1047 = vperm.slane %v1045, 0
  %v1048 = vperm.slane %v1045, 1
  %v1049 = vperm.slane %v1045, 2
  %v1050 = vperm.slane %v1045, 3
  %v1055 = vadd.f32 %v989, %v1047
  %v1056 = vadd.f32 %v990, %v1048
  %v1057 = vadd.f32 %v991, %v1049
  %v1058 = vadd.f32 %v992, %v1050
  %v1059 = vadd.f32 %v993, %v1047
  %v1060 = vadd.f32 %v994, %v1048
  %v1061 = vadd.f32 %v995, %v1049
  %v1062 = vadd.f32 %v996, %v1050
  %v1063 = vadd.f32 %v997, %v1047
  %v1064 = vadd.f32 %v998, %v1048
  %v1065 = vadd.f32 %v999, %v1049
  %v1066 = vadd.f32 %v1000, %v1050
  %v1067 = vadd.f32 %v1001, %v1047
  %v1068 = vadd.f32 %v1002, %v1048
  %v1069 = vadd.f32 %v1003, %v1049
  %v1070 = vadd.f32 %v1004, %v1050
  %v1071 = vadd.f32 %v1005, %v1047
  %v1072 = vadd.f32 %v1006, %v1048
  %v1073 = vadd.f32 %v1007, %v1049
  %v1074 = vadd.f32 %v1008, %v1050
  %v1075 = vadd.f32 %v1009, %v1047
  %v1076 = vadd.f32 %v1010, %v1048
  %v1077 = vadd.f32 %v1011, %v1049
  %v1078 = vadd.f32 %v1012, %v1050
  %v1079 = vadd.f32 %v1013, %v1047
  %v1080 = vadd.f32 %v1014, %v1048
  %v1081 = vadd.f32 %v1015, %v1049
  %v1082 = vadd.f32 %v1016, %v1050
  %v1083 = vadd.f32 %v1017, %v1047
  %v1084 = vadd.f32 %v1018, %v1048
  %v1085 = vadd.f32 %v1019, %v1049
  %v1086 = vadd.f32 %v1020, %v1050
  %v1087 = vadd.f32 %v1021, %v1047
  %v1088 = vadd.f32 %v1022, %v1048
  %v1089 = vadd.f32 %v1023, %v1049
  %v1090 = vadd.f32 %v1024, %v1050
  %v1091 = vadd.f32 %v1025, %v1047
  %v1092 = vadd.f32 %v1026, %v1048
  %v1093 = vadd.f32 %v1027, %v1049
  %v1094 = vadd.f32 %v1028, %v1050
  %v1095 = vadd.f32 %v1029, %v1047
  %v1096 = vadd.f32 %v1030, %v1048
  %v1097 = vadd.f32 %v1031, %v1049
  %v1098 = vadd.f32 %v1032, %v1050
  %v1099 = vadd.f32 %v1033, %v1047
  %v1100 = vadd.f32 %v1034, %v1048
  %v1101 = vadd.f32 %v1035, %v1049
  %v1102 = vadd.f32 %v1036, %v1050
  %v1103 = vadd.f32 %v1037, %v1047
  %v1104 = vadd.f32 %v1038, %v1048
  %v1105 = vadd.f32 %v1039, %v1049
  %v1106 = vadd.f32 %v1040, %v1050
  %v1107 = vadd.f32 %v1041, %v1047
  %v1108 = vadd.f32 %v1042, %v1048
  %v1109 = vadd.f32 %v1043, %v1049
  %v1110 = vadd.f32 %v1044, %v1050
  %v1111 = vmax.f32 %v1055, 0.0
  %v1112 = vmax.f32 %v1056, 0.0
  %v1113 = vmax.f32 %v1057, 0.0
  %v1114 = vmax.f32 %v1058, 0.0
  %v1115 = vmax.f32 %v1059, 0.0
  %v1116 = vmax.f32 %v1060, 0.0
  %v1117 = vmax.f32 %v1061, 0.0
  %v1118 = vmax.f32 %v1062, 0.0
  %v1119 = vmax.f32 %v1063, 0.0
  %v1120 = vmax.f32 %v1064, 0.0
  %v1121 = vmax.f32 %v1065, 0.0
  %v1122 = vmax.f32 %v1066, 0.0
  %v1123 = vmax.f32 %v1067, 0.0
  %v1124 = vmax.f32 %v1068, 0.0
  %v1125 = vmax.f32 %v1069, 0.0
  %v1126 = vmax.f32 %v1070, 0.0
  %v1127 = vmax.f32 %v1071, 0.0
  %v1128 = vmax.f32 %v1072, 0.0
  %v1129 = vmax.f32 %v1073, 0.0
  %v1130 = vmax.f32 %v1074, 0.0
  %v1131 = vmax.f32 %v1075, 0.0
  %v1132 = vmax.f32 %v1076, 0.0
  %v1133 = vmax.f32 %v1077, 0.0
  %v1134 = vmax.f32 %v1078, 0.0
  %v1135 = vmax.f32 %v1079, 0.0
  %v1136 = vmax.f32 %v1080, 0.0
  %v1137 = vmax.f32 %v1081, 0.0
  %v1138 = vmax.f32 %v1082, 0.0
  %v1139 = vmax.f32 %v1083, 0.0
  %v1140 = vmax.f32 %v1084, 0.0
  %v1141 = vmax.f32 %v1085, 0.0
  %v1142 = vmax.f32 %v1086, 0.0
  %v1143 = vmax.f32 %v1087, 0.0
  %v1144 = vmax.f32 %v1088, 0.0
  %v1145 = vmax.f32 %v1089, 0.0
  %v1146 = vmax.f32 %v1090, 0.0
  %v1147 = vmax.f32 %v1091, 0.0
  %v1148 = vmax.f32 %v1092, 0.0
  %v1149 = vmax.f32 %v1093, 0.0
  %v1150 = vmax.f32 %v1094, 0.0
  %v1151 = vmax.f32 %v1095, 0.0
  %v1152 = vmax.f32 %v1096, 0.0
  %v1153 = vmax.f32 %v1097, 0.0
  %v1154 = vmax.f32 %v1098, 0.0
  %v1155 = vmax.f32 %v1099, 0.0
  %v1156 = vmax.f32 %v1100, 0.0
  %v1157 = vmax.f32 %v1101, 0.0
  %v1158 = vmax.f32 %v1102, 0.0
  %v1159 = vmax.f32 %v1103, 0.0
  %v1160 = vmax.f32 %v1104, 0.0
  %v1161 = vmax.f32 %v1105, 0.0
  %v1162 = vmax.f32 %v1106, 0.0
  %v1163 = vmax.f32 %v1107, 0.0
  %v1164 = vmax.f32 %v1108, 0.0
  %v1165 = vmax.f32 %v1109, 0.0
  %v1166 = vmax.f32 %v1110, 0.0
  %vm1223 = vcmask 1046528
  %v1224 = vrot.slane %v1111, 1
  %v1225 = vrot.slane %v1115, 1
  %v1226 = vsel %vm1223, %v1224, %v1225
  %v1227 = vrot.slane %v1112, 1
  %v1228 = vrot.slane %v1116, 1
  %v1229 = vsel %vm1223, %v1227, %v1228
  %v1230 = vrot.slane %v1113, 1
  %v1231 = vrot.slane %v1117, 1
  %v1232 = vsel %vm1223, %v1230, %v1231
  %v1233 = vrot.slane %v1114, 1
  %v1234 = vrot.slane %v1118, 1
  %v1235 = vsel %vm1223, %v1233, %v1234
  %v1236 = vrot.slane %v1119, 1
  %v1237 = vsel %vm1223, %v1225, %v1236
  %v1238 = vrot.slane %v1120, 1
  %v1239 = vsel %vm1223, %v1228, %v1238
  %v1240 = vrot.slane %v1121, 1
  %v1241 = vsel %vm1223, %v1231, %v1240
  %v1242 = vrot.slane %v1122, 1
  %v1243 = vsel %vm1223, %v1234, %v1242
  %v1244 = vrot.slane %v1123, 1
  %v1245 = vsel %vm1223, %v1236, %v1244
  %v1246 = vrot.slane %v1124, 1
  %v1247 = vsel %vm1223, %v1238, %v1246
  %v1248 = vrot.slane %v1125, 1
  %v1249 = vsel %vm1223, %v1240, %v1248
  %v1250 = vrot.slane %v1126, 1
  %v1251 = vsel %vm1223, %v1242, %v1250
  %v1252 = vrot.slane %v1127, 1
  %v1253 = vsel %vm1223, %v1244, %v1252
  %v1254 = vrot.slane %v1128, 1
  %v1255 = vsel %vm1223, %v1246, %v1254
  %v1256 = vrot.slane %v1129, 1
  %v1257 = vsel %vm1223, %v1248, %v1256
  %v1258 = vrot.slane %v1130, 1
  %v1259 = vsel %vm1223, %v1250, %v1258
  %v1260 = vrot.slane %v1131, 1
  %v1261 = vsel %vm1223, %v1252, %v1260
  %v1262 = vrot.slane %v1132, 1
  %v1263 = vsel %vm1223, %v1254, %v1262
  %v1264 = vrot.slane %v1133, 1
  %v1265 = vsel %vm1223, %v1256, %v1264
  %v1266 = vrot.slane %v1134, 1
  %v1267 = vsel %vm1223, %v1258, %v1266
  %v1268 = vrot.slane %v1135, 1
  %v1269 = vsel %vm1223, %v1260, %v1268
  %v1270 = vrot.slane %v1136, 1
  %v1271 = vsel %vm1223, %v1262, %v1270
  %v1272 = vrot.slane %v1137, 1
  %v1273 = vsel %vm1223, %v1264, %v1272
  %v1274 = vrot.slane %v1138, 1
  %v1275 = vsel %vm1223, %v1266, %v1274
  %v1276 = vrot.slane %v1139, 1
  %v1277 = vsel %vm1223, %v1268, %v1276
  %v1278 = vrot.slane %v1140, 1
  %v1279 = vsel %vm1223, %v1270, %v1278
  %v1280 = vrot.slane %v1141, 1
  %v1281 = vsel %vm1223, %v1272, %v1280
  %v1282 = vrot.slane %v1142, 1
  %v1283 = vsel %vm1223, %v1274, %v1282
  %v1284 = vrot.slane %v1143, 1
  %v1285 = vsel %vm1223, %v1276, %v1284
  %v1286 = vrot.slane %v1144, 1
  %v1287 = vsel %vm1223, %v1278, %v1286
  %v1288 = vrot.slane %v1145, 1
  %v1289 = vsel %vm1223, %v1280, %v1288
  %v1290 = vrot.slane %v1146, 1
  %v1291 = vsel %vm1223, %v1282, %v1290
  %v1292 = vrot.slane %v1147, 1
  %v1293 = vsel %vm1223, %v1284, %v1292
  %v1294 = vrot.slane %v1148, 1
  %v1295 = vsel %vm1223, %v1286, %v1294
  %v1296 = vrot.slane %v1149, 1
  %v1297 = vsel %vm1223, %v1288, %v1296
  %v1298 = vrot.slane %v1150, 1
  %v1299 = vsel %vm1223, %v1290, %v1298
  %v1300 = vrot.slane %v1151, 1
  %v1301 = vsel %vm1223, %v1292, %v1300
  %v1302 = vrot.slane %v1152, 1
  %v1303 = vsel %vm1223, %v1294, %v1302
  %v1304 = vrot.slane %v1153, 1
  %v1305 = vsel %vm1223, %v1296, %v1304
  %v1306 = vrot.slane %v1154, 1
  %v1307 = vsel %vm1223, %v1298, %v1306
  %v1308 = vrot.slane %v1155, 1
  %v1309 = vsel %vm1223, %v1300, %v1308
  %v1310 = vrot.slane %v1156, 1
  %v1311 = vsel %vm1223, %v1302, %v1310
  %v1312 = vrot.slane %v1157, 1
  %v1313 = vsel %vm1223, %v1304, %v1312
  %v1314 = vrot.slane %v1158, 1
  %v1315 = vsel %vm1223, %v1306, %v1314
  %v1316 = vrot.slane %v1159, 1
  %v1317 = vsel %vm1223, %v1308, %v1316
  %v1318 = vrot.slane %v1160, 1
  %v1319 = vsel %vm1223, %v1310, %v1318
  %v1320 = vrot.slane %v1161, 1
  %v1321 = vsel %vm1223, %v1312, %v1320
  %v1322 = vrot.slane %v1162, 1
  %v1323 = vsel %vm1223, %v1314, %v1322
  %v1324 = vrot.slane %v1163, 1
  %v1325 = vsel %vm1223, %v1316, %v1324
  %v1326 = vrot.slane %v1164, 1
  %v1327 = vsel %vm1223, %v1318, %v1326
  %v1328 = vrot.slane %v1165, 1
  %v1329 = vsel %vm1223, %v1320, %v1328
  %v1330 = vrot.slane %v1166, 1
  %v1331 = vsel %vm1223, %v1322, %v1330
  %v1388 = vmax.f32 %v1111, %v1226
  %v1389 = vmax.f32 %v1112, %v1229
  %v1390 = vmax.f32 %v1113, %v1232
  %v1391 = vmax.f32 %v1114, %v1235
  %v1392 = vmax.f32 %v1115, %v1237
  %v1393 = vmax.f32 %v1116, %v1239
  %v1394 = vmax.f32 %v1117, %v1241
  %v1395 = vmax.f32 %v1118, %v1243
  %v1396 = vmax.f32 %v1119, %v1245
  %v1397 = vmax.f32 %v1120, %v1247
  %v1398 = vmax.f32 %v1121, %v1249
  %v1399 = vmax.f32 %v1122, %v1251
  %v1400 = vmax.f32 %v1123, %v1253
  %v1401 = vmax.f32 %v1124, %v1255
  %v1402 = vmax.f32 %v1125, %v1257
  %v1403 = vmax.f32 %v1126, %v1259
  %v1404 = vmax.f32 %v1127, %v1261
  %v1405 = vmax.f32 %v1128, %v1263
  %v1406 = vmax.f32 %v1129, %v1265
  %v1407 = vmax.f32 %v1130, %v1267
  %v1408 = vmax.f32 %v1131, %v1269
  %v1409 = vmax.f32 %v1132, %v1271
  %v1410 = vmax.f32 %v1133, %v1273
  %v1411 = vmax.f32 %v1134, %v1275
  %v1412 = vmax.f32 %v1135, %v1277
  %v1413 = vmax.f32 %v1136, %v1279
  %v1414 = vmax.f32 %v1137, %v1281
  %v1415 = vmax.f32 %v1138, %v1283
  %v1416 = vmax.f32 %v1139, %v1285
  %v1417 = vmax.f32 %v1140, %v1287
  %v1418 = vmax.f32 %v1141, %v1289
  %v1419 = vmax.f32 %v1142, %v1291
  %v1420 = vmax.f32 %v1143, %v1293
  %v1421 = vmax.f32 %v1144, %v1295
  %v1422 = vmax.f32 %v1145, %v1297
  %v1423 = vmax.f32 %v1146, %v1299
  %v1424 = vmax.f32 %v1147, %v1301
  %v1425 = vmax.f32 %v1148, %v1303
  %v1426 = vmax.f32 %v1149, %v1305
  %v1427 = vmax.f32 %v1150, %v1307
  %v1428 = vmax.f32 %v1151, %v1309
  %v1429 = vmax.f32 %v1152, %v1311
  %v1430 = vmax.f32 %v1153, %v1313
  %v1431 = vmax.f32 %v1154, %v1315
  %v1432 = vmax.f32 %v1155, %v1317
  %v1433 = vmax.f32 %v1156, %v1319
  %v1434 = vmax.f32 %v1157, %v1321
  %v1435 = vmax.f32 %v1158, %v1323
  %v1436 = vmax.f32 %v1159, %v1325
  %v1437 = vmax.f32 %v1160, %v1327
  %v1438 = vmax.f32 %v1161, %v1329
  %v1439 = vmax.f32 %v1162, %v1331
  %v1440 = vmax.f32 %v1163, %v1324
  %v1441 = vmax.f32 %v1164, %v1326
  %v1442 = vmax.f32 %v1165, %v1328
  %v1443 = vmax.f32 %v1166, %v1330
  %1500 = vrot.lane.b32.xlu0 %v1388, 96
  %v1501 = vpop.permute.xlu0 %1500
  %1502 = vrot.lane.b32.xlu0 %v1389, 96
  %v1503 = vpop.permute.xlu0 %1502
  %1504 = vrot.lane.b32.xlu0 %v1390, 96
  %v1505 = vpop.permute.xlu0 %1504
  %1506 = vrot.lane.b32.xlu0 %v1391, 96
  %v1507 = vpop.permute.xlu0 %1506
  %1508 = vrot.lane.b32.xlu0 %v1392, 96
  %v1509 = vpop.permute.xlu0 %1508
  %1510 = vrot.lane.b32.xlu0 %v1393, 96
  %v1511 = vpop.permute.xlu0 %1510
  %1512 = vrot.lane.b32.xlu0 %v1394, 96
  %v1513 = vpop.permute.xlu0 %1512
  %1514 = vrot.lane.b32.xlu0 %v1395, 96
  %v1515 = vpop.permute.xlu0 %1514
  %1516 = vrot.lane.b32.xlu0 %v1396, 96
  %v1517 = vpop.permute.xlu0 %1516
  %1518 = vrot.lane.b32.xlu0 %v1397, 96
  %v1519 = vpop.permute.xlu0 %1518
  %1520 = vrot.lane.b32.xlu0 %v1398, 96
  %v1521 = vpop.permute.xlu0 %1520
  %1522 = vrot.lane.b32.xlu0 %v1399, 96
  %v1523 = vpop.permute.xlu0 %1522
  %1524 = vrot.lane.b32.xlu0 %v1400, 96
  %v1525 = vpop.permute.xlu0 %1524
  %1526 = vrot.lane.b32.xlu0 %v1401, 96
  %v1527 = vpop.permute.xlu0 %1526
  %1528 = vrot.lane.b32.xlu0 %v1402, 96
  %v1529 = vpop.permute.xlu0 %1528
  %1530 = vrot.lane.b32.xlu0 %v1403, 96
  %v1531 = vpop.permute.xlu0 %1530
  %1532 = vrot.lane.b32.xlu0 %v1404, 96
  %v1533 = vpop.permute.xlu0 %1532
  %1534 = vrot.lane.b32.xlu0 %v1405, 96
  %v1535 = vpop.permute.xlu0 %1534
  %1536 = vrot.lane.b32.xlu0 %v1406, 96
  %v1537 = vpop.permute.xlu0 %1536
  %1538 = vrot.lane.b32.xlu0 %v1407, 96
  %v1539 = vpop.permute.xlu0 %1538
  %1540 = vrot.lane.b32.xlu0 %v1408, 96
  %v1541 = vpop.permute.xlu0 %1540
  %1542 = vrot.lane.b32.xlu0 %v1409, 96
  %v1543 = vpop.permute.xlu0 %1542
  %1544 = vrot.lane.b32.xlu0 %v1410, 96
  %v1545 = vpop.permute.xlu0 %1544
  %1546 = vrot.lane.b32.xlu0 %v1411, 96
  %v1547 = vpop.permute.xlu0 %1546
  %1548 = vrot.lane.b32.xlu0 %v1412, 96
  %v1549 = vpop.permute.xlu0 %1548
  %1550 = vrot.lane.b32.xlu0 %v1413, 96
  %v1551 = vpop.permute.xlu0 %1550
  %1552 = vrot.lane.b32.xlu0 %v1414, 96
  %v1553 = vpop.permute.xlu0 %1552
  %1554 = vrot.lane.b32.xlu0 %v1415, 96
  %v1555 = vpop.permute.xlu0 %1554
  %1556 = vrot.lane.b32.xlu0 %v1416, 96
  %v1557 = vpop.permute.xlu0 %1556
  %1558 = vrot.lane.b32.xlu0 %v1417, 96
  %v1559 = vpop.permute.xlu0 %1558
  %1560 = vrot.lane.b32.xlu0 %v1418, 96
  %v1561 = vpop.permute.xlu0 %1560
  %1562 = vrot.lane.b32.xlu0 %v1419, 96
  %v1563 = vpop.permute.xlu0 %1562
  %1564 = vrot.lane.b32.xlu0 %v1420, 96
  %v1565 = vpop.permute.xlu0 %1564
  %1566 = vrot.lane.b32.xlu0 %v1421, 96
  %v1567 = vpop.permute.xlu0 %1566
  %1568 = vrot.lane.b32.xlu0 %v1422, 96
  %v1569 = vpop.permute.xlu0 %1568
  %1570 = vrot.lane.b32.xlu0 %v1423, 96
  %v1571 = vpop.permute.xlu0 %1570
  %1572 = vrot.lane.b32.xlu0 %v1424, 96
  %v1573 = vpop.permute.xlu0 %1572
  %1574 = vrot.lane.b32.xlu0 %v1425, 96
  %v1575 = vpop.permute.xlu0 %1574
  %1576 = vrot.lane.b32.xlu0 %v1426, 96
  %v1577 = vpop.permute.xlu0 %1576
  %1578 = vrot.lane.b32.xlu0 %v1427, 96
  %v1579 = vpop.permute.xlu0 %1578
  %1580 = vrot.lane.b32.xlu0 %v1428, 96
  %v1581 = vpop.permute.xlu0 %1580
  %1582 = vrot.lane.b32.xlu0 %v1429, 96
  %v1583 = vpop.permute.xlu0 %1582
  %1584 = vrot.lane.b32.xlu0 %v1430, 96
  %v1585 = vpop.permute.xlu0 %1584
  %1586 = vrot.lane.b32.xlu0 %v1431, 96
  %v1587 = vpop.permute.xlu0 %1586
  %1588 = vrot.lane.b32.xlu0 %v1432, 96
  %v1589 = vpop.permute.xlu0 %1588
  %1590 = vrot.lane.b32.xlu0 %v1433, 96
  %v1591 = vpop.permute.xlu0 %1590
  %1592 = vrot.lane.b32.xlu0 %v1434, 96
  %v1593 = vpop.permute.xlu0 %1592
  %1594 = vrot.lane.b32.xlu0 %v1435, 96
  %v1595 = vpop.permute.xlu0 %1594
  %1596 = vrot.lane.b32.xlu0 %v1436, 96
  %v1597 = vpop.permute.xlu0 %1596
  %1598 = vrot.lane.b32.xlu0 %v1437, 96
  %v1599 = vpop.permute.xlu0 %1598
  %1600 = vrot.lane.b32.xlu0 %v1438, 96
  %v1601 = vpop.permute.xlu0 %1600
  %1602 = vrot.lane.b32.xlu0 %v1439, 96
  %v1603 = vpop.permute.xlu0 %1602
  %1604 = vrot.lane.b32.xlu0 %v1440, 96
  %v1605 = vpop.permute.xlu0 %1604
  %1606 = vrot.lane.b32.xlu0 %v1441, 96
  %v1607 = vpop.permute.xlu0 %1606
  %1608 = vrot.lane.b32.xlu0 %v1442, 96
  %v1609 = vpop.permute.xlu0 %1608
  %1610 = vrot.lane.b32.xlu0 %v1443, 96
  %v1611 = vpop.permute.xlu0 %1610
  %vm1612 = vcmask 785408
  %v1613 = vsel %vm1612, %v1501, %v1503
  %v1614 = vsel %vm1612, %v1503, %v1505
  %v1615 = vsel %vm1612, %v1505, %v1507
  %v1616 = vsel %vm1612, %v1509, %v1511
  %v1617 = vsel %vm1612, %v1511, %v1513
  %v1618 = vsel %vm1612, %v1513, %v1515
  %v1619 = vsel %vm1612, %v1517, %v1519
  %v1620 = vsel %vm1612, %v1519, %v1521
  %v1621 = vsel %vm1612, %v1521, %v1523
  %v1622 = vsel %vm1612, %v1525, %v1527
  %v1623 = vsel %vm1612, %v1527, %v1529
  %v1624 = vsel %vm1612, %v1529, %v1531
  %v1625 = vsel %vm1612, %v1533, %v1535
  %v1626 = vsel %vm1612, %v1535, %v1537
  %v1627 = vsel %vm1612, %v1537, %v1539
  %v1628 = vsel %vm1612, %v1541, %v1543
  %v1629 = vsel %vm1612, %v1543, %v1545
  %v1630 = vsel %vm1612, %v1545, %v1547
  %v1631 = vsel %vm1612, %v1549, %v1551
  %v1632 = vsel %vm1612, %v1551, %v1553
  %v1633 = vsel %vm1612, %v1553, %v1555
  %v1634 = vsel %vm1612, %v1557, %v1559
  %v1635 = vsel %vm1612, %v1559, %v1561
  %v1636 = vsel %vm1612, %v1561, %v1563
  %v1637 = vsel %vm1612, %v1565, %v1567
  %v1638 = vsel %vm1612, %v1567, %v1569
  %v1639 = vsel %vm1612, %v1569, %v1571
  %v1640 = vsel %vm1612, %v1573, %v1575
  %v1641 = vsel %vm1612, %v1575, %v1577
  %v1642 = vsel %vm1612, %v1577, %v1579
  %v1643 = vsel %vm1612, %v1581, %v1583
  %v1644 = vsel %vm1612, %v1583, %v1585
  %v1645 = vsel %vm1612, %v1585, %v1587
  %v1646 = vsel %vm1612, %v1589, %v1591
  %v1647 = vsel %vm1612, %v1591, %v1593
  %v1648 = vsel %vm1612, %v1593, %v1595
  %v1649 = vsel %vm1612, %v1597, %v1599
  %v1650 = vsel %vm1612, %v1599, %v1601
  %v1651 = vsel %vm1612, %v1601, %v1603
  %v1652 = vsel %vm1612, %v1605, %v1607
  %v1653 = vsel %vm1612, %v1607, %v1609
  %v1654 = vsel %vm1612, %v1609, %v1611
  %v1711 = vmax.f32 %v1388, %v1613
  %v1712 = vmax.f32 %v1389, %v1614
  %v1713 = vmax.f32 %v1390, %v1615
  %v1714 = vmax.f32 %v1391, %v1507
  %v1715 = vmax.f32 %v1392, %v1616
  %v1716 = vmax.f32 %v1393, %v1617
  %v1717 = vmax.f32 %v1394, %v1618
  %v1718 = vmax.f32 %v1395, %v1515
  %v1719 = vmax.f32 %v1396, %v1619
  %v1720 = vmax.f32 %v1397, %v1620
  %v1721 = vmax.f32 %v1398, %v1621
  %v1722 = vmax.f32 %v1399, %v1523
  %v1723 = vmax.f32 %v1400, %v1622
  %v1724 = vmax.f32 %v1401, %v1623
  %v1725 = vmax.f32 %v1402, %v1624
  %v1726 = vmax.f32 %v1403, %v1531
  %v1727 = vmax.f32 %v1404, %v1625
  %v1728 = vmax.f32 %v1405, %v1626
  %v1729 = vmax.f32 %v1406, %v1627
  %v1730 = vmax.f32 %v1407, %v1539
  %v1731 = vmax.f32 %v1408, %v1628
  %v1732 = vmax.f32 %v1409, %v1629
  %v1733 = vmax.f32 %v1410, %v1630
  %v1734 = vmax.f32 %v1411, %v1547
  %v1735 = vmax.f32 %v1412, %v1631
  %v1736 = vmax.f32 %v1413, %v1632
  %v1737 = vmax.f32 %v1414, %v1633
  %v1738 = vmax.f32 %v1415, %v1555
  %v1739 = vmax.f32 %v1416, %v1634
  %v1740 = vmax.f32 %v1417, %v1635
  %v1741 = vmax.f32 %v1418, %v1636
  %v1742 = vmax.f32 %v1419, %v1563
  %v1743 = vmax.f32 %v1420, %v1637
  %v1744 = vmax.f32 %v1421, %v1638
  %v1745 = vmax.f32 %v1422, %v1639
  %v1746 = vmax.f32 %v1423, %v1571
  %v1747 = vmax.f32 %v1424, %v1640
  %v1748 = vmax.f32 %v1425, %v1641
  %v1749 = vmax.f32 %v1426, %v1642
  %v1750 = vmax.f32 %v1427, %v1579
  %v1751 = vmax.f32 %v1428, %v1643
  %v1752 = vmax.f32 %v1429, %v1644
  %v1753 = vmax.f32 %v1430, %v1645
  %v1754 = vmax.f32 %v1431, %v1587
  %v1755 = vmax.f32 %v1432, %v1646
  %v1756 = vmax.f32 %v1433, %v1647
  %v1757 = vmax.f32 %v1434, %v1648
  %v1758 = vmax.f32 %v1435, %v1595
  %v1759 = vmax.f32 %v1436, %v1649
  %v1760 = vmax.f32 %v1437, %v1650
  %v1761 = vmax.f32 %v1438, %v1651
  %v1762 = vmax.f32 %v1439, %v1603
  %v1763 = vmax.f32 %v1440, %v1652
  %v1764 = vmax.f32 %v1441, %v1653
  %v1765 = vmax.f32 %v1442, %v1654
  %v1766 = vmax.f32 %v1443, %v1611
  %v1767 = vpack.c.bf16 %v1715, %v1711
  %v1768 = vpack.c.bf16 %v1716, %v1712
  %v1769 = vpack.c.bf16 %v1717, %v1713
  %v1770 = vpack.c.bf16 %v1718, %v1714
  %v1771 = vpack.c.bf16 %v1723, %v1719
  %v1772 = vpack.c.bf16 %v1724, %v1720
  %v1773 = vpack.c.bf16 %v1725, %v1721
  %v1774 = vpack.c.bf16 %v1726, %v1722
  %v1775 = vpack.c.bf16 %v1731, %v1727
  %v1776 = vpack.c.bf16 %v1732, %v1728
  %v1777 = vpack.c.bf16 %v1733, %v1729
  %v1778 = vpack.c.bf16 %v1734, %v1730
  %v1779 = vpack.c.bf16 %v1739, %v1735
  %v1780 = vpack.c.bf16 %v1740, %v1736
  %v1781 = vpack.c.bf16 %v1741, %v1737
  %v1782 = vpack.c.bf16 %v1742, %v1738
  %v1783 = vpack.c.bf16 %v1747, %v1743
  %v1784 = vpack.c.bf16 %v1748, %v1744
  %v1785 = vpack.c.bf16 %v1749, %v1745
  %v1786 = vpack.c.bf16 %v1750, %v1746
  %v1787 = vpack.c.bf16 %v1755, %v1751
  %v1788 = vpack.c.bf16 %v1756, %v1752
  %v1789 = vpack.c.bf16 %v1757, %v1753
  %v1790 = vpack.c.bf16 %v1758, %v1754
  %v1791 = vpack.c.bf16 %v1763, %v1759
  %v1792 = vpack.c.bf16 %v1764, %v1760
  %v1793 = vpack.c.bf16 %v1765, %v1761
  %v1794 = vpack.c.bf16 %v1766, %v1762
  %v1795 = vld [vmem:[%s3] sm:$0xf]
  %v1796 = vld [vmem:[%s3 + $0x4] sm:$0xf]
  %v1797 = vld [vmem:[%s3 + $0x8] sm:$0xf]
  %v1798 = vld [vmem:[%s3 + $0xc] sm:$0xf]
  %v1799 = vld [vmem:[%s3 + $0x10] sm:$0xf]
  %v1805 = vunpack.c.l.b16 %v1795
  %v1806 = vunpack.c.l.b16 %v1796
  %v1807 = vunpack.c.l.b16 %v1797
  %v1808 = vunpack.c.l.b16 %v1798
  %v1809 = vunpack.c.l.b16 %v1799
  %v1810 = vpack.c.b16 %v1806, %v1805
  %v1811 = vpack.c.b16 %v1808, %v1807
  %v1812 = vpack.c.b16 %v1809, %v1809
  %vm1813 = vcmask 908288
  %v1815 = vsel %vm1813, %v1810, 0
  %v1818 = vsel %vm1813, %v1811, 0
  %v1821 = vsel %vm1813, %v1812, 0
  %vm1823 = vcmask 1047552
  %v1824 = vsel %vm1223, 4294967295, 65535
  %v1825 = vsel %vm1823, %v1824, 0
  %v1827 = vand.u32 %v1791, %v1825
  %v1830 = vand.u32 %v1792, %v1825
  %v1833 = vand.u32 %v1793, %v1825
  %v1836 = vand.u32 %v1794, %v1825
  %1838 = vmatpush.bf16.msra.mxu0 0
  %1839 = vmatpush.bf16.msra.mxu0 %v1827
  %1840 = vmatpush.bf16.msra.mxu0 %v1787
  %1841 = vmatpush.bf16.msra.mxu0 %v1783
  %1842 = vmatpush.bf16.msra.mxu0 %v1779
  %1843 = vmatpush.bf16.msra.mxu0 %v1775
  %1844 = vmatpush.bf16.msra.mxu0 %v1771
  %1845 = vmatpush.bf16.msra.mxu0 %v1767
  %1846 = vmatmul.bf16.gmra.mxu0 %v1815
  %v1847 = vpop.f32.mrf.mxu0
  %v1848 = vadd.f32 0.0, %v1847
  %v1849 = vpop.f32.mrf.mxu0
  %v1850 = vadd.f32 0.0, %v1849
  %1851 = vmatmul.bf16.gmra.mxu0 %v1818
  %v1852 = vpop.f32.mrf.mxu0
  %v1853 = vadd.f32 0.0, %v1852
  %v1854 = vpop.f32.mrf.mxu0
  %v1855 = vadd.f32 0.0, %v1854
  %1856 = vmatmul.bf16.gmra.mxu0 %v1821
  %v1857 = vpop.f32.mrf.mxu0
  %v1858 = vadd.f32 0.0, %v1857
  %v1859 = vpop.f32.mrf.mxu0
  %1860 = vdwg.mxu0
  %1861 = vmatpush.bf16.msra.mxu0 0
  %1862 = vmatpush.bf16.msra.mxu0 %v1830
  %1863 = vmatpush.bf16.msra.mxu0 %v1788
  %1864 = vmatpush.bf16.msra.mxu0 %v1784
  %1865 = vmatpush.bf16.msra.mxu0 %v1780
  %1866 = vmatpush.bf16.msra.mxu0 %v1776
  %1867 = vmatpush.bf16.msra.mxu0 %v1772
  %1868 = vmatpush.bf16.msra.mxu0 %v1768
  %1869 = vmatmul.bf16.gmra.mxu0 %v1815
  %v1870 = vpop.f32.mrf.mxu0
  %v1871 = vadd.f32 0.0, %v1870
  %v1872 = vpop.f32.mrf.mxu0
  %v1873 = vadd.f32 0.0, %v1872
  %1874 = vmatmul.bf16.gmra.mxu0 %v1818
  %v1875 = vpop.f32.mrf.mxu0
  %v1876 = vadd.f32 0.0, %v1875
  %v1877 = vpop.f32.mrf.mxu0
  %v1878 = vadd.f32 0.0, %v1877
  %1879 = vmatmul.bf16.gmra.mxu0 %v1821
  %v1880 = vpop.f32.mrf.mxu0
  %v1881 = vadd.f32 0.0, %v1880
  %v1882 = vpop.f32.mrf.mxu0
  %1883 = vdwg.mxu0
  %1884 = vmatpush.bf16.msra.mxu0 0
  %1885 = vmatpush.bf16.msra.mxu0 %v1833
  %1886 = vmatpush.bf16.msra.mxu0 %v1789
  %1887 = vmatpush.bf16.msra.mxu0 %v1785
  %1888 = vmatpush.bf16.msra.mxu0 %v1781
  %1889 = vmatpush.bf16.msra.mxu0 %v1777
  %1890 = vmatpush.bf16.msra.mxu0 %v1773
  %1891 = vmatpush.bf16.msra.mxu0 %v1769
  %1892 = vmatmul.bf16.gmra.mxu0 %v1815
  %v1893 = vpop.f32.mrf.mxu0
  %v1894 = vadd.f32 0.0, %v1893
  %v1895 = vpop.f32.mrf.mxu0
  %v1896 = vadd.f32 0.0, %v1895
  %1897 = vmatmul.bf16.gmra.mxu0 %v1818
  %v1898 = vpop.f32.mrf.mxu0
  %v1899 = vadd.f32 0.0, %v1898
  %v1900 = vpop.f32.mrf.mxu0
  %v1901 = vadd.f32 0.0, %v1900
  %1902 = vmatmul.bf16.gmra.mxu0 %v1821
  %v1903 = vpop.f32.mrf.mxu0
  %v1904 = vadd.f32 0.0, %v1903
  %v1905 = vpop.f32.mrf.mxu0
  %1906 = vdwg.mxu0
  %1907 = vmatpush.bf16.msra.mxu0 0
  %1908 = vmatpush.bf16.msra.mxu0 %v1836
  %1909 = vmatpush.bf16.msra.mxu0 %v1790
  %1910 = vmatpush.bf16.msra.mxu0 %v1786
  %1911 = vmatpush.bf16.msra.mxu0 %v1782
  %1912 = vmatpush.bf16.msra.mxu0 %v1778
  %1913 = vmatpush.bf16.msra.mxu0 %v1774
  %1914 = vmatpush.bf16.msra.mxu0 %v1770
  %1915 = vmatmul.bf16.gmra.mxu0 %v1815
  %v1916 = vpop.f32.mrf.mxu0
  %v1917 = vadd.f32 0.0, %v1916
  %v1918 = vpop.f32.mrf.mxu0
  %v1919 = vadd.f32 0.0, %v1918
  %1920 = vmatmul.bf16.gmra.mxu0 %v1818
  %v1921 = vpop.f32.mrf.mxu0
  %v1922 = vadd.f32 0.0, %v1921
  %v1923 = vpop.f32.mrf.mxu0
  %v1924 = vadd.f32 0.0, %v1923
  %1925 = vmatmul.bf16.gmra.mxu0 %v1821
  %v1926 = vpop.f32.mrf.mxu0
  %v1927 = vadd.f32 0.0, %v1926
  %v1928 = vpop.f32.mrf.mxu0
  %1929 = vdwg.mxu0
  %v1930 = vpack.c.bf16 %v1850, %v1848
  %v1931 = vpack.c.bf16 %v1873, %v1871
  %v1932 = vpack.c.bf16 %v1896, %v1894
  %v1933 = vpack.c.bf16 %v1919, %v1917
  %v1934 = vpack.c.bf16 %v1855, %v1853
  %v1935 = vpack.c.bf16 %v1878, %v1876
  %v1936 = vpack.c.bf16 %v1901, %v1899
  %v1937 = vpack.c.bf16 %v1924, %v1922
  %v1938 = vpack.c.bf16 %v1858, %v1858
  %v1939 = vpack.c.bf16 %v1881, %v1881
  %v1940 = vpack.c.bf16 %v1904, %v1904
  %v1941 = vpack.c.bf16 %v1927, %v1927
  %v1942 = vld [vmem:[%s4] sm:$0xff]
  %v1943 = vld [vmem:[%s4 + $0x8] sm:$0xf]
  %v1944 = vld [vmem:[%s4 + $0xc] sm:$0xff]
  %v1945 = vld [vmem:[%s4 + $0x14] sm:$0xf]
  %v1946 = vld [vmem:[%s4 + $0x18] sm:$0xff]
  %v1947 = vld [vmem:[%s4 + $0x20] sm:$0xf]
  %v1948 = vld [vmem:[%s4 + $0x24] sm:$0xff]
  %v1949 = vld [vmem:[%s4 + $0x2c] sm:$0xf]
  %v1950 = vld [vmem:[%s4 + $0x30] sm:$0xff]
  %v1951 = vld [vmem:[%s4 + $0x38] sm:$0xf]
  %v1952 = vld [vmem:[%s4 + $0x3c] sm:$0xff]
  %v1953 = vld [vmem:[%s4 + $0x44] sm:$0xf]
  %v1954 = vld [vmem:[%s4 + $0x48] sm:$0xff]
  %v1955 = vld [vmem:[%s4 + $0x50] sm:$0xf]
  %v1956 = vld [vmem:[%s4 + $0x54] sm:$0xff]
  %v1957 = vld [vmem:[%s4 + $0x5c] sm:$0xf]
  %v1958 = vld [vmem:[%s4 + $0x60] sm:$0xff]
  %v1959 = vld [vmem:[%s4 + $0x68] sm:$0xf]
  %v1960 = vld [vmem:[%s4 + $0x6c] sm:$0xff]
  %v1961 = vld [vmem:[%s4 + $0x74] sm:$0xf]
  %v1962 = vld [vmem:[%s4 + $0x78] sm:$0xff]
  %v1963 = vld [vmem:[%s4 + $0x80] sm:$0xf]
  %v1964 = vld [vmem:[%s4 + $0x84] sm:$0xff]
  %v1965 = vld [vmem:[%s4 + $0x8c] sm:$0xf]
  %v1966 = vld [vmem:[%s4 + $0x90] sm:$0xff]
  %v1967 = vld [vmem:[%s4 + $0x98] sm:$0xf]
  %v1968 = vld [vmem:[%s4 + $0x9c] sm:$0xff]
  %v1969 = vld [vmem:[%s4 + $0xa4] sm:$0xf]
  %v1970 = vld [vmem:[%s4 + $0xa8] sm:$0xff]
  %v1971 = vld [vmem:[%s4 + $0xb0] sm:$0xf]
  %v1972 = vld [vmem:[%s4 + $0xb4] sm:$0xff]
  %v1973 = vld [vmem:[%s4 + $0xbc] sm:$0xf]
  %v1974 = vld [vmem:[%s4 + $0xc0] sm:$0xff]
  %v1975 = vld [vmem:[%s4 + $0xc8] sm:$0xf]
  %v1976 = vld [vmem:[%s4 + $0xcc] sm:$0xff]
  %v1977 = vld [vmem:[%s4 + $0xd4] sm:$0xf]
  %v1978 = vld [vmem:[%s4 + $0xd8] sm:$0xff]
  %v1979 = vld [vmem:[%s4 + $0xe0] sm:$0xf]
  %v1980 = vld [vmem:[%s4 + $0xe4] sm:$0xff]
  %v1981 = vld [vmem:[%s4 + $0xec] sm:$0xf]
  %v1982 = vld [vmem:[%s4 + $0xf0] sm:$0xff]
  %v1983 = vld [vmem:[%s4 + $0xf8] sm:$0xf]
  %v1984 = vld [vmem:[%s4 + $0xfc] sm:$0xff]
  %v1985 = vld [vmem:[%s4 + $0x104] sm:$0xf]
  %v1986 = vld [vmem:[%s4 + $0x108] sm:$0xff]
  %v1987 = vld [vmem:[%s4 + $0x110] sm:$0xf]
  %v1988 = vld [vmem:[%s4 + $0x114] sm:$0xff]
  %v1989 = vld [vmem:[%s4 + $0x11c] sm:$0xf]
  %v1990 = vld [vmem:[%s4 + $0x120] sm:$0xff]
  %v1991 = vld [vmem:[%s4 + $0x128] sm:$0xf]
  %v1992 = vld [vmem:[%s4 + $0x12c] sm:$0xff]
  %v1993 = vld [vmem:[%s4 + $0x134] sm:$0xf]
  %v1994 = vld [vmem:[%s4 + $0x138] sm:$0xff]
  %v1995 = vld [vmem:[%s4 + $0x140] sm:$0xf]
  %v1996 = vld [vmem:[%s4 + $0x144] sm:$0xff]
  %v1997 = vld [vmem:[%s4 + $0x14c] sm:$0xf]
  %v1998 = vld [vmem:[%s4 + $0x150] sm:$0xff]
  %v1999 = vld [vmem:[%s4 + $0x158] sm:$0xf]
  %v2000 = vld [vmem:[%s4 + $0x15c] sm:$0xff]
  %v2001 = vld [vmem:[%s4 + $0x164] sm:$0xf]
  %v2002 = vld [vmem:[%s4 + $0x168] sm:$0xff]
  %v2003 = vld [vmem:[%s4 + $0x170] sm:$0xf]
  %v2004 = vld [vmem:[%s4 + $0x174] sm:$0xff]
  %v2005 = vld [vmem:[%s4 + $0x17c] sm:$0xf]
  %v2006 = vld [vmem:[%s4 + $0x180] sm:$0xff]
  %v2007 = vld [vmem:[%s4 + $0x188] sm:$0xf]
  %v2008 = vld [vmem:[%s4 + $0x18c] sm:$0xff]
  %v2009 = vld [vmem:[%s4 + $0x194] sm:$0xf]
  %v2010 = vld [vmem:[%s4 + $0x198] sm:$0xff]
  %v2011 = vld [vmem:[%s4 + $0x1a0] sm:$0xf]
  %v2012 = vld [vmem:[%s4 + $0x1a4] sm:$0xff]
  %v2013 = vld [vmem:[%s4 + $0x1ac] sm:$0xf]
  %v2014 = vld [vmem:[%s4 + $0x1b0] sm:$0xff]
  %v2015 = vld [vmem:[%s4 + $0x1b8] sm:$0xf]
  %v2016 = vld [vmem:[%s4 + $0x1bc] sm:$0xff]
  %v2017 = vld [vmem:[%s4 + $0x1c4] sm:$0xf]
  %v2018 = vld [vmem:[%s4 + $0x1c8] sm:$0xff]
  %v2019 = vld [vmem:[%s4 + $0x1d0] sm:$0xf]
  %v2020 = vld [vmem:[%s4 + $0x1d4] sm:$0xff]
  %v2021 = vld [vmem:[%s4 + $0x1dc] sm:$0xf]
  %v2022 = vld [vmem:[%s4 + $0x1e0] sm:$0xff]
  %v2023 = vld [vmem:[%s4 + $0x1e8] sm:$0xf]
  %v2024 = vld [vmem:[%s4 + $0x1ec] sm:$0xff]
  %v2025 = vld [vmem:[%s4 + $0x1f4] sm:$0xf]
  %v2026 = vld [vmem:[%s4 + $0x1f8] sm:$0xff]
  %v2027 = vld [vmem:[%s4 + $0x200] sm:$0xf]
  %v2028 = vld [vmem:[%s4 + $0x204] sm:$0xff]
  %v2029 = vld [vmem:[%s4 + $0x20c] sm:$0xf]
  %v2030 = vld [vmem:[%s4 + $0x210] sm:$0xff]
  %v2031 = vld [vmem:[%s4 + $0x218] sm:$0xf]
  %v2032 = vld [vmem:[%s4 + $0x21c] sm:$0xff]
  %v2033 = vld [vmem:[%s4 + $0x224] sm:$0xf]
  %v2034 = vld [vmem:[%s4 + $0x228] sm:$0xff]
  %v2035 = vld [vmem:[%s4 + $0x230] sm:$0xf]
  %v2036 = vld [vmem:[%s4 + $0x234] sm:$0xff]
  %v2037 = vld [vmem:[%s4 + $0x23c] sm:$0xf]
  %v2038 = vld [vmem:[%s4 + $0x240] sm:$0xff]
  %v2039 = vld [vmem:[%s4 + $0x248] sm:$0xf]
  %v2040 = vld [vmem:[%s4 + $0x24c] sm:$0xff]
  %v2041 = vld [vmem:[%s4 + $0x254] sm:$0xf]
  %v2042 = vld [vmem:[%s4 + $0x258] sm:$0xff]
  %v2043 = vld [vmem:[%s4 + $0x260] sm:$0xf]
  %v2044 = vld [vmem:[%s4 + $0x264] sm:$0xff]
  %v2045 = vld [vmem:[%s4 + $0x26c] sm:$0xf]
  %s2046 = scalar_lea.vmem %s3, 20
  %v2047 = vld [vmem:[%s2046] sm:$0xf]
  %v2048 = vld [vmem:[%s2046 + $0x4] sm:$0xf]
  %v2049 = vld [vmem:[%s2046 + $0x8] sm:$0xf]
  %v2050 = vld [vmem:[%s2046 + $0xc] sm:$0xf]
  %v2051 = vld [vmem:[%s2046 + $0x10] sm:$0xf]
  %v2057 = vunpack.c.l.b16 %v2047
  %v2058 = vunpack.c.l.b16 %v2048
  %v2059 = vunpack.c.l.b16 %v2049
  %v2060 = vunpack.c.l.b16 %v2050
  %v2061 = vunpack.c.l.b16 %v2051
  %v2062 = vpack.c.b16 %v2058, %v2057
  %v2063 = vpack.c.b16 %v2060, %v2059
  %v2064 = vpack.c.b16 %v2061, %v2061
  %v2066 = vsel %vm1813, %v2062, 0
  %v2069 = vsel %vm1813, %v2063, 0
  %v2072 = vsel %vm1813, %v2064, 0
  %2074 = vmatpush.bf16.msra.mxu0 0
  %2075 = vmatpush.bf16.msra.mxu0 %v1827
  %2076 = vmatpush.bf16.msra.mxu0 %v1787
  %2077 = vmatpush.bf16.msra.mxu0 %v1783
  %2078 = vmatpush.bf16.msra.mxu0 %v1779
  %2079 = vmatpush.bf16.msra.mxu0 %v1775
  %2080 = vmatpush.bf16.msra.mxu0 %v1771
  %2081 = vmatpush.bf16.msra.mxu0 %v1767
  %2082 = vmatmul.bf16.gmra.mxu0 %v2066
  %v2083 = vpop.f32.mrf.mxu0
  %v2084 = vadd.f32 0.0, %v2083
  %v2085 = vpop.f32.mrf.mxu0
  %v2086 = vadd.f32 0.0, %v2085
  %2087 = vmatmul.bf16.gmra.mxu0 %v2069
  %v2088 = vpop.f32.mrf.mxu0
  %v2089 = vadd.f32 0.0, %v2088
  %v2090 = vpop.f32.mrf.mxu0
  %v2091 = vadd.f32 0.0, %v2090
  %2092 = vmatmul.bf16.gmra.mxu0 %v2072
  %v2093 = vpop.f32.mrf.mxu0
  %v2094 = vadd.f32 0.0, %v2093
  %v2095 = vpop.f32.mrf.mxu0
  %2096 = vdwg.mxu0
  %2097 = vmatpush.bf16.msra.mxu0 0
  %2098 = vmatpush.bf16.msra.mxu0 %v1830
  %2099 = vmatpush.bf16.msra.mxu0 %v1788
  %2100 = vmatpush.bf16.msra.mxu0 %v1784
  %2101 = vmatpush.bf16.msra.mxu0 %v1780
  %2102 = vmatpush.bf16.msra.mxu0 %v1776
  %2103 = vmatpush.bf16.msra.mxu0 %v1772
  %2104 = vmatpush.bf16.msra.mxu0 %v1768
  %2105 = vmatmul.bf16.gmra.mxu0 %v2066
  %v2106 = vpop.f32.mrf.mxu0
  %v2107 = vadd.f32 0.0, %v2106
  %v2108 = vpop.f32.mrf.mxu0
  %v2109 = vadd.f32 0.0, %v2108
  %2110 = vmatmul.bf16.gmra.mxu0 %v2069
  %v2111 = vpop.f32.mrf.mxu0
  %v2112 = vadd.f32 0.0, %v2111
  %v2113 = vpop.f32.mrf.mxu0
  %v2114 = vadd.f32 0.0, %v2113
  %2115 = vmatmul.bf16.gmra.mxu0 %v2072
  %v2116 = vpop.f32.mrf.mxu0
  %v2117 = vadd.f32 0.0, %v2116
  %v2118 = vpop.f32.mrf.mxu0
  %2119 = vdwg.mxu0
  %2120 = vmatpush.bf16.msra.mxu0 0
  %2121 = vmatpush.bf16.msra.mxu0 %v1833
  %2122 = vmatpush.bf16.msra.mxu0 %v1789
  %2123 = vmatpush.bf16.msra.mxu0 %v1785
  %2124 = vmatpush.bf16.msra.mxu0 %v1781
  %2125 = vmatpush.bf16.msra.mxu0 %v1777
  %2126 = vmatpush.bf16.msra.mxu0 %v1773
  %2127 = vmatpush.bf16.msra.mxu0 %v1769
  %2128 = vmatmul.bf16.gmra.mxu0 %v2066
  %v2129 = vpop.f32.mrf.mxu0
  %v2130 = vadd.f32 0.0, %v2129
  %v2131 = vpop.f32.mrf.mxu0
  %v2132 = vadd.f32 0.0, %v2131
  %2133 = vmatmul.bf16.gmra.mxu0 %v2069
  %v2134 = vpop.f32.mrf.mxu0
  %v2135 = vadd.f32 0.0, %v2134
  %v2136 = vpop.f32.mrf.mxu0
  %v2137 = vadd.f32 0.0, %v2136
  %2138 = vmatmul.bf16.gmra.mxu0 %v2072
  %v2139 = vpop.f32.mrf.mxu0
  %v2140 = vadd.f32 0.0, %v2139
  %v2141 = vpop.f32.mrf.mxu0
  %2142 = vdwg.mxu0
  %2143 = vmatpush.bf16.msra.mxu0 0
  %2144 = vmatpush.bf16.msra.mxu0 %v1836
  %2145 = vmatpush.bf16.msra.mxu0 %v1790
  %2146 = vmatpush.bf16.msra.mxu0 %v1786
  %2147 = vmatpush.bf16.msra.mxu0 %v1782
  %2148 = vmatpush.bf16.msra.mxu0 %v1778
  %2149 = vmatpush.bf16.msra.mxu0 %v1774
  %2150 = vmatpush.bf16.msra.mxu0 %v1770
  %2151 = vmatmul.bf16.gmra.mxu0 %v2066
  %v2152 = vpop.f32.mrf.mxu0
  %v2153 = vadd.f32 0.0, %v2152
  %v2154 = vpop.f32.mrf.mxu0
  %v2155 = vadd.f32 0.0, %v2154
  %2156 = vmatmul.bf16.gmra.mxu0 %v2069
  %v2157 = vpop.f32.mrf.mxu0
  %v2158 = vadd.f32 0.0, %v2157
  %v2159 = vpop.f32.mrf.mxu0
  %v2160 = vadd.f32 0.0, %v2159
  %2161 = vmatmul.bf16.gmra.mxu0 %v2072
  %v2162 = vpop.f32.mrf.mxu0
  %v2163 = vadd.f32 0.0, %v2162
  %v2164 = vpop.f32.mrf.mxu0
  %2165 = vdwg.mxu0
  %v2166 = vpack.c.bf16 %v2086, %v2084
  %v2167 = vpack.c.bf16 %v2109, %v2107
  %v2168 = vpack.c.bf16 %v2132, %v2130
  %v2169 = vpack.c.bf16 %v2155, %v2153
  %v2170 = vpack.c.bf16 %v2091, %v2089
  %v2171 = vpack.c.bf16 %v2114, %v2112
  %v2172 = vpack.c.bf16 %v2137, %v2135
  %v2173 = vpack.c.bf16 %v2160, %v2158
  %v2174 = vpack.c.bf16 %v2094, %v2094
  %v2175 = vpack.c.bf16 %v2117, %v2117
  %v2176 = vpack.c.bf16 %v2140, %v2140
  %v2177 = vpack.c.bf16 %v2163, %v2163
  %s2178 = scalar_lea.vmem %s4, 624
  %v2179 = vld [vmem:[%s2178] sm:$0xff]
  %v2180 = vld [vmem:[%s2178 + $0x8] sm:$0xf]
  %v2181 = vld [vmem:[%s2178 + $0xc] sm:$0xff]
  %v2182 = vld [vmem:[%s2178 + $0x14] sm:$0xf]
  %v2183 = vld [vmem:[%s2178 + $0x18] sm:$0xff]
  %v2184 = vld [vmem:[%s2178 + $0x20] sm:$0xf]
  %v2185 = vld [vmem:[%s2178 + $0x24] sm:$0xff]
  %v2186 = vld [vmem:[%s2178 + $0x2c] sm:$0xf]
  %v2187 = vld [vmem:[%s2178 + $0x30] sm:$0xff]
  %v2188 = vld [vmem:[%s2178 + $0x38] sm:$0xf]
  %v2189 = vld [vmem:[%s2178 + $0x3c] sm:$0xff]
  %v2190 = vld [vmem:[%s2178 + $0x44] sm:$0xf]
  %v2191 = vld [vmem:[%s2178 + $0x48] sm:$0xff]
  %v2192 = vld [vmem:[%s2178 + $0x50] sm:$0xf]
  %v2193 = vld [vmem:[%s2178 + $0x54] sm:$0xff]
  %v2194 = vld [vmem:[%s2178 + $0x5c] sm:$0xf]
  %v2195 = vld [vmem:[%s2178 + $0x60] sm:$0xff]
  %v2196 = vld [vmem:[%s2178 + $0x68] sm:$0xf]
  %v2197 = vld [vmem:[%s2178 + $0x6c] sm:$0xff]
  %v2198 = vld [vmem:[%s2178 + $0x74] sm:$0xf]
  %v2199 = vld [vmem:[%s2178 + $0x78] sm:$0xff]
  %v2200 = vld [vmem:[%s2178 + $0x80] sm:$0xf]
  %v2201 = vld [vmem:[%s2178 + $0x84] sm:$0xff]
  %v2202 = vld [vmem:[%s2178 + $0x8c] sm:$0xf]
  %v2203 = vld [vmem:[%s2178 + $0x90] sm:$0xff]
  %v2204 = vld [vmem:[%s2178 + $0x98] sm:$0xf]
  %v2205 = vld [vmem:[%s2178 + $0x9c] sm:$0xff]
  %v2206 = vld [vmem:[%s2178 + $0xa4] sm:$0xf]
  %v2207 = vld [vmem:[%s2178 + $0xa8] sm:$0xff]
  %v2208 = vld [vmem:[%s2178 + $0xb0] sm:$0xf]
  %v2209 = vld [vmem:[%s2178 + $0xb4] sm:$0xff]
  %v2210 = vld [vmem:[%s2178 + $0xbc] sm:$0xf]
  %v2211 = vld [vmem:[%s2178 + $0xc0] sm:$0xff]
  %v2212 = vld [vmem:[%s2178 + $0xc8] sm:$0xf]
  %v2213 = vld [vmem:[%s2178 + $0xcc] sm:$0xff]
  %v2214 = vld [vmem:[%s2178 + $0xd4] sm:$0xf]
  %v2215 = vld [vmem:[%s2178 + $0xd8] sm:$0xff]
  %v2216 = vld [vmem:[%s2178 + $0xe0] sm:$0xf]
  %v2217 = vld [vmem:[%s2178 + $0xe4] sm:$0xff]
  %v2218 = vld [vmem:[%s2178 + $0xec] sm:$0xf]
  %v2219 = vld [vmem:[%s2178 + $0xf0] sm:$0xff]
  %v2220 = vld [vmem:[%s2178 + $0xf8] sm:$0xf]
  %v2221 = vld [vmem:[%s2178 + $0xfc] sm:$0xff]
  %v2222 = vld [vmem:[%s2178 + $0x104] sm:$0xf]
  %v2223 = vld [vmem:[%s2178 + $0x108] sm:$0xff]
  %v2224 = vld [vmem:[%s2178 + $0x110] sm:$0xf]
  %v2225 = vld [vmem:[%s2178 + $0x114] sm:$0xff]
  %v2226 = vld [vmem:[%s2178 + $0x11c] sm:$0xf]
  %v2227 = vld [vmem:[%s2178 + $0x120] sm:$0xff]
  %v2228 = vld [vmem:[%s2178 + $0x128] sm:$0xf]
  %v2229 = vld [vmem:[%s2178 + $0x12c] sm:$0xff]
  %v2230 = vld [vmem:[%s2178 + $0x134] sm:$0xf]
  %v2231 = vld [vmem:[%s2178 + $0x138] sm:$0xff]
  %v2232 = vld [vmem:[%s2178 + $0x140] sm:$0xf]
  %v2233 = vld [vmem:[%s2178 + $0x144] sm:$0xff]
  %v2234 = vld [vmem:[%s2178 + $0x14c] sm:$0xf]
  %v2235 = vld [vmem:[%s2178 + $0x150] sm:$0xff]
  %v2236 = vld [vmem:[%s2178 + $0x158] sm:$0xf]
  %v2237 = vld [vmem:[%s2178 + $0x15c] sm:$0xff]
  %v2238 = vld [vmem:[%s2178 + $0x164] sm:$0xf]
  %v2239 = vld [vmem:[%s2178 + $0x168] sm:$0xff]
  %v2240 = vld [vmem:[%s2178 + $0x170] sm:$0xf]
  %v2241 = vld [vmem:[%s2178 + $0x174] sm:$0xff]
  %v2242 = vld [vmem:[%s2178 + $0x17c] sm:$0xf]
  %v2243 = vld [vmem:[%s2178 + $0x180] sm:$0xff]
  %v2244 = vld [vmem:[%s2178 + $0x188] sm:$0xf]
  %v2245 = vld [vmem:[%s2178 + $0x18c] sm:$0xff]
  %v2246 = vld [vmem:[%s2178 + $0x194] sm:$0xf]
  %v2247 = vld [vmem:[%s2178 + $0x198] sm:$0xff]
  %v2248 = vld [vmem:[%s2178 + $0x1a0] sm:$0xf]
  %v2249 = vld [vmem:[%s2178 + $0x1a4] sm:$0xff]
  %v2250 = vld [vmem:[%s2178 + $0x1ac] sm:$0xf]
  %v2251 = vld [vmem:[%s2178 + $0x1b0] sm:$0xff]
  %v2252 = vld [vmem:[%s2178 + $0x1b8] sm:$0xf]
  %v2253 = vld [vmem:[%s2178 + $0x1bc] sm:$0xff]
  %v2254 = vld [vmem:[%s2178 + $0x1c4] sm:$0xf]
  %v2255 = vld [vmem:[%s2178 + $0x1c8] sm:$0xff]
  %v2256 = vld [vmem:[%s2178 + $0x1d0] sm:$0xf]
  %v2257 = vld [vmem:[%s2178 + $0x1d4] sm:$0xff]
  %v2258 = vld [vmem:[%s2178 + $0x1dc] sm:$0xf]
  %v2259 = vld [vmem:[%s2178 + $0x1e0] sm:$0xff]
  %v2260 = vld [vmem:[%s2178 + $0x1e8] sm:$0xf]
  %v2261 = vld [vmem:[%s2178 + $0x1ec] sm:$0xff]
  %v2262 = vld [vmem:[%s2178 + $0x1f4] sm:$0xf]
  %v2263 = vld [vmem:[%s2178 + $0x1f8] sm:$0xff]
  %v2264 = vld [vmem:[%s2178 + $0x200] sm:$0xf]
  %v2265 = vld [vmem:[%s2178 + $0x204] sm:$0xff]
  %v2266 = vld [vmem:[%s2178 + $0x20c] sm:$0xf]
  %v2267 = vld [vmem:[%s2178 + $0x210] sm:$0xff]
  %v2268 = vld [vmem:[%s2178 + $0x218] sm:$0xf]
  %v2269 = vld [vmem:[%s2178 + $0x21c] sm:$0xff]
  %v2270 = vld [vmem:[%s2178 + $0x224] sm:$0xf]
  %v2271 = vld [vmem:[%s2178 + $0x228] sm:$0xff]
  %v2272 = vld [vmem:[%s2178 + $0x230] sm:$0xf]
  %v2273 = vld [vmem:[%s2178 + $0x234] sm:$0xff]
  %v2274 = vld [vmem:[%s2178 + $0x23c] sm:$0xf]
  %v2275 = vld [vmem:[%s2178 + $0x240] sm:$0xff]
  %v2276 = vld [vmem:[%s2178 + $0x248] sm:$0xf]
  %v2277 = vld [vmem:[%s2178 + $0x24c] sm:$0xff]
  %v2278 = vld [vmem:[%s2178 + $0x254] sm:$0xf]
  %v2279 = vld [vmem:[%s2178 + $0x258] sm:$0xff]
  %v2280 = vld [vmem:[%s2178 + $0x260] sm:$0xf]
  %v2281 = vld [vmem:[%s2178 + $0x264] sm:$0xff]
  %v2282 = vld [vmem:[%s2178 + $0x26c] sm:$0xf]
  %v2387 = vunpack.c.l.b16 %v2179
  %v2388 = vunpack.c.h.b16 %v2179
  %v2389 = vunpack.c.l.b16 %v2180
  %v2390 = vunpack.c.l.b16 %v2181
  %v2391 = vunpack.c.h.b16 %v2181
  %v2392 = vunpack.c.l.b16 %v2182
  %v2393 = vunpack.c.l.b16 %v2183
  %v2394 = vunpack.c.h.b16 %v2183
  %v2395 = vunpack.c.l.b16 %v2184
  %v2396 = vunpack.c.l.b16 %v2185
  %v2397 = vunpack.c.h.b16 %v2185
  %v2398 = vunpack.c.l.b16 %v2186
  %v2399 = vunpack.c.l.b16 %v2187
  %v2400 = vunpack.c.h.b16 %v2187
  %v2401 = vunpack.c.l.b16 %v2188
  %v2402 = vunpack.c.l.b16 %v2189
  %v2403 = vunpack.c.h.b16 %v2189
  %v2404 = vunpack.c.l.b16 %v2190
  %v2405 = vunpack.c.l.b16 %v2191
  %v2406 = vunpack.c.h.b16 %v2191
  %v2407 = vunpack.c.l.b16 %v2192
  %v2408 = vunpack.c.l.b16 %v2193
  %v2409 = vunpack.c.h.b16 %v2193
  %v2410 = vunpack.c.l.b16 %v2194
  %v2411 = vunpack.c.l.b16 %v2195
  %v2412 = vunpack.c.h.b16 %v2195
  %v2413 = vunpack.c.l.b16 %v2196
  %v2414 = vunpack.c.l.b16 %v2197
  %v2415 = vunpack.c.h.b16 %v2197
  %v2416 = vunpack.c.l.b16 %v2198
  %v2417 = vunpack.c.l.b16 %v2199
  %v2418 = vunpack.c.h.b16 %v2199
  %v2419 = vunpack.c.l.b16 %v2200
  %v2420 = vunpack.c.l.b16 %v2201
  %v2421 = vunpack.c.h.b16 %v2201
  %v2422 = vunpack.c.l.b16 %v2202
  %v2423 = vunpack.c.l.b16 %v2203
  %v2424 = vunpack.c.h.b16 %v2203
  %v2425 = vunpack.c.l.b16 %v2204
  %v2426 = vunpack.c.l.b16 %v2205
  %v2427 = vunpack.c.h.b16 %v2205
  %v2428 = vunpack.c.l.b16 %v2206
  %v2429 = vunpack.c.l.b16 %v2207
  %v2430 = vunpack.c.h.b16 %v2207
  %v2431 = vunpack.c.l.b16 %v2208
  %v2432 = vunpack.c.l.b16 %v2209
  %v2433 = vunpack.c.h.b16 %v2209
  %v2434 = vunpack.c.l.b16 %v2210
  %v2435 = vunpack.c.l.b16 %v2211
  %v2436 = vunpack.c.h.b16 %v2211
  %v2437 = vunpack.c.l.b16 %v2212
  %v2438 = vunpack.c.l.b16 %v2213
  %v2439 = vunpack.c.h.b16 %v2213
  %v2440 = vunpack.c.l.b16 %v2214
  %v2441 = vunpack.c.l.b16 %v2215
  %v2442 = vunpack.c.h.b16 %v2215
  %v2443 = vunpack.c.l.b16 %v2216
  %v2444 = vunpack.c.l.b16 %v2217
  %v2445 = vunpack.c.h.b16 %v2217
  %v2446 = vunpack.c.l.b16 %v2218
  %v2447 = vunpack.c.l.b16 %v2219
  %v2448 = vunpack.c.h.b16 %v2219
  %v2449 = vunpack.c.l.b16 %v2220
  %v2450 = vunpack.c.l.b16 %v2221
  %v2451 = vunpack.c.h.b16 %v2221
  %v2452 = vunpack.c.l.b16 %v2222
  %v2453 = vunpack.c.l.b16 %v2223
  %v2454 = vunpack.c.h.b16 %v2223
  %v2455 = vunpack.c.l.b16 %v2224
  %v2456 = vunpack.c.l.b16 %v2225
  %v2457 = vunpack.c.h.b16 %v2225
  %v2458 = vunpack.c.l.b16 %v2226
  %v2459 = vunpack.c.l.b16 %v2227
  %v2460 = vunpack.c.h.b16 %v2227
  %v2461 = vunpack.c.l.b16 %v2228
  %v2462 = vunpack.c.l.b16 %v2229
  %v2463 = vunpack.c.h.b16 %v2229
  %v2464 = vunpack.c.l.b16 %v2230
  %v2465 = vunpack.c.l.b16 %v2231
  %v2466 = vunpack.c.h.b16 %v2231
  %v2467 = vunpack.c.l.b16 %v2232
  %v2468 = vunpack.c.l.b16 %v2233
  %v2469 = vunpack.c.h.b16 %v2233
  %v2470 = vunpack.c.l.b16 %v2234
  %v2471 = vunpack.c.l.b16 %v2235
  %v2472 = vunpack.c.h.b16 %v2235
  %v2473 = vunpack.c.l.b16 %v2236
  %v2474 = vunpack.c.l.b16 %v2237
  %v2475 = vunpack.c.h.b16 %v2237
  %v2476 = vunpack.c.l.b16 %v2238
  %v2477 = vunpack.c.l.b16 %v2239
  %v2478 = vunpack.c.h.b16 %v2239
  %v2479 = vunpack.c.l.b16 %v2240
  %v2480 = vunpack.c.l.b16 %v2241
  %v2481 = vunpack.c.h.b16 %v2241
  %v2482 = vunpack.c.l.b16 %v2242
  %v2483 = vunpack.c.l.b16 %v2243
  %v2484 = vunpack.c.h.b16 %v2243
  %v2485 = vunpack.c.l.b16 %v2244
  %v2486 = vunpack.c.l.b16 %v2245
  %v2487 = vunpack.c.h.b16 %v2245
  %v2488 = vunpack.c.l.b16 %v2246
  %v2489 = vunpack.c.l.b16 %v2247
  %v2490 = vunpack.c.h.b16 %v2247
  %v2491 = vunpack.c.l.b16 %v2248
  %v2492 = vunpack.c.l.b16 %v2249
  %v2493 = vunpack.c.h.b16 %v2249
  %v2494 = vunpack.c.l.b16 %v2250
  %v2495 = vunpack.c.l.b16 %v2251
  %v2496 = vunpack.c.h.b16 %v2251
  %v2497 = vunpack.c.l.b16 %v2252
  %v2498 = vunpack.c.l.b16 %v2253
  %v2499 = vunpack.c.h.b16 %v2253
  %v2500 = vunpack.c.l.b16 %v2254
  %v2501 = vunpack.c.l.b16 %v2255
  %v2502 = vunpack.c.h.b16 %v2255
  %v2503 = vunpack.c.l.b16 %v2256
  %v2504 = vunpack.c.l.b16 %v2257
  %v2505 = vunpack.c.h.b16 %v2257
  %v2506 = vunpack.c.l.b16 %v2258
  %v2507 = vunpack.c.l.b16 %v2259
  %v2508 = vunpack.c.h.b16 %v2259
  %v2509 = vunpack.c.l.b16 %v2260
  %v2510 = vunpack.c.l.b16 %v2261
  %v2511 = vunpack.c.h.b16 %v2261
  %v2512 = vunpack.c.l.b16 %v2262
  %v2513 = vunpack.c.l.b16 %v2263
  %v2514 = vunpack.c.h.b16 %v2263
  %v2515 = vunpack.c.l.b16 %v2264
  %v2516 = vunpack.c.l.b16 %v2265
  %v2517 = vunpack.c.h.b16 %v2265
  %v2518 = vunpack.c.l.b16 %v2266
  %v2519 = vunpack.c.l.b16 %v2267
  %v2520 = vunpack.c.h.b16 %v2267
  %v2521 = vunpack.c.l.b16 %v2268
  %v2522 = vunpack.c.l.b16 %v2269
  %v2523 = vunpack.c.h.b16 %v2269
  %v2524 = vunpack.c.l.b16 %v2270
  %v2525 = vunpack.c.l.b16 %v2271
  %v2526 = vunpack.c.h.b16 %v2271
  %v2527 = vunpack.c.l.b16 %v2272
  %v2528 = vunpack.c.l.b16 %v2273
  %v2529 = vunpack.c.h.b16 %v2273
  %v2530 = vunpack.c.l.b16 %v2274
  %v2531 = vunpack.c.l.b16 %v2275
  %v2532 = vunpack.c.h.b16 %v2275
  %v2533 = vunpack.c.l.b16 %v2276
  %v2534 = vunpack.c.l.b16 %v2277
  %v2535 = vunpack.c.h.b16 %v2277
  %v2536 = vunpack.c.l.b16 %v2278
  %v2537 = vunpack.c.l.b16 %v2279
  %v2538 = vunpack.c.h.b16 %v2279
  %v2539 = vunpack.c.l.b16 %v2280
  %v2540 = vunpack.c.l.b16 %v2281
  %v2541 = vunpack.c.h.b16 %v2281
  %v2542 = vunpack.c.l.b16 %v2282
  %v2543 = vpack.c.b16 %v2390, %v2387
  %v2544 = vpack.c.b16 %v2391, %v2388
  %v2545 = vpack.c.b16 %v2392, %v2389
  %v2546 = vpack.c.b16 %v2396, %v2393
  %v2547 = vpack.c.b16 %v2397, %v2394
  %v2548 = vpack.c.b16 %v2398, %v2395
  %v2549 = vpack.c.b16 %v2402, %v2399
  %v2550 = vpack.c.b16 %v2403, %v2400
  %v2551 = vpack.c.b16 %v2404, %v2401
  %v2552 = vpack.c.b16 %v2408, %v2405
  %v2553 = vpack.c.b16 %v2409, %v2406
  %v2554 = vpack.c.b16 %v2410, %v2407
  %v2555 = vpack.c.b16 %v2414, %v2411
  %v2556 = vpack.c.b16 %v2415, %v2412
  %v2557 = vpack.c.b16 %v2416, %v2413
  %v2558 = vpack.c.b16 %v2420, %v2417
  %v2559 = vpack.c.b16 %v2421, %v2418
  %v2560 = vpack.c.b16 %v2422, %v2419
  %v2561 = vpack.c.b16 %v2426, %v2423
  %v2562 = vpack.c.b16 %v2427, %v2424
  %v2563 = vpack.c.b16 %v2428, %v2425
  %v2564 = vpack.c.b16 %v2432, %v2429
  %v2565 = vpack.c.b16 %v2433, %v2430
  %v2566 = vpack.c.b16 %v2434, %v2431
  %v2567 = vpack.c.b16 %v2438, %v2435
  %v2568 = vpack.c.b16 %v2439, %v2436
  %v2569 = vpack.c.b16 %v2440, %v2437
  %v2570 = vpack.c.b16 %v2444, %v2441
  %v2571 = vpack.c.b16 %v2445, %v2442
  %v2572 = vpack.c.b16 %v2446, %v2443
  %v2573 = vpack.c.b16 %v2450, %v2447
  %v2574 = vpack.c.b16 %v2451, %v2448
  %v2575 = vpack.c.b16 %v2452, %v2449
  %v2576 = vpack.c.b16 %v2456, %v2453
  %v2577 = vpack.c.b16 %v2457, %v2454
  %v2578 = vpack.c.b16 %v2458, %v2455
  %v2579 = vpack.c.b16 %v2462, %v2459
  %v2580 = vpack.c.b16 %v2463, %v2460
  %v2581 = vpack.c.b16 %v2464, %v2461
  %v2582 = vpack.c.b16 %v2468, %v2465
  %v2583 = vpack.c.b16 %v2469, %v2466
  %v2584 = vpack.c.b16 %v2470, %v2467
  %v2585 = vpack.c.b16 %v2474, %v2471
  %v2586 = vpack.c.b16 %v2475, %v2472
  %v2587 = vpack.c.b16 %v2476, %v2473
  %v2588 = vpack.c.b16 %v2480, %v2477
  %v2589 = vpack.c.b16 %v2481, %v2478
  %v2590 = vpack.c.b16 %v2482, %v2479
  %v2591 = vpack.c.b16 %v2486, %v2483
  %v2592 = vpack.c.b16 %v2487, %v2484
  %v2593 = vpack.c.b16 %v2488, %v2485
  %v2594 = vpack.c.b16 %v2492, %v2489
  %v2595 = vpack.c.b16 %v2493, %v2490
  %v2596 = vpack.c.b16 %v2494, %v2491
  %v2597 = vpack.c.b16 %v2498, %v2495
  %v2598 = vpack.c.b16 %v2499, %v2496
  %v2599 = vpack.c.b16 %v2500, %v2497
  %v2600 = vpack.c.b16 %v2504, %v2501
  %v2601 = vpack.c.b16 %v2505, %v2502
  %v2602 = vpack.c.b16 %v2506, %v2503
  %v2603 = vpack.c.b16 %v2510, %v2507
  %v2604 = vpack.c.b16 %v2511, %v2508
  %v2605 = vpack.c.b16 %v2512, %v2509
  %v2606 = vpack.c.b16 %v2516, %v2513
  %v2607 = vpack.c.b16 %v2517, %v2514
  %v2608 = vpack.c.b16 %v2518, %v2515
  %v2609 = vpack.c.b16 %v2522, %v2519
  %v2610 = vpack.c.b16 %v2523, %v2520
  %v2611 = vpack.c.b16 %v2524, %v2521
  %v2612 = vpack.c.b16 %v2528, %v2525
  %v2613 = vpack.c.b16 %v2529, %v2526
  %v2614 = vpack.c.b16 %v2530, %v2527
  %v2615 = vpack.c.b16 %v2534, %v2531
  %v2616 = vpack.c.b16 %v2535, %v2532
  %v2617 = vpack.c.b16 %v2536, %v2533
  %v2618 = vpack.c.b16 %v2540, %v2537
  %v2619 = vpack.c.b16 %v2541, %v2538
  %v2620 = vpack.c.b16 %v2542, %v2539
  %vm2699 = vcmask 261120
  %v2701 = vsel %vm2699, %v2169, 0
  %v2704 = vsel %vm2699, %v2173, 0
  %v2707 = vsel %vm2699, %v2177, 0
  %2709 = vmatpush.bf16.msra.mxu0 %v2564
  %2710 = vmatpush.bf16.msra.mxu0 %v2561
  %2711 = vmatpush.bf16.msra.mxu0 %v2558
  %2712 = vmatpush.bf16.msra.mxu0 %v2555
  %2713 = vmatpush.bf16.msra.mxu0 %v2552
  %2714 = vmatpush.bf16.msra.mxu0 %v2549
  %2715 = vmatpush.bf16.msra.mxu0 %v2546
  %2716 = vmatpush.bf16.msra.mxu0 %v2543
  %2717 = vmatmul.bf16.gmra.mxu0 %v2166
  %v2718 = vpop.f32.mrf.mxu0
  %v2719 = vadd.f32 0.0, %v2718
  %v2720 = vpop.f32.mrf.mxu0
  %v2721 = vadd.f32 0.0, %v2720
  %2722 = vmatmul.bf16.gmra.mxu0 %v2170
  %v2723 = vpop.f32.mrf.mxu0
  %v2724 = vadd.f32 0.0, %v2723
  %v2725 = vpop.f32.mrf.mxu0
  %v2726 = vadd.f32 0.0, %v2725
  %2727 = vmatmul.bf16.gmra.mxu0 %v2174
  %v2728 = vpop.f32.mrf.mxu0
  %v2729 = vadd.f32 0.0, %v2728
  %v2730 = vpop.f32.mrf.mxu0
  %2731 = vdwg.mxu0
  %2732 = vmatpush.bf16.msra.mxu0 %v2588
  %2733 = vmatpush.bf16.msra.mxu0 %v2585
  %2734 = vmatpush.bf16.msra.mxu0 %v2582
  %2735 = vmatpush.bf16.msra.mxu0 %v2579
  %2736 = vmatpush.bf16.msra.mxu0 %v2576
  %2737 = vmatpush.bf16.msra.mxu0 %v2573
  %2738 = vmatpush.bf16.msra.mxu0 %v2570
  %2739 = vmatpush.bf16.msra.mxu0 %v2567
  %2740 = vmatmul.bf16.gmra.mxu0 %v2167
  %v2741 = vpop.f32.mrf.mxu0
  %v2742 = vadd.f32 %v2719, %v2741
  %v2743 = vpop.f32.mrf.mxu0
  %v2744 = vadd.f32 %v2721, %v2743
  %2745 = vmatmul.bf16.gmra.mxu0 %v2171
  %v2746 = vpop.f32.mrf.mxu0
  %v2747 = vadd.f32 %v2724, %v2746
  %v2748 = vpop.f32.mrf.mxu0
  %v2749 = vadd.f32 %v2726, %v2748
  %2750 = vmatmul.bf16.gmra.mxu0 %v2175
  %v2751 = vpop.f32.mrf.mxu0
  %v2752 = vadd.f32 %v2729, %v2751
  %v2753 = vpop.f32.mrf.mxu0
  %2754 = vdwg.mxu0
  %2755 = vmatpush.bf16.msra.mxu0 %v2612
  %2756 = vmatpush.bf16.msra.mxu0 %v2609
  %2757 = vmatpush.bf16.msra.mxu0 %v2606
  %2758 = vmatpush.bf16.msra.mxu0 %v2603
  %2759 = vmatpush.bf16.msra.mxu0 %v2600
  %2760 = vmatpush.bf16.msra.mxu0 %v2597
  %2761 = vmatpush.bf16.msra.mxu0 %v2594
  %2762 = vmatpush.bf16.msra.mxu0 %v2591
  %2763 = vmatmul.bf16.gmra.mxu0 %v2168
  %v2764 = vpop.f32.mrf.mxu0
  %v2765 = vadd.f32 %v2742, %v2764
  %v2766 = vpop.f32.mrf.mxu0
  %v2767 = vadd.f32 %v2744, %v2766
  %2768 = vmatmul.bf16.gmra.mxu0 %v2172
  %v2769 = vpop.f32.mrf.mxu0
  %v2770 = vadd.f32 %v2747, %v2769
  %v2771 = vpop.f32.mrf.mxu0
  %v2772 = vadd.f32 %v2749, %v2771
  %2773 = vmatmul.bf16.gmra.mxu0 %v2176
  %v2774 = vpop.f32.mrf.mxu0
  %v2775 = vadd.f32 %v2752, %v2774
  %v2776 = vpop.f32.mrf.mxu0
  %2777 = vdwg.mxu0
  %2778 = vmatpush.bf16.msra.mxu0 0
  %2779 = vmatpush.bf16.msra.mxu0 0
  %2780 = vmatpush.bf16.msra.mxu0 0
  %2781 = vmatpush.bf16.msra.mxu0 0
  %2782 = vmatpush.bf16.msra.mxu0 0
  %2783 = vmatpush.bf16.msra.mxu0 0
  %2784 = vmatpush.bf16.msra.mxu0 %v2618
  %2785 = vmatpush.bf16.msra.mxu0 %v2615
  %2786 = vmatmul.bf16.gmra.mxu0 %v2701
  %v2787 = vpop.f32.mrf.mxu0
  %v2788 = vadd.f32 %v2765, %v2787
  %v2789 = vpop.f32.mrf.mxu0
  %v2790 = vadd.f32 %v2767, %v2789
  %2791 = vmatmul.bf16.gmra.mxu0 %v2704
  %v2792 = vpop.f32.mrf.mxu0
  %v2793 = vadd.f32 %v2770, %v2792
  %v2794 = vpop.f32.mrf.mxu0
  %v2795 = vadd.f32 %v2772, %v2794
  %2796 = vmatmul.bf16.gmra.mxu0 %v2707
  %v2797 = vpop.f32.mrf.mxu0
  %v2798 = vadd.f32 %v2775, %v2797
  %v2799 = vpop.f32.mrf.mxu0
  %2800 = vdwg.mxu0
  %2801 = vmatpush.bf16.msra.mxu0 %v2565
  %2802 = vmatpush.bf16.msra.mxu0 %v2562
  %2803 = vmatpush.bf16.msra.mxu0 %v2559
  %2804 = vmatpush.bf16.msra.mxu0 %v2556
  %2805 = vmatpush.bf16.msra.mxu0 %v2553
  %2806 = vmatpush.bf16.msra.mxu0 %v2550
  %2807 = vmatpush.bf16.msra.mxu0 %v2547
  %2808 = vmatpush.bf16.msra.mxu0 %v2544
  %2809 = vmatmul.bf16.gmra.mxu0 %v2166
  %v2810 = vpop.f32.mrf.mxu0
  %v2811 = vadd.f32 0.0, %v2810
  %v2812 = vpop.f32.mrf.mxu0
  %v2813 = vadd.f32 0.0, %v2812
  %2814 = vmatmul.bf16.gmra.mxu0 %v2170
  %v2815 = vpop.f32.mrf.mxu0
  %v2816 = vadd.f32 0.0, %v2815
  %v2817 = vpop.f32.mrf.mxu0
  %v2818 = vadd.f32 0.0, %v2817
  %2819 = vmatmul.bf16.gmra.mxu0 %v2174
  %v2820 = vpop.f32.mrf.mxu0
  %v2821 = vadd.f32 0.0, %v2820
  %v2822 = vpop.f32.mrf.mxu0
  %2823 = vdwg.mxu0
  %2824 = vmatpush.bf16.msra.mxu0 %v2589
  %2825 = vmatpush.bf16.msra.mxu0 %v2586
  %2826 = vmatpush.bf16.msra.mxu0 %v2583
  %2827 = vmatpush.bf16.msra.mxu0 %v2580
  %2828 = vmatpush.bf16.msra.mxu0 %v2577
  %2829 = vmatpush.bf16.msra.mxu0 %v2574
  %2830 = vmatpush.bf16.msra.mxu0 %v2571
  %2831 = vmatpush.bf16.msra.mxu0 %v2568
  %2832 = vmatmul.bf16.gmra.mxu0 %v2167
  %v2833 = vpop.f32.mrf.mxu0
  %v2834 = vadd.f32 %v2811, %v2833
  %v2835 = vpop.f32.mrf.mxu0
  %v2836 = vadd.f32 %v2813, %v2835
  %2837 = vmatmul.bf16.gmra.mxu0 %v2171
  %v2838 = vpop.f32.mrf.mxu0
  %v2839 = vadd.f32 %v2816, %v2838
  %v2840 = vpop.f32.mrf.mxu0
  %v2841 = vadd.f32 %v2818, %v2840
  %2842 = vmatmul.bf16.gmra.mxu0 %v2175
  %v2843 = vpop.f32.mrf.mxu0
  %v2844 = vadd.f32 %v2821, %v2843
  %v2845 = vpop.f32.mrf.mxu0
  %2846 = vdwg.mxu0
  %2847 = vmatpush.bf16.msra.mxu0 %v2613
  %2848 = vmatpush.bf16.msra.mxu0 %v2610
  %2849 = vmatpush.bf16.msra.mxu0 %v2607
  %2850 = vmatpush.bf16.msra.mxu0 %v2604
  %2851 = vmatpush.bf16.msra.mxu0 %v2601
  %2852 = vmatpush.bf16.msra.mxu0 %v2598
  %2853 = vmatpush.bf16.msra.mxu0 %v2595
  %2854 = vmatpush.bf16.msra.mxu0 %v2592
  %2855 = vmatmul.bf16.gmra.mxu0 %v2168
  %v2856 = vpop.f32.mrf.mxu0
  %v2857 = vadd.f32 %v2834, %v2856
  %v2858 = vpop.f32.mrf.mxu0
  %v2859 = vadd.f32 %v2836, %v2858
  %2860 = vmatmul.bf16.gmra.mxu0 %v2172
  %v2861 = vpop.f32.mrf.mxu0
  %v2862 = vadd.f32 %v2839, %v2861
  %v2863 = vpop.f32.mrf.mxu0
  %v2864 = vadd.f32 %v2841, %v2863
  %2865 = vmatmul.bf16.gmra.mxu0 %v2176
  %v2866 = vpop.f32.mrf.mxu0
  %v2867 = vadd.f32 %v2844, %v2866
  %v2868 = vpop.f32.mrf.mxu0
  %2869 = vdwg.mxu0
  %2870 = vmatpush.bf16.msra.mxu0 0
  %2871 = vmatpush.bf16.msra.mxu0 0
  %2872 = vmatpush.bf16.msra.mxu0 0
  %2873 = vmatpush.bf16.msra.mxu0 0
  %2874 = vmatpush.bf16.msra.mxu0 0
  %2875 = vmatpush.bf16.msra.mxu0 0
  %2876 = vmatpush.bf16.msra.mxu0 %v2619
  %2877 = vmatpush.bf16.msra.mxu0 %v2616
  %2878 = vmatmul.bf16.gmra.mxu0 %v2701
  %v2879 = vpop.f32.mrf.mxu0
  %v2880 = vadd.f32 %v2857, %v2879
  %v2881 = vpop.f32.mrf.mxu0
  %v2882 = vadd.f32 %v2859, %v2881
  %2883 = vmatmul.bf16.gmra.mxu0 %v2704
  %v2884 = vpop.f32.mrf.mxu0
  %v2885 = vadd.f32 %v2862, %v2884
  %v2886 = vpop.f32.mrf.mxu0
  %v2887 = vadd.f32 %v2864, %v2886
  %2888 = vmatmul.bf16.gmra.mxu0 %v2707
  %v2889 = vpop.f32.mrf.mxu0
  %v2890 = vadd.f32 %v2867, %v2889
  %v2891 = vpop.f32.mrf.mxu0
  %2892 = vdwg.mxu0
  %2893 = vmatpush.bf16.msra.mxu0 %v2566
  %2894 = vmatpush.bf16.msra.mxu0 %v2563
  %2895 = vmatpush.bf16.msra.mxu0 %v2560
  %2896 = vmatpush.bf16.msra.mxu0 %v2557
  %2897 = vmatpush.bf16.msra.mxu0 %v2554
  %2898 = vmatpush.bf16.msra.mxu0 %v2551
  %2899 = vmatpush.bf16.msra.mxu0 %v2548
  %2900 = vmatpush.bf16.msra.mxu0 %v2545
  %2901 = vmatmul.bf16.gmra.mxu0 %v2166
  %v2902 = vpop.f32.mrf.mxu0
  %v2903 = vadd.f32 0.0, %v2902
  %v2904 = vpop.f32.mrf.mxu0
  %v2905 = vadd.f32 0.0, %v2904
  %2906 = vmatmul.bf16.gmra.mxu0 %v2170
  %v2907 = vpop.f32.mrf.mxu0
  %v2908 = vadd.f32 0.0, %v2907
  %v2909 = vpop.f32.mrf.mxu0
  %v2910 = vadd.f32 0.0, %v2909
  %2911 = vmatmul.bf16.gmra.mxu0 %v2174
  %v2912 = vpop.f32.mrf.mxu0
  %v2913 = vadd.f32 0.0, %v2912
  %v2914 = vpop.f32.mrf.mxu0
  %2915 = vdwg.mxu0
  %2916 = vmatpush.bf16.msra.mxu0 %v2590
  %2917 = vmatpush.bf16.msra.mxu0 %v2587
  %2918 = vmatpush.bf16.msra.mxu0 %v2584
  %2919 = vmatpush.bf16.msra.mxu0 %v2581
  %2920 = vmatpush.bf16.msra.mxu0 %v2578
  %2921 = vmatpush.bf16.msra.mxu0 %v2575
  %2922 = vmatpush.bf16.msra.mxu0 %v2572
  %2923 = vmatpush.bf16.msra.mxu0 %v2569
  %2924 = vmatmul.bf16.gmra.mxu0 %v2167
  %v2925 = vpop.f32.mrf.mxu0
  %v2926 = vadd.f32 %v2903, %v2925
  %v2927 = vpop.f32.mrf.mxu0
  %v2928 = vadd.f32 %v2905, %v2927
  %2929 = vmatmul.bf16.gmra.mxu0 %v2171
  %v2930 = vpop.f32.mrf.mxu0
  %v2931 = vadd.f32 %v2908, %v2930
  %v2932 = vpop.f32.mrf.mxu0
  %v2933 = vadd.f32 %v2910, %v2932
  %2934 = vmatmul.bf16.gmra.mxu0 %v2175
  %v2935 = vpop.f32.mrf.mxu0
  %v2936 = vadd.f32 %v2913, %v2935
  %v2937 = vpop.f32.mrf.mxu0
  %2938 = vdwg.mxu0
  %2939 = vmatpush.bf16.msra.mxu0 %v2614
  %2940 = vmatpush.bf16.msra.mxu0 %v2611
  %2941 = vmatpush.bf16.msra.mxu0 %v2608
  %2942 = vmatpush.bf16.msra.mxu0 %v2605
  %2943 = vmatpush.bf16.msra.mxu0 %v2602
  %2944 = vmatpush.bf16.msra.mxu0 %v2599
  %2945 = vmatpush.bf16.msra.mxu0 %v2596
  %2946 = vmatpush.bf16.msra.mxu0 %v2593
  %2947 = vmatmul.bf16.gmra.mxu0 %v2168
  %v2948 = vpop.f32.mrf.mxu0
  %v2949 = vadd.f32 %v2926, %v2948
  %v2950 = vpop.f32.mrf.mxu0
  %v2951 = vadd.f32 %v2928, %v2950
  %2952 = vmatmul.bf16.gmra.mxu0 %v2172
  %v2953 = vpop.f32.mrf.mxu0
  %v2954 = vadd.f32 %v2931, %v2953
  %v2955 = vpop.f32.mrf.mxu0
  %v2956 = vadd.f32 %v2933, %v2955
  %2957 = vmatmul.bf16.gmra.mxu0 %v2176
  %v2958 = vpop.f32.mrf.mxu0
  %v2959 = vadd.f32 %v2936, %v2958
  %v2960 = vpop.f32.mrf.mxu0
  %2961 = vdwg.mxu0
  %2962 = vmatpush.bf16.msra.mxu0 0
  %2963 = vmatpush.bf16.msra.mxu0 0
  %2964 = vmatpush.bf16.msra.mxu0 0
  %2965 = vmatpush.bf16.msra.mxu0 0
  %2966 = vmatpush.bf16.msra.mxu0 0
  %2967 = vmatpush.bf16.msra.mxu0 0
  %2968 = vmatpush.bf16.msra.mxu0 %v2620
  %2969 = vmatpush.bf16.msra.mxu0 %v2617
  %2970 = vmatmul.bf16.gmra.mxu0 %v2701
  %v2971 = vpop.f32.mrf.mxu0
  %v2972 = vadd.f32 %v2949, %v2971
  %v2973 = vpop.f32.mrf.mxu0
  %v2974 = vadd.f32 %v2951, %v2973
  %2975 = vmatmul.bf16.gmra.mxu0 %v2704
  %v2976 = vpop.f32.mrf.mxu0
  %v2977 = vadd.f32 %v2954, %v2976
  %v2978 = vpop.f32.mrf.mxu0
  %v2979 = vadd.f32 %v2956, %v2978
  %2980 = vmatmul.bf16.gmra.mxu0 %v2707
  %v2981 = vpop.f32.mrf.mxu0
  %v2982 = vadd.f32 %v2959, %v2981
  %v2983 = vpop.f32.mrf.mxu0
  %2984 = vdwg.mxu0
  %v3089 = vunpack.c.l.b16 %v1942
  %v3090 = vunpack.c.h.b16 %v1942
  %v3091 = vunpack.c.l.b16 %v1943
  %v3092 = vunpack.c.l.b16 %v1944
  %v3093 = vunpack.c.h.b16 %v1944
  %v3094 = vunpack.c.l.b16 %v1945
  %v3095 = vunpack.c.l.b16 %v1946
  %v3096 = vunpack.c.h.b16 %v1946
  %v3097 = vunpack.c.l.b16 %v1947
  %v3098 = vunpack.c.l.b16 %v1948
  %v3099 = vunpack.c.h.b16 %v1948
  %v3100 = vunpack.c.l.b16 %v1949
  %v3101 = vunpack.c.l.b16 %v1950
  %v3102 = vunpack.c.h.b16 %v1950
  %v3103 = vunpack.c.l.b16 %v1951
  %v3104 = vunpack.c.l.b16 %v1952
  %v3105 = vunpack.c.h.b16 %v1952
  %v3106 = vunpack.c.l.b16 %v1953
  %v3107 = vunpack.c.l.b16 %v1954
  %v3108 = vunpack.c.h.b16 %v1954
  %v3109 = vunpack.c.l.b16 %v1955
  %v3110 = vunpack.c.l.b16 %v1956
  %v3111 = vunpack.c.h.b16 %v1956
  %v3112 = vunpack.c.l.b16 %v1957
  %v3113 = vunpack.c.l.b16 %v1958
  %v3114 = vunpack.c.h.b16 %v1958
  %v3115 = vunpack.c.l.b16 %v1959
  %v3116 = vunpack.c.l.b16 %v1960
  %v3117 = vunpack.c.h.b16 %v1960
  %v3118 = vunpack.c.l.b16 %v1961
  %v3119 = vunpack.c.l.b16 %v1962
  %v3120 = vunpack.c.h.b16 %v1962
  %v3121 = vunpack.c.l.b16 %v1963
  %v3122 = vunpack.c.l.b16 %v1964
  %v3123 = vunpack.c.h.b16 %v1964
  %v3124 = vunpack.c.l.b16 %v1965
  %v3125 = vunpack.c.l.b16 %v1966
  %v3126 = vunpack.c.h.b16 %v1966
  %v3127 = vunpack.c.l.b16 %v1967
  %v3128 = vunpack.c.l.b16 %v1968
  %v3129 = vunpack.c.h.b16 %v1968
  %v3130 = vunpack.c.l.b16 %v1969
  %v3131 = vunpack.c.l.b16 %v1970
  %v3132 = vunpack.c.h.b16 %v1970
  %v3133 = vunpack.c.l.b16 %v1971
  %v3134 = vunpack.c.l.b16 %v1972
  %v3135 = vunpack.c.h.b16 %v1972
  %v3136 = vunpack.c.l.b16 %v1973
  %v3137 = vunpack.c.l.b16 %v1974
  %v3138 = vunpack.c.h.b16 %v1974
  %v3139 = vunpack.c.l.b16 %v1975
  %v3140 = vunpack.c.l.b16 %v1976
  %v3141 = vunpack.c.h.b16 %v1976
  %v3142 = vunpack.c.l.b16 %v1977
  %v3143 = vunpack.c.l.b16 %v1978
  %v3144 = vunpack.c.h.b16 %v1978
  %v3145 = vunpack.c.l.b16 %v1979
  %v3146 = vunpack.c.l.b16 %v1980
  %v3147 = vunpack.c.h.b16 %v1980
  %v3148 = vunpack.c.l.b16 %v1981
  %v3149 = vunpack.c.l.b16 %v1982
  %v3150 = vunpack.c.h.b16 %v1982
  %v3151 = vunpack.c.l.b16 %v1983
  %v3152 = vunpack.c.l.b16 %v1984
  %v3153 = vunpack.c.h.b16 %v1984
  %v3154 = vunpack.c.l.b16 %v1985
  %v3155 = vunpack.c.l.b16 %v1986
  %v3156 = vunpack.c.h.b16 %v1986
  %v3157 = vunpack.c.l.b16 %v1987
  %v3158 = vunpack.c.l.b16 %v1988
  %v3159 = vunpack.c.h.b16 %v1988
  %v3160 = vunpack.c.l.b16 %v1989
  %v3161 = vunpack.c.l.b16 %v1990
  %v3162 = vunpack.c.h.b16 %v1990
  %v3163 = vunpack.c.l.b16 %v1991
  %v3164 = vunpack.c.l.b16 %v1992
  %v3165 = vunpack.c.h.b16 %v1992
  %v3166 = vunpack.c.l.b16 %v1993
  %v3167 = vunpack.c.l.b16 %v1994
  %v3168 = vunpack.c.h.b16 %v1994
  %v3169 = vunpack.c.l.b16 %v1995
  %v3170 = vunpack.c.l.b16 %v1996
  %v3171 = vunpack.c.h.b16 %v1996
  %v3172 = vunpack.c.l.b16 %v1997
  %v3173 = vunpack.c.l.b16 %v1998
  %v3174 = vunpack.c.h.b16 %v1998
  %v3175 = vunpack.c.l.b16 %v1999
  %v3176 = vunpack.c.l.b16 %v2000
  %v3177 = vunpack.c.h.b16 %v2000
  %v3178 = vunpack.c.l.b16 %v2001
  %v3179 = vunpack.c.l.b16 %v2002
  %v3180 = vunpack.c.h.b16 %v2002
  %v3181 = vunpack.c.l.b16 %v2003
  %v3182 = vunpack.c.l.b16 %v2004
  %v3183 = vunpack.c.h.b16 %v2004
  %v3184 = vunpack.c.l.b16 %v2005
  %v3185 = vunpack.c.l.b16 %v2006
  %v3186 = vunpack.c.h.b16 %v2006
  %v3187 = vunpack.c.l.b16 %v2007
  %v3188 = vunpack.c.l.b16 %v2008
  %v3189 = vunpack.c.h.b16 %v2008
  %v3190 = vunpack.c.l.b16 %v2009
  %v3191 = vunpack.c.l.b16 %v2010
  %v3192 = vunpack.c.h.b16 %v2010
  %v3193 = vunpack.c.l.b16 %v2011
  %v3194 = vunpack.c.l.b16 %v2012
  %v3195 = vunpack.c.h.b16 %v2012
  %v3196 = vunpack.c.l.b16 %v2013
  %v3197 = vunpack.c.l.b16 %v2014
  %v3198 = vunpack.c.h.b16 %v2014
  %v3199 = vunpack.c.l.b16 %v2015
  %v3200 = vunpack.c.l.b16 %v2016
  %v3201 = vunpack.c.h.b16 %v2016
  %v3202 = vunpack.c.l.b16 %v2017
  %v3203 = vunpack.c.l.b16 %v2018
  %v3204 = vunpack.c.h.b16 %v2018
  %v3205 = vunpack.c.l.b16 %v2019
  %v3206 = vunpack.c.l.b16 %v2020
  %v3207 = vunpack.c.h.b16 %v2020
  %v3208 = vunpack.c.l.b16 %v2021
  %v3209 = vunpack.c.l.b16 %v2022
  %v3210 = vunpack.c.h.b16 %v2022
  %v3211 = vunpack.c.l.b16 %v2023
  %v3212 = vunpack.c.l.b16 %v2024
  %v3213 = vunpack.c.h.b16 %v2024
  %v3214 = vunpack.c.l.b16 %v2025
  %v3215 = vunpack.c.l.b16 %v2026
  %v3216 = vunpack.c.h.b16 %v2026
  %v3217 = vunpack.c.l.b16 %v2027
  %v3218 = vunpack.c.l.b16 %v2028
  %v3219 = vunpack.c.h.b16 %v2028
  %v3220 = vunpack.c.l.b16 %v2029
  %v3221 = vunpack.c.l.b16 %v2030
  %v3222 = vunpack.c.h.b16 %v2030
  %v3223 = vunpack.c.l.b16 %v2031
  %v3224 = vunpack.c.l.b16 %v2032
  %v3225 = vunpack.c.h.b16 %v2032
  %v3226 = vunpack.c.l.b16 %v2033
  %v3227 = vunpack.c.l.b16 %v2034
  %v3228 = vunpack.c.h.b16 %v2034
  %v3229 = vunpack.c.l.b16 %v2035
  %v3230 = vunpack.c.l.b16 %v2036
  %v3231 = vunpack.c.h.b16 %v2036
  %v3232 = vunpack.c.l.b16 %v2037
  %v3233 = vunpack.c.l.b16 %v2038
  %v3234 = vunpack.c.h.b16 %v2038
  %v3235 = vunpack.c.l.b16 %v2039
  %v3236 = vunpack.c.l.b16 %v2040
  %v3237 = vunpack.c.h.b16 %v2040
  %v3238 = vunpack.c.l.b16 %v2041
  %v3239 = vunpack.c.l.b16 %v2042
  %v3240 = vunpack.c.h.b16 %v2042
  %v3241 = vunpack.c.l.b16 %v2043
  %v3242 = vunpack.c.l.b16 %v2044
  %v3243 = vunpack.c.h.b16 %v2044
  %v3244 = vunpack.c.l.b16 %v2045
  %v3245 = vpack.c.b16 %v3092, %v3089
  %v3246 = vpack.c.b16 %v3093, %v3090
  %v3247 = vpack.c.b16 %v3094, %v3091
  %v3248 = vpack.c.b16 %v3098, %v3095
  %v3249 = vpack.c.b16 %v3099, %v3096
  %v3250 = vpack.c.b16 %v3100, %v3097
  %v3251 = vpack.c.b16 %v3104, %v3101
  %v3252 = vpack.c.b16 %v3105, %v3102
  %v3253 = vpack.c.b16 %v3106, %v3103
  %v3254 = vpack.c.b16 %v3110, %v3107
  %v3255 = vpack.c.b16 %v3111, %v3108
  %v3256 = vpack.c.b16 %v3112, %v3109
  %v3257 = vpack.c.b16 %v3116, %v3113
  %v3258 = vpack.c.b16 %v3117, %v3114
  %v3259 = vpack.c.b16 %v3118, %v3115
  %v3260 = vpack.c.b16 %v3122, %v3119
  %v3261 = vpack.c.b16 %v3123, %v3120
  %v3262 = vpack.c.b16 %v3124, %v3121
  %v3263 = vpack.c.b16 %v3128, %v3125
  %v3264 = vpack.c.b16 %v3129, %v3126
  %v3265 = vpack.c.b16 %v3130, %v3127
  %v3266 = vpack.c.b16 %v3134, %v3131
  %v3267 = vpack.c.b16 %v3135, %v3132
  %v3268 = vpack.c.b16 %v3136, %v3133
  %v3269 = vpack.c.b16 %v3140, %v3137
  %v3270 = vpack.c.b16 %v3141, %v3138
  %v3271 = vpack.c.b16 %v3142, %v3139
  %v3272 = vpack.c.b16 %v3146, %v3143
  %v3273 = vpack.c.b16 %v3147, %v3144
  %v3274 = vpack.c.b16 %v3148, %v3145
  %v3275 = vpack.c.b16 %v3152, %v3149
  %v3276 = vpack.c.b16 %v3153, %v3150
  %v3277 = vpack.c.b16 %v3154, %v3151
  %v3278 = vpack.c.b16 %v3158, %v3155
  %v3279 = vpack.c.b16 %v3159, %v3156
  %v3280 = vpack.c.b16 %v3160, %v3157
  %v3281 = vpack.c.b16 %v3164, %v3161
  %v3282 = vpack.c.b16 %v3165, %v3162
  %v3283 = vpack.c.b16 %v3166, %v3163
  %v3284 = vpack.c.b16 %v3170, %v3167
  %v3285 = vpack.c.b16 %v3171, %v3168
  %v3286 = vpack.c.b16 %v3172, %v3169
  %v3287 = vpack.c.b16 %v3176, %v3173
  %v3288 = vpack.c.b16 %v3177, %v3174
  %v3289 = vpack.c.b16 %v3178, %v3175
  %v3290 = vpack.c.b16 %v3182, %v3179
  %v3291 = vpack.c.b16 %v3183, %v3180
  %v3292 = vpack.c.b16 %v3184, %v3181
  %v3293 = vpack.c.b16 %v3188, %v3185
  %v3294 = vpack.c.b16 %v3189, %v3186
  %v3295 = vpack.c.b16 %v3190, %v3187
  %v3296 = vpack.c.b16 %v3194, %v3191
  %v3297 = vpack.c.b16 %v3195, %v3192
  %v3298 = vpack.c.b16 %v3196, %v3193
  %v3299 = vpack.c.b16 %v3200, %v3197
  %v3300 = vpack.c.b16 %v3201, %v3198
  %v3301 = vpack.c.b16 %v3202, %v3199
  %v3302 = vpack.c.b16 %v3206, %v3203
  %v3303 = vpack.c.b16 %v3207, %v3204
  %v3304 = vpack.c.b16 %v3208, %v3205
  %v3305 = vpack.c.b16 %v3212, %v3209
  %v3306 = vpack.c.b16 %v3213, %v3210
  %v3307 = vpack.c.b16 %v3214, %v3211
  %v3308 = vpack.c.b16 %v3218, %v3215
  %v3309 = vpack.c.b16 %v3219, %v3216
  %v3310 = vpack.c.b16 %v3220, %v3217
  %v3311 = vpack.c.b16 %v3224, %v3221
  %v3312 = vpack.c.b16 %v3225, %v3222
  %v3313 = vpack.c.b16 %v3226, %v3223
  %v3314 = vpack.c.b16 %v3230, %v3227
  %v3315 = vpack.c.b16 %v3231, %v3228
  %v3316 = vpack.c.b16 %v3232, %v3229
  %v3317 = vpack.c.b16 %v3236, %v3233
  %v3318 = vpack.c.b16 %v3237, %v3234
  %v3319 = vpack.c.b16 %v3238, %v3235
  %v3320 = vpack.c.b16 %v3242, %v3239
  %v3321 = vpack.c.b16 %v3243, %v3240
  %v3322 = vpack.c.b16 %v3244, %v3241
  %v3402 = vsel %vm2699, %v1933, 0
  %v3405 = vsel %vm2699, %v1937, 0
  %v3408 = vsel %vm2699, %v1941, 0
  %3410 = vmatpush.bf16.msra.mxu0 %v3266
  %3411 = vmatpush.bf16.msra.mxu0 %v3263
  %3412 = vmatpush.bf16.msra.mxu0 %v3260
  %3413 = vmatpush.bf16.msra.mxu0 %v3257
  %3414 = vmatpush.bf16.msra.mxu0 %v3254
  %3415 = vmatpush.bf16.msra.mxu0 %v3251
  %3416 = vmatpush.bf16.msra.mxu0 %v3248
  %3417 = vmatpush.bf16.msra.mxu0 %v3245
  %3418 = vmatmul.bf16.gmra.mxu0 %v1930
  %v3419 = vpop.f32.mrf.mxu0
  %v3420 = vadd.f32 %v2788, %v3419
  %v3421 = vpop.f32.mrf.mxu0
  %v3422 = vadd.f32 %v2790, %v3421
  %3423 = vmatmul.bf16.gmra.mxu0 %v1934
  %v3424 = vpop.f32.mrf.mxu0
  %v3425 = vadd.f32 %v2793, %v3424
  %v3426 = vpop.f32.mrf.mxu0
  %v3427 = vadd.f32 %v2795, %v3426
  %3428 = vmatmul.bf16.gmra.mxu0 %v1938
  %v3429 = vpop.f32.mrf.mxu0
  %v3430 = vadd.f32 %v2798, %v3429
  %v3431 = vpop.f32.mrf.mxu0
  %3432 = vdwg.mxu0
  %3433 = vmatpush.bf16.msra.mxu0 %v3290
  %3434 = vmatpush.bf16.msra.mxu0 %v3287
  %3435 = vmatpush.bf16.msra.mxu0 %v3284
  %3436 = vmatpush.bf16.msra.mxu0 %v3281
  %3437 = vmatpush.bf16.msra.mxu0 %v3278
  %3438 = vmatpush.bf16.msra.mxu0 %v3275
  %3439 = vmatpush.bf16.msra.mxu0 %v3272
  %3440 = vmatpush.bf16.msra.mxu0 %v3269
  %3441 = vmatmul.bf16.gmra.mxu0 %v1931
  %v3442 = vpop.f32.mrf.mxu0
  %v3443 = vadd.f32 %v3420, %v3442
  %v3444 = vpop.f32.mrf.mxu0
  %v3445 = vadd.f32 %v3422, %v3444
  %3446 = vmatmul.bf16.gmra.mxu0 %v1935
  %v3447 = vpop.f32.mrf.mxu0
  %v3448 = vadd.f32 %v3425, %v3447
  %v3449 = vpop.f32.mrf.mxu0
  %v3450 = vadd.f32 %v3427, %v3449
  %3451 = vmatmul.bf16.gmra.mxu0 %v1939
  %v3452 = vpop.f32.mrf.mxu0
  %v3453 = vadd.f32 %v3430, %v3452
  %v3454 = vpop.f32.mrf.mxu0
  %3455 = vdwg.mxu0
  %3456 = vmatpush.bf16.msra.mxu0 %v3314
  %3457 = vmatpush.bf16.msra.mxu0 %v3311
  %3458 = vmatpush.bf16.msra.mxu0 %v3308
  %3459 = vmatpush.bf16.msra.mxu0 %v3305
  %3460 = vmatpush.bf16.msra.mxu0 %v3302
  %3461 = vmatpush.bf16.msra.mxu0 %v3299
  %3462 = vmatpush.bf16.msra.mxu0 %v3296
  %3463 = vmatpush.bf16.msra.mxu0 %v3293
  %3464 = vmatmul.bf16.gmra.mxu0 %v1932
  %v3465 = vpop.f32.mrf.mxu0
  %v3466 = vadd.f32 %v3443, %v3465
  %v3467 = vpop.f32.mrf.mxu0
  %v3468 = vadd.f32 %v3445, %v3467
  %3469 = vmatmul.bf16.gmra.mxu0 %v1936
  %v3470 = vpop.f32.mrf.mxu0
  %v3471 = vadd.f32 %v3448, %v3470
  %v3472 = vpop.f32.mrf.mxu0
  %v3473 = vadd.f32 %v3450, %v3472
  %3474 = vmatmul.bf16.gmra.mxu0 %v1940
  %v3475 = vpop.f32.mrf.mxu0
  %v3476 = vadd.f32 %v3453, %v3475
  %v3477 = vpop.f32.mrf.mxu0
  %3478 = vdwg.mxu0
  %3479 = vmatpush.bf16.msra.mxu0 0
  %3480 = vmatpush.bf16.msra.mxu0 0
  %3481 = vmatpush.bf16.msra.mxu0 0
  %3482 = vmatpush.bf16.msra.mxu0 0
  %3483 = vmatpush.bf16.msra.mxu0 0
  %3484 = vmatpush.bf16.msra.mxu0 0
  %3485 = vmatpush.bf16.msra.mxu0 %v3320
  %3486 = vmatpush.bf16.msra.mxu0 %v3317
  %3487 = vmatmul.bf16.gmra.mxu0 %v3402
  %v3488 = vpop.f32.mrf.mxu0
  %v3489 = vadd.f32 %v3466, %v3488
  %v3490 = vpop.f32.mrf.mxu0
  %v3491 = vadd.f32 %v3468, %v3490
  %3492 = vmatmul.bf16.gmra.mxu0 %v3405
  %v3493 = vpop.f32.mrf.mxu0
  %v3494 = vadd.f32 %v3471, %v3493
  %v3495 = vpop.f32.mrf.mxu0
  %v3496 = vadd.f32 %v3473, %v3495
  %3497 = vmatmul.bf16.gmra.mxu0 %v3408
  %v3498 = vpop.f32.mrf.mxu0
  %v3499 = vadd.f32 %v3476, %v3498
  %v3500 = vpop.f32.mrf.mxu0
  %3501 = vdwg.mxu0
  %3502 = vmatpush.bf16.msra.mxu0 %v3267
  %3503 = vmatpush.bf16.msra.mxu0 %v3264
  %3504 = vmatpush.bf16.msra.mxu0 %v3261
  %3505 = vmatpush.bf16.msra.mxu0 %v3258
  %3506 = vmatpush.bf16.msra.mxu0 %v3255
  %3507 = vmatpush.bf16.msra.mxu0 %v3252
  %3508 = vmatpush.bf16.msra.mxu0 %v3249
  %3509 = vmatpush.bf16.msra.mxu0 %v3246
  %3510 = vmatmul.bf16.gmra.mxu0 %v1930
  %v3511 = vpop.f32.mrf.mxu0
  %v3512 = vadd.f32 %v2880, %v3511
  %v3513 = vpop.f32.mrf.mxu0
  %v3514 = vadd.f32 %v2882, %v3513
  %3515 = vmatmul.bf16.gmra.mxu0 %v1934
  %v3516 = vpop.f32.mrf.mxu0
  %v3517 = vadd.f32 %v2885, %v3516
  %v3518 = vpop.f32.mrf.mxu0
  %v3519 = vadd.f32 %v2887, %v3518
  %3520 = vmatmul.bf16.gmra.mxu0 %v1938
  %v3521 = vpop.f32.mrf.mxu0
  %v3522 = vadd.f32 %v2890, %v3521
  %v3523 = vpop.f32.mrf.mxu0
  %3524 = vdwg.mxu0
  %3525 = vmatpush.bf16.msra.mxu0 %v3291
  %3526 = vmatpush.bf16.msra.mxu0 %v3288
  %3527 = vmatpush.bf16.msra.mxu0 %v3285
  %3528 = vmatpush.bf16.msra.mxu0 %v3282
  %3529 = vmatpush.bf16.msra.mxu0 %v3279
  %3530 = vmatpush.bf16.msra.mxu0 %v3276
  %3531 = vmatpush.bf16.msra.mxu0 %v3273
  %3532 = vmatpush.bf16.msra.mxu0 %v3270
  %3533 = vmatmul.bf16.gmra.mxu0 %v1931
  %v3534 = vpop.f32.mrf.mxu0
  %v3535 = vadd.f32 %v3512, %v3534
  %v3536 = vpop.f32.mrf.mxu0
  %v3537 = vadd.f32 %v3514, %v3536
  %3538 = vmatmul.bf16.gmra.mxu0 %v1935
  %v3539 = vpop.f32.mrf.mxu0
  %v3540 = vadd.f32 %v3517, %v3539
  %v3541 = vpop.f32.mrf.mxu0
  %v3542 = vadd.f32 %v3519, %v3541
  %3543 = vmatmul.bf16.gmra.mxu0 %v1939
  %v3544 = vpop.f32.mrf.mxu0
  %v3545 = vadd.f32 %v3522, %v3544
  %v3546 = vpop.f32.mrf.mxu0
  %3547 = vdwg.mxu0
  %3548 = vmatpush.bf16.msra.mxu0 %v3315
  %3549 = vmatpush.bf16.msra.mxu0 %v3312
  %3550 = vmatpush.bf16.msra.mxu0 %v3309
  %3551 = vmatpush.bf16.msra.mxu0 %v3306
  %3552 = vmatpush.bf16.msra.mxu0 %v3303
  %3553 = vmatpush.bf16.msra.mxu0 %v3300
  %3554 = vmatpush.bf16.msra.mxu0 %v3297
  %3555 = vmatpush.bf16.msra.mxu0 %v3294
  %3556 = vmatmul.bf16.gmra.mxu0 %v1932
  %v3557 = vpop.f32.mrf.mxu0
  %v3558 = vadd.f32 %v3535, %v3557
  %v3559 = vpop.f32.mrf.mxu0
  %v3560 = vadd.f32 %v3537, %v3559
  %3561 = vmatmul.bf16.gmra.mxu0 %v1936
  %v3562 = vpop.f32.mrf.mxu0
  %v3563 = vadd.f32 %v3540, %v3562
  %v3564 = vpop.f32.mrf.mxu0
  %v3565 = vadd.f32 %v3542, %v3564
  %3566 = vmatmul.bf16.gmra.mxu0 %v1940
  %v3567 = vpop.f32.mrf.mxu0
  %v3568 = vadd.f32 %v3545, %v3567
  %v3569 = vpop.f32.mrf.mxu0
  %3570 = vdwg.mxu0
  %3571 = vmatpush.bf16.msra.mxu0 0
  %3572 = vmatpush.bf16.msra.mxu0 0
  %3573 = vmatpush.bf16.msra.mxu0 0
  %3574 = vmatpush.bf16.msra.mxu0 0
  %3575 = vmatpush.bf16.msra.mxu0 0
  %3576 = vmatpush.bf16.msra.mxu0 0
  %3577 = vmatpush.bf16.msra.mxu0 %v3321
  %3578 = vmatpush.bf16.msra.mxu0 %v3318
  %3579 = vmatmul.bf16.gmra.mxu0 %v3402
  %v3580 = vpop.f32.mrf.mxu0
  %v3581 = vadd.f32 %v3558, %v3580
  %v3582 = vpop.f32.mrf.mxu0
  %v3583 = vadd.f32 %v3560, %v3582
  %3584 = vmatmul.bf16.gmra.mxu0 %v3405
  %v3585 = vpop.f32.mrf.mxu0
  %v3586 = vadd.f32 %v3563, %v3585
  %v3587 = vpop.f32.mrf.mxu0
  %v3588 = vadd.f32 %v3565, %v3587
  %3589 = vmatmul.bf16.gmra.mxu0 %v3408
  %v3590 = vpop.f32.mrf.mxu0
  %v3591 = vadd.f32 %v3568, %v3590
  %v3592 = vpop.f32.mrf.mxu0
  %3593 = vdwg.mxu0
  %3594 = vmatpush.bf16.msra.mxu0 %v3268
  %3595 = vmatpush.bf16.msra.mxu0 %v3265
  %3596 = vmatpush.bf16.msra.mxu0 %v3262
  %3597 = vmatpush.bf16.msra.mxu0 %v3259
  %3598 = vmatpush.bf16.msra.mxu0 %v3256
  %3599 = vmatpush.bf16.msra.mxu0 %v3253
  %3600 = vmatpush.bf16.msra.mxu0 %v3250
  %3601 = vmatpush.bf16.msra.mxu0 %v3247
  %3602 = vmatmul.bf16.gmra.mxu0 %v1930
  %v3603 = vpop.f32.mrf.mxu0
  %v3604 = vadd.f32 %v2972, %v3603
  %v3605 = vpop.f32.mrf.mxu0
  %v3606 = vadd.f32 %v2974, %v3605
  %3607 = vmatmul.bf16.gmra.mxu0 %v1934
  %v3608 = vpop.f32.mrf.mxu0
  %v3609 = vadd.f32 %v2977, %v3608
  %v3610 = vpop.f32.mrf.mxu0
  %v3611 = vadd.f32 %v2979, %v3610
  %3612 = vmatmul.bf16.gmra.mxu0 %v1938
  %v3613 = vpop.f32.mrf.mxu0
  %v3614 = vadd.f32 %v2982, %v3613
  %v3615 = vpop.f32.mrf.mxu0
  %3616 = vdwg.mxu0
  %3617 = vmatpush.bf16.msra.mxu0 %v3292
  %3618 = vmatpush.bf16.msra.mxu0 %v3289
  %3619 = vmatpush.bf16.msra.mxu0 %v3286
  %3620 = vmatpush.bf16.msra.mxu0 %v3283
  %3621 = vmatpush.bf16.msra.mxu0 %v3280
  %3622 = vmatpush.bf16.msra.mxu0 %v3277
  %3623 = vmatpush.bf16.msra.mxu0 %v3274
  %3624 = vmatpush.bf16.msra.mxu0 %v3271
  %3625 = vmatmul.bf16.gmra.mxu0 %v1931
  %v3626 = vpop.f32.mrf.mxu0
  %v3627 = vadd.f32 %v3604, %v3626
  %v3628 = vpop.f32.mrf.mxu0
  %v3629 = vadd.f32 %v3606, %v3628
  %3630 = vmatmul.bf16.gmra.mxu0 %v1935
  %v3631 = vpop.f32.mrf.mxu0
  %v3632 = vadd.f32 %v3609, %v3631
  %v3633 = vpop.f32.mrf.mxu0
  %v3634 = vadd.f32 %v3611, %v3633
  %3635 = vmatmul.bf16.gmra.mxu0 %v1939
  %v3636 = vpop.f32.mrf.mxu0
  %v3637 = vadd.f32 %v3614, %v3636
  %v3638 = vpop.f32.mrf.mxu0
  %3639 = vdwg.mxu0
  %3640 = vmatpush.bf16.msra.mxu0 %v3316
  %3641 = vmatpush.bf16.msra.mxu0 %v3313
  %3642 = vmatpush.bf16.msra.mxu0 %v3310
  %3643 = vmatpush.bf16.msra.mxu0 %v3307
  %3644 = vmatpush.bf16.msra.mxu0 %v3304
  %3645 = vmatpush.bf16.msra.mxu0 %v3301
  %3646 = vmatpush.bf16.msra.mxu0 %v3298
  %3647 = vmatpush.bf16.msra.mxu0 %v3295
  %3648 = vmatmul.bf16.gmra.mxu0 %v1932
  %v3649 = vpop.f32.mrf.mxu0
  %v3650 = vadd.f32 %v3627, %v3649
  %v3651 = vpop.f32.mrf.mxu0
  %v3652 = vadd.f32 %v3629, %v3651
  %3653 = vmatmul.bf16.gmra.mxu0 %v1936
  %v3654 = vpop.f32.mrf.mxu0
  %v3655 = vadd.f32 %v3632, %v3654
  %v3656 = vpop.f32.mrf.mxu0
  %v3657 = vadd.f32 %v3634, %v3656
  %3658 = vmatmul.bf16.gmra.mxu0 %v1940
  %v3659 = vpop.f32.mrf.mxu0
  %v3660 = vadd.f32 %v3637, %v3659
  %v3661 = vpop.f32.mrf.mxu0
  %3662 = vdwg.mxu0
  %3663 = vmatpush.bf16.msra.mxu0 0
  %3664 = vmatpush.bf16.msra.mxu0 0
  %3665 = vmatpush.bf16.msra.mxu0 0
  %3666 = vmatpush.bf16.msra.mxu0 0
  %3667 = vmatpush.bf16.msra.mxu0 0
  %3668 = vmatpush.bf16.msra.mxu0 0
  %3669 = vmatpush.bf16.msra.mxu0 %v3322
  %3670 = vmatpush.bf16.msra.mxu0 %v3319
  %3671 = vmatmul.bf16.gmra.mxu0 %v3402
  %v3672 = vpop.f32.mrf.mxu0
  %v3673 = vadd.f32 %v3650, %v3672
  %v3674 = vpop.f32.mrf.mxu0
  %v3675 = vadd.f32 %v3652, %v3674
  %3676 = vmatmul.bf16.gmra.mxu0 %v3405
  %v3677 = vpop.f32.mrf.mxu0
  %v3678 = vadd.f32 %v3655, %v3677
  %v3679 = vpop.f32.mrf.mxu0
  %v3680 = vadd.f32 %v3657, %v3679
  %3681 = vmatmul.bf16.gmra.mxu0 %v3408
  %v3682 = vpop.f32.mrf.mxu0
  %v3683 = vadd.f32 %v3660, %v3682
  %v3684 = vpop.f32.mrf.mxu0
  %3685 = vdwg.mxu0
  %s3686 = scalar_lea.vmem %s3, 40
  %v3687 = vld [vmem:[%s3686] sm:$0xf]
  %v3688 = vld [vmem:[%s3686 + $0x4] sm:$0xf]
  %v3689 = vld [vmem:[%s3686 + $0x8] sm:$0xf]
  %v3690 = vld [vmem:[%s3686 + $0xc] sm:$0xf]
  %v3691 = vld [vmem:[%s3686 + $0x10] sm:$0xf]
  %v3697 = vunpack.c.l.b16 %v3687
  %v3698 = vunpack.c.l.b16 %v3688
  %v3699 = vunpack.c.l.b16 %v3689
  %v3700 = vunpack.c.l.b16 %v3690
  %v3701 = vunpack.c.l.b16 %v3691
  %v3702 = vpack.c.b16 %v3698, %v3697
  %v3703 = vpack.c.b16 %v3700, %v3699
  %v3704 = vpack.c.b16 %v3701, %v3701
  %v3706 = vsel %vm1813, %v3702, 0
  %v3709 = vsel %vm1813, %v3703, 0
  %v3712 = vsel %vm1813, %v3704, 0
  %3714 = vmatpush.bf16.msra.mxu0 0
  %3715 = vmatpush.bf16.msra.mxu0 %v1827
  %3716 = vmatpush.bf16.msra.mxu0 %v1787
  %3717 = vmatpush.bf16.msra.mxu0 %v1783
  %3718 = vmatpush.bf16.msra.mxu0 %v1779
  %3719 = vmatpush.bf16.msra.mxu0 %v1775
  %3720 = vmatpush.bf16.msra.mxu0 %v1771
  %3721 = vmatpush.bf16.msra.mxu0 %v1767
  %3722 = vmatmul.bf16.gmra.mxu0 %v3706
  %v3723 = vpop.f32.mrf.mxu0
  %v3724 = vadd.f32 0.0, %v3723
  %v3725 = vpop.f32.mrf.mxu0
  %v3726 = vadd.f32 0.0, %v3725
  %3727 = vmatmul.bf16.gmra.mxu0 %v3709
  %v3728 = vpop.f32.mrf.mxu0
  %v3729 = vadd.f32 0.0, %v3728
  %v3730 = vpop.f32.mrf.mxu0
  %v3731 = vadd.f32 0.0, %v3730
  %3732 = vmatmul.bf16.gmra.mxu0 %v3712
  %v3733 = vpop.f32.mrf.mxu0
  %v3734 = vadd.f32 0.0, %v3733
  %v3735 = vpop.f32.mrf.mxu0
  %3736 = vdwg.mxu0
  %3737 = vmatpush.bf16.msra.mxu0 0
  %3738 = vmatpush.bf16.msra.mxu0 %v1830
  %3739 = vmatpush.bf16.msra.mxu0 %v1788
  %3740 = vmatpush.bf16.msra.mxu0 %v1784
  %3741 = vmatpush.bf16.msra.mxu0 %v1780
  %3742 = vmatpush.bf16.msra.mxu0 %v1776
  %3743 = vmatpush.bf16.msra.mxu0 %v1772
  %3744 = vmatpush.bf16.msra.mxu0 %v1768
  %3745 = vmatmul.bf16.gmra.mxu0 %v3706
  %v3746 = vpop.f32.mrf.mxu0
  %v3747 = vadd.f32 0.0, %v3746
  %v3748 = vpop.f32.mrf.mxu0
  %v3749 = vadd.f32 0.0, %v3748
  %3750 = vmatmul.bf16.gmra.mxu0 %v3709
  %v3751 = vpop.f32.mrf.mxu0
  %v3752 = vadd.f32 0.0, %v3751
  %v3753 = vpop.f32.mrf.mxu0
  %v3754 = vadd.f32 0.0, %v3753
  %3755 = vmatmul.bf16.gmra.mxu0 %v3712
  %v3756 = vpop.f32.mrf.mxu0
  %v3757 = vadd.f32 0.0, %v3756
  %v3758 = vpop.f32.mrf.mxu0
  %3759 = vdwg.mxu0
  %3760 = vmatpush.bf16.msra.mxu0 0
  %3761 = vmatpush.bf16.msra.mxu0 %v1833
  %3762 = vmatpush.bf16.msra.mxu0 %v1789
  %3763 = vmatpush.bf16.msra.mxu0 %v1785
  %3764 = vmatpush.bf16.msra.mxu0 %v1781
  %3765 = vmatpush.bf16.msra.mxu0 %v1777
  %3766 = vmatpush.bf16.msra.mxu0 %v1773
  %3767 = vmatpush.bf16.msra.mxu0 %v1769
  %3768 = vmatmul.bf16.gmra.mxu0 %v3706
  %v3769 = vpop.f32.mrf.mxu0
  %v3770 = vadd.f32 0.0, %v3769
  %v3771 = vpop.f32.mrf.mxu0
  %v3772 = vadd.f32 0.0, %v3771
  %3773 = vmatmul.bf16.gmra.mxu0 %v3709
  %v3774 = vpop.f32.mrf.mxu0
  %v3775 = vadd.f32 0.0, %v3774
  %v3776 = vpop.f32.mrf.mxu0
  %v3777 = vadd.f32 0.0, %v3776
  %3778 = vmatmul.bf16.gmra.mxu0 %v3712
  %v3779 = vpop.f32.mrf.mxu0
  %v3780 = vadd.f32 0.0, %v3779
  %v3781 = vpop.f32.mrf.mxu0
  %3782 = vdwg.mxu0
  %3783 = vmatpush.bf16.msra.mxu0 0
  %3784 = vmatpush.bf16.msra.mxu0 %v1836
  %3785 = vmatpush.bf16.msra.mxu0 %v1790
  %3786 = vmatpush.bf16.msra.mxu0 %v1786
  %3787 = vmatpush.bf16.msra.mxu0 %v1782
  %3788 = vmatpush.bf16.msra.mxu0 %v1778
  %3789 = vmatpush.bf16.msra.mxu0 %v1774
  %3790 = vmatpush.bf16.msra.mxu0 %v1770
  %3791 = vmatmul.bf16.gmra.mxu0 %v3706
  %v3792 = vpop.f32.mrf.mxu0
  %v3793 = vadd.f32 0.0, %v3792
  %v3794 = vpop.f32.mrf.mxu0
  %v3795 = vadd.f32 0.0, %v3794
  %3796 = vmatmul.bf16.gmra.mxu0 %v3709
  %v3797 = vpop.f32.mrf.mxu0
  %v3798 = vadd.f32 0.0, %v3797
  %v3799 = vpop.f32.mrf.mxu0
  %v3800 = vadd.f32 0.0, %v3799
  %3801 = vmatmul.bf16.gmra.mxu0 %v3712
  %v3802 = vpop.f32.mrf.mxu0
  %v3803 = vadd.f32 0.0, %v3802
  %v3804 = vpop.f32.mrf.mxu0
  %3805 = vdwg.mxu0
  %v3806 = vpack.c.bf16 %v3726, %v3724
  %v3807 = vpack.c.bf16 %v3749, %v3747
  %v3808 = vpack.c.bf16 %v3772, %v3770
  %v3809 = vpack.c.bf16 %v3795, %v3793
  %v3810 = vpack.c.bf16 %v3731, %v3729
  %v3811 = vpack.c.bf16 %v3754, %v3752
  %v3812 = vpack.c.bf16 %v3777, %v3775
  %v3813 = vpack.c.bf16 %v3800, %v3798
  %v3814 = vpack.c.bf16 %v3734, %v3734
  %v3815 = vpack.c.bf16 %v3757, %v3757
  %v3816 = vpack.c.bf16 %v3780, %v3780
  %v3817 = vpack.c.bf16 %v3803, %v3803
  %s3818 = scalar_lea.vmem %s4, 1248
  %v3819 = vld [vmem:[%s3818] sm:$0xff]
  %v3820 = vld [vmem:[%s3818 + $0x8] sm:$0xf]
  %v3821 = vld [vmem:[%s3818 + $0xc] sm:$0xff]
  %v3822 = vld [vmem:[%s3818 + $0x14] sm:$0xf]
  %v3823 = vld [vmem:[%s3818 + $0x18] sm:$0xff]
  %v3824 = vld [vmem:[%s3818 + $0x20] sm:$0xf]
  %v3825 = vld [vmem:[%s3818 + $0x24] sm:$0xff]
  %v3826 = vld [vmem:[%s3818 + $0x2c] sm:$0xf]
  %v3827 = vld [vmem:[%s3818 + $0x30] sm:$0xff]
  %v3828 = vld [vmem:[%s3818 + $0x38] sm:$0xf]
  %v3829 = vld [vmem:[%s3818 + $0x3c] sm:$0xff]
  %v3830 = vld [vmem:[%s3818 + $0x44] sm:$0xf]
  %v3831 = vld [vmem:[%s3818 + $0x48] sm:$0xff]
  %v3832 = vld [vmem:[%s3818 + $0x50] sm:$0xf]
  %v3833 = vld [vmem:[%s3818 + $0x54] sm:$0xff]
  %v3834 = vld [vmem:[%s3818 + $0x5c] sm:$0xf]
  %v3835 = vld [vmem:[%s3818 + $0x60] sm:$0xff]
  %v3836 = vld [vmem:[%s3818 + $0x68] sm:$0xf]
  %v3837 = vld [vmem:[%s3818 + $0x6c] sm:$0xff]
  %v3838 = vld [vmem:[%s3818 + $0x74] sm:$0xf]
  %v3839 = vld [vmem:[%s3818 + $0x78] sm:$0xff]
  %v3840 = vld [vmem:[%s3818 + $0x80] sm:$0xf]
  %v3841 = vld [vmem:[%s3818 + $0x84] sm:$0xff]
  %v3842 = vld [vmem:[%s3818 + $0x8c] sm:$0xf]
  %v3843 = vld [vmem:[%s3818 + $0x90] sm:$0xff]
  %v3844 = vld [vmem:[%s3818 + $0x98] sm:$0xf]
  %v3845 = vld [vmem:[%s3818 + $0x9c] sm:$0xff]
  %v3846 = vld [vmem:[%s3818 + $0xa4] sm:$0xf]
  %v3847 = vld [vmem:[%s3818 + $0xa8] sm:$0xff]
  %v3848 = vld [vmem:[%s3818 + $0xb0] sm:$0xf]
  %v3849 = vld [vmem:[%s3818 + $0xb4] sm:$0xff]
  %v3850 = vld [vmem:[%s3818 + $0xbc] sm:$0xf]
  %v3851 = vld [vmem:[%s3818 + $0xc0] sm:$0xff]
  %v3852 = vld [vmem:[%s3818 + $0xc8] sm:$0xf]
  %v3853 = vld [vmem:[%s3818 + $0xcc] sm:$0xff]
  %v3854 = vld [vmem:[%s3818 + $0xd4] sm:$0xf]
  %v3855 = vld [vmem:[%s3818 + $0xd8] sm:$0xff]
  %v3856 = vld [vmem:[%s3818 + $0xe0] sm:$0xf]
  %v3857 = vld [vmem:[%s3818 + $0xe4] sm:$0xff]
  %v3858 = vld [vmem:[%s3818 + $0xec] sm:$0xf]
  %v3859 = vld [vmem:[%s3818 + $0xf0] sm:$0xff]
  %v3860 = vld [vmem:[%s3818 + $0xf8] sm:$0xf]
  %v3861 = vld [vmem:[%s3818 + $0xfc] sm:$0xff]
  %v3862 = vld [vmem:[%s3818 + $0x104] sm:$0xf]
  %v3863 = vld [vmem:[%s3818 + $0x108] sm:$0xff]
  %v3864 = vld [vmem:[%s3818 + $0x110] sm:$0xf]
  %v3865 = vld [vmem:[%s3818 + $0x114] sm:$0xff]
  %v3866 = vld [vmem:[%s3818 + $0x11c] sm:$0xf]
  %v3867 = vld [vmem:[%s3818 + $0x120] sm:$0xff]
  %v3868 = vld [vmem:[%s3818 + $0x128] sm:$0xf]
  %v3869 = vld [vmem:[%s3818 + $0x12c] sm:$0xff]
  %v3870 = vld [vmem:[%s3818 + $0x134] sm:$0xf]
  %v3871 = vld [vmem:[%s3818 + $0x138] sm:$0xff]
  %v3872 = vld [vmem:[%s3818 + $0x140] sm:$0xf]
  %v3873 = vld [vmem:[%s3818 + $0x144] sm:$0xff]
  %v3874 = vld [vmem:[%s3818 + $0x14c] sm:$0xf]
  %v3875 = vld [vmem:[%s3818 + $0x150] sm:$0xff]
  %v3876 = vld [vmem:[%s3818 + $0x158] sm:$0xf]
  %v3877 = vld [vmem:[%s3818 + $0x15c] sm:$0xff]
  %v3878 = vld [vmem:[%s3818 + $0x164] sm:$0xf]
  %v3879 = vld [vmem:[%s3818 + $0x168] sm:$0xff]
  %v3880 = vld [vmem:[%s3818 + $0x170] sm:$0xf]
  %v3881 = vld [vmem:[%s3818 + $0x174] sm:$0xff]
  %v3882 = vld [vmem:[%s3818 + $0x17c] sm:$0xf]
  %v3883 = vld [vmem:[%s3818 + $0x180] sm:$0xff]
  %v3884 = vld [vmem:[%s3818 + $0x188] sm:$0xf]
  %v3885 = vld [vmem:[%s3818 + $0x18c] sm:$0xff]
  %v3886 = vld [vmem:[%s3818 + $0x194] sm:$0xf]
  %v3887 = vld [vmem:[%s3818 + $0x198] sm:$0xff]
  %v3888 = vld [vmem:[%s3818 + $0x1a0] sm:$0xf]
  %v3889 = vld [vmem:[%s3818 + $0x1a4] sm:$0xff]
  %v3890 = vld [vmem:[%s3818 + $0x1ac] sm:$0xf]
  %v3891 = vld [vmem:[%s3818 + $0x1b0] sm:$0xff]
  %v3892 = vld [vmem:[%s3818 + $0x1b8] sm:$0xf]
  %v3893 = vld [vmem:[%s3818 + $0x1bc] sm:$0xff]
  %v3894 = vld [vmem:[%s3818 + $0x1c4] sm:$0xf]
  %v3895 = vld [vmem:[%s3818 + $0x1c8] sm:$0xff]
  %v3896 = vld [vmem:[%s3818 + $0x1d0] sm:$0xf]
  %v3897 = vld [vmem:[%s3818 + $0x1d4] sm:$0xff]
  %v3898 = vld [vmem:[%s3818 + $0x1dc] sm:$0xf]
  %v3899 = vld [vmem:[%s3818 + $0x1e0] sm:$0xff]
  %v3900 = vld [vmem:[%s3818 + $0x1e8] sm:$0xf]
  %v3901 = vld [vmem:[%s3818 + $0x1ec] sm:$0xff]
  %v3902 = vld [vmem:[%s3818 + $0x1f4] sm:$0xf]
  %v3903 = vld [vmem:[%s3818 + $0x1f8] sm:$0xff]
  %v3904 = vld [vmem:[%s3818 + $0x200] sm:$0xf]
  %v3905 = vld [vmem:[%s3818 + $0x204] sm:$0xff]
  %v3906 = vld [vmem:[%s3818 + $0x20c] sm:$0xf]
  %v3907 = vld [vmem:[%s3818 + $0x210] sm:$0xff]
  %v3908 = vld [vmem:[%s3818 + $0x218] sm:$0xf]
  %v3909 = vld [vmem:[%s3818 + $0x21c] sm:$0xff]
  %v3910 = vld [vmem:[%s3818 + $0x224] sm:$0xf]
  %v3911 = vld [vmem:[%s3818 + $0x228] sm:$0xff]
  %v3912 = vld [vmem:[%s3818 + $0x230] sm:$0xf]
  %v3913 = vld [vmem:[%s3818 + $0x234] sm:$0xff]
  %v3914 = vld [vmem:[%s3818 + $0x23c] sm:$0xf]
  %v3915 = vld [vmem:[%s3818 + $0x240] sm:$0xff]
  %v3916 = vld [vmem:[%s3818 + $0x248] sm:$0xf]
  %v3917 = vld [vmem:[%s3818 + $0x24c] sm:$0xff]
  %v3918 = vld [vmem:[%s3818 + $0x254] sm:$0xf]
  %v3919 = vld [vmem:[%s3818 + $0x258] sm:$0xff]
  %v3920 = vld [vmem:[%s3818 + $0x260] sm:$0xf]
  %v3921 = vld [vmem:[%s3818 + $0x264] sm:$0xff]
  %v3922 = vld [vmem:[%s3818 + $0x26c] sm:$0xf]
  %v4027 = vunpack.c.l.b16 %v3819
  %v4028 = vunpack.c.h.b16 %v3819
  %v4029 = vunpack.c.l.b16 %v3820
  %v4030 = vunpack.c.l.b16 %v3821
  %v4031 = vunpack.c.h.b16 %v3821
  %v4032 = vunpack.c.l.b16 %v3822
  %v4033 = vunpack.c.l.b16 %v3823
  %v4034 = vunpack.c.h.b16 %v3823
  %v4035 = vunpack.c.l.b16 %v3824
  %v4036 = vunpack.c.l.b16 %v3825
  %v4037 = vunpack.c.h.b16 %v3825
  %v4038 = vunpack.c.l.b16 %v3826
  %v4039 = vunpack.c.l.b16 %v3827
  %v4040 = vunpack.c.h.b16 %v3827
  %v4041 = vunpack.c.l.b16 %v3828
  %v4042 = vunpack.c.l.b16 %v3829
  %v4043 = vunpack.c.h.b16 %v3829
  %v4044 = vunpack.c.l.b16 %v3830
  %v4045 = vunpack.c.l.b16 %v3831
  %v4046 = vunpack.c.h.b16 %v3831
  %v4047 = vunpack.c.l.b16 %v3832
  %v4048 = vunpack.c.l.b16 %v3833
  %v4049 = vunpack.c.h.b16 %v3833
  %v4050 = vunpack.c.l.b16 %v3834
  %v4051 = vunpack.c.l.b16 %v3835
  %v4052 = vunpack.c.h.b16 %v3835
  %v4053 = vunpack.c.l.b16 %v3836
  %v4054 = vunpack.c.l.b16 %v3837
  %v4055 = vunpack.c.h.b16 %v3837
  %v4056 = vunpack.c.l.b16 %v3838
  %v4057 = vunpack.c.l.b16 %v3839
  %v4058 = vunpack.c.h.b16 %v3839
  %v4059 = vunpack.c.l.b16 %v3840
  %v4060 = vunpack.c.l.b16 %v3841
  %v4061 = vunpack.c.h.b16 %v3841
  %v4062 = vunpack.c.l.b16 %v3842
  %v4063 = vunpack.c.l.b16 %v3843
  %v4064 = vunpack.c.h.b16 %v3843
  %v4065 = vunpack.c.l.b16 %v3844
  %v4066 = vunpack.c.l.b16 %v3845
  %v4067 = vunpack.c.h.b16 %v3845
  %v4068 = vunpack.c.l.b16 %v3846
  %v4069 = vunpack.c.l.b16 %v3847
  %v4070 = vunpack.c.h.b16 %v3847
  %v4071 = vunpack.c.l.b16 %v3848
  %v4072 = vunpack.c.l.b16 %v3849
  %v4073 = vunpack.c.h.b16 %v3849
  %v4074 = vunpack.c.l.b16 %v3850
  %v4075 = vunpack.c.l.b16 %v3851
  %v4076 = vunpack.c.h.b16 %v3851
  %v4077 = vunpack.c.l.b16 %v3852
  %v4078 = vunpack.c.l.b16 %v3853
  %v4079 = vunpack.c.h.b16 %v3853
  %v4080 = vunpack.c.l.b16 %v3854
  %v4081 = vunpack.c.l.b16 %v3855
  %v4082 = vunpack.c.h.b16 %v3855
  %v4083 = vunpack.c.l.b16 %v3856
  %v4084 = vunpack.c.l.b16 %v3857
  %v4085 = vunpack.c.h.b16 %v3857
  %v4086 = vunpack.c.l.b16 %v3858
  %v4087 = vunpack.c.l.b16 %v3859
  %v4088 = vunpack.c.h.b16 %v3859
  %v4089 = vunpack.c.l.b16 %v3860
  %v4090 = vunpack.c.l.b16 %v3861
  %v4091 = vunpack.c.h.b16 %v3861
  %v4092 = vunpack.c.l.b16 %v3862
  %v4093 = vunpack.c.l.b16 %v3863
  %v4094 = vunpack.c.h.b16 %v3863
  %v4095 = vunpack.c.l.b16 %v3864
  %v4096 = vunpack.c.l.b16 %v3865
  %v4097 = vunpack.c.h.b16 %v3865
  %v4098 = vunpack.c.l.b16 %v3866
  %v4099 = vunpack.c.l.b16 %v3867
  %v4100 = vunpack.c.h.b16 %v3867
  %v4101 = vunpack.c.l.b16 %v3868
  %v4102 = vunpack.c.l.b16 %v3869
  %v4103 = vunpack.c.h.b16 %v3869
  %v4104 = vunpack.c.l.b16 %v3870
  %v4105 = vunpack.c.l.b16 %v3871
  %v4106 = vunpack.c.h.b16 %v3871
  %v4107 = vunpack.c.l.b16 %v3872
  %v4108 = vunpack.c.l.b16 %v3873
  %v4109 = vunpack.c.h.b16 %v3873
  %v4110 = vunpack.c.l.b16 %v3874
  %v4111 = vunpack.c.l.b16 %v3875
  %v4112 = vunpack.c.h.b16 %v3875
  %v4113 = vunpack.c.l.b16 %v3876
  %v4114 = vunpack.c.l.b16 %v3877
  %v4115 = vunpack.c.h.b16 %v3877
  %v4116 = vunpack.c.l.b16 %v3878
  %v4117 = vunpack.c.l.b16 %v3879
  %v4118 = vunpack.c.h.b16 %v3879
  %v4119 = vunpack.c.l.b16 %v3880
  %v4120 = vunpack.c.l.b16 %v3881
  %v4121 = vunpack.c.h.b16 %v3881
  %v4122 = vunpack.c.l.b16 %v3882
  %v4123 = vunpack.c.l.b16 %v3883
  %v4124 = vunpack.c.h.b16 %v3883
  %v4125 = vunpack.c.l.b16 %v3884
  %v4126 = vunpack.c.l.b16 %v3885
  %v4127 = vunpack.c.h.b16 %v3885
  %v4128 = vunpack.c.l.b16 %v3886
  %v4129 = vunpack.c.l.b16 %v3887
  %v4130 = vunpack.c.h.b16 %v3887
  %v4131 = vunpack.c.l.b16 %v3888
  %v4132 = vunpack.c.l.b16 %v3889
  %v4133 = vunpack.c.h.b16 %v3889
  %v4134 = vunpack.c.l.b16 %v3890
  %v4135 = vunpack.c.l.b16 %v3891
  %v4136 = vunpack.c.h.b16 %v3891
  %v4137 = vunpack.c.l.b16 %v3892
  %v4138 = vunpack.c.l.b16 %v3893
  %v4139 = vunpack.c.h.b16 %v3893
  %v4140 = vunpack.c.l.b16 %v3894
  %v4141 = vunpack.c.l.b16 %v3895
  %v4142 = vunpack.c.h.b16 %v3895
  %v4143 = vunpack.c.l.b16 %v3896
  %v4144 = vunpack.c.l.b16 %v3897
  %v4145 = vunpack.c.h.b16 %v3897
  %v4146 = vunpack.c.l.b16 %v3898
  %v4147 = vunpack.c.l.b16 %v3899
  %v4148 = vunpack.c.h.b16 %v3899
  %v4149 = vunpack.c.l.b16 %v3900
  %v4150 = vunpack.c.l.b16 %v3901
  %v4151 = vunpack.c.h.b16 %v3901
  %v4152 = vunpack.c.l.b16 %v3902
  %v4153 = vunpack.c.l.b16 %v3903
  %v4154 = vunpack.c.h.b16 %v3903
  %v4155 = vunpack.c.l.b16 %v3904
  %v4156 = vunpack.c.l.b16 %v3905
  %v4157 = vunpack.c.h.b16 %v3905
  %v4158 = vunpack.c.l.b16 %v3906
  %v4159 = vunpack.c.l.b16 %v3907
  %v4160 = vunpack.c.h.b16 %v3907
  %v4161 = vunpack.c.l.b16 %v3908
  %v4162 = vunpack.c.l.b16 %v3909
  %v4163 = vunpack.c.h.b16 %v3909
  %v4164 = vunpack.c.l.b16 %v3910
  %v4165 = vunpack.c.l.b16 %v3911
  %v4166 = vunpack.c.h.b16 %v3911
  %v4167 = vunpack.c.l.b16 %v3912
  %v4168 = vunpack.c.l.b16 %v3913
  %v4169 = vunpack.c.h.b16 %v3913
  %v4170 = vunpack.c.l.b16 %v3914
  %v4171 = vunpack.c.l.b16 %v3915
  %v4172 = vunpack.c.h.b16 %v3915
  %v4173 = vunpack.c.l.b16 %v3916
  %v4174 = vunpack.c.l.b16 %v3917
  %v4175 = vunpack.c.h.b16 %v3917
  %v4176 = vunpack.c.l.b16 %v3918
  %v4177 = vunpack.c.l.b16 %v3919
  %v4178 = vunpack.c.h.b16 %v3919
  %v4179 = vunpack.c.l.b16 %v3920
  %v4180 = vunpack.c.l.b16 %v3921
  %v4181 = vunpack.c.h.b16 %v3921
  %v4182 = vunpack.c.l.b16 %v3922
  %v4183 = vpack.c.b16 %v4030, %v4027
  %v4184 = vpack.c.b16 %v4031, %v4028
  %v4185 = vpack.c.b16 %v4032, %v4029
  %v4186 = vpack.c.b16 %v4036, %v4033
  %v4187 = vpack.c.b16 %v4037, %v4034
  %v4188 = vpack.c.b16 %v4038, %v4035
  %v4189 = vpack.c.b16 %v4042, %v4039
  %v4190 = vpack.c.b16 %v4043, %v4040
  %v4191 = vpack.c.b16 %v4044, %v4041
  %v4192 = vpack.c.b16 %v4048, %v4045
  %v4193 = vpack.c.b16 %v4049, %v4046
  %v4194 = vpack.c.b16 %v4050, %v4047
  %v4195 = vpack.c.b16 %v4054, %v4051
  %v4196 = vpack.c.b16 %v4055, %v4052
  %v4197 = vpack.c.b16 %v4056, %v4053
  %v4198 = vpack.c.b16 %v4060, %v4057
  %v4199 = vpack.c.b16 %v4061, %v4058
  %v4200 = vpack.c.b16 %v4062, %v4059
  %v4201 = vpack.c.b16 %v4066, %v4063
  %v4202 = vpack.c.b16 %v4067, %v4064
  %v4203 = vpack.c.b16 %v4068, %v4065
  %v4204 = vpack.c.b16 %v4072, %v4069
  %v4205 = vpack.c.b16 %v4073, %v4070
  %v4206 = vpack.c.b16 %v4074, %v4071
  %v4207 = vpack.c.b16 %v4078, %v4075
  %v4208 = vpack.c.b16 %v4079, %v4076
  %v4209 = vpack.c.b16 %v4080, %v4077
  %v4210 = vpack.c.b16 %v4084, %v4081
  %v4211 = vpack.c.b16 %v4085, %v4082
  %v4212 = vpack.c.b16 %v4086, %v4083
  %v4213 = vpack.c.b16 %v4090, %v4087
  %v4214 = vpack.c.b16 %v4091, %v4088
  %v4215 = vpack.c.b16 %v4092, %v4089
  %v4216 = vpack.c.b16 %v4096, %v4093
  %v4217 = vpack.c.b16 %v4097, %v4094
  %v4218 = vpack.c.b16 %v4098, %v4095
  %v4219 = vpack.c.b16 %v4102, %v4099
  %v4220 = vpack.c.b16 %v4103, %v4100
  %v4221 = vpack.c.b16 %v4104, %v4101
  %v4222 = vpack.c.b16 %v4108, %v4105
  %v4223 = vpack.c.b16 %v4109, %v4106
  %v4224 = vpack.c.b16 %v4110, %v4107
  %v4225 = vpack.c.b16 %v4114, %v4111
  %v4226 = vpack.c.b16 %v4115, %v4112
  %v4227 = vpack.c.b16 %v4116, %v4113
  %v4228 = vpack.c.b16 %v4120, %v4117
  %v4229 = vpack.c.b16 %v4121, %v4118
  %v4230 = vpack.c.b16 %v4122, %v4119
  %v4231 = vpack.c.b16 %v4126, %v4123
  %v4232 = vpack.c.b16 %v4127, %v4124
  %v4233 = vpack.c.b16 %v4128, %v4125
  %v4234 = vpack.c.b16 %v4132, %v4129
  %v4235 = vpack.c.b16 %v4133, %v4130
  %v4236 = vpack.c.b16 %v4134, %v4131
  %v4237 = vpack.c.b16 %v4138, %v4135
  %v4238 = vpack.c.b16 %v4139, %v4136
  %v4239 = vpack.c.b16 %v4140, %v4137
  %v4240 = vpack.c.b16 %v4144, %v4141
  %v4241 = vpack.c.b16 %v4145, %v4142
  %v4242 = vpack.c.b16 %v4146, %v4143
  %v4243 = vpack.c.b16 %v4150, %v4147
  %v4244 = vpack.c.b16 %v4151, %v4148
  %v4245 = vpack.c.b16 %v4152, %v4149
  %v4246 = vpack.c.b16 %v4156, %v4153
  %v4247 = vpack.c.b16 %v4157, %v4154
  %v4248 = vpack.c.b16 %v4158, %v4155
  %v4249 = vpack.c.b16 %v4162, %v4159
  %v4250 = vpack.c.b16 %v4163, %v4160
  %v4251 = vpack.c.b16 %v4164, %v4161
  %v4252 = vpack.c.b16 %v4168, %v4165
  %v4253 = vpack.c.b16 %v4169, %v4166
  %v4254 = vpack.c.b16 %v4170, %v4167
  %v4255 = vpack.c.b16 %v4174, %v4171
  %v4256 = vpack.c.b16 %v4175, %v4172
  %v4257 = vpack.c.b16 %v4176, %v4173
  %v4258 = vpack.c.b16 %v4180, %v4177
  %v4259 = vpack.c.b16 %v4181, %v4178
  %v4260 = vpack.c.b16 %v4182, %v4179
  %v4340 = vsel %vm2699, %v3809, 0
  %v4343 = vsel %vm2699, %v3813, 0
  %v4346 = vsel %vm2699, %v3817, 0
  %4348 = vmatpush.bf16.msra.mxu0 %v4204
  %4349 = vmatpush.bf16.msra.mxu0 %v4201
  %4350 = vmatpush.bf16.msra.mxu0 %v4198
  %4351 = vmatpush.bf16.msra.mxu0 %v4195
  %4352 = vmatpush.bf16.msra.mxu0 %v4192
  %4353 = vmatpush.bf16.msra.mxu0 %v4189
  %4354 = vmatpush.bf16.msra.mxu0 %v4186
  %4355 = vmatpush.bf16.msra.mxu0 %v4183
  %4356 = vmatmul.bf16.gmra.mxu0 %v3806
  %v4357 = vpop.f32.mrf.mxu0
  %v4358 = vadd.f32 0.0, %v4357
  %v4359 = vpop.f32.mrf.mxu0
  %v4360 = vadd.f32 0.0, %v4359
  %4361 = vmatmul.bf16.gmra.mxu0 %v3810
  %v4362 = vpop.f32.mrf.mxu0
  %v4363 = vadd.f32 0.0, %v4362
  %v4364 = vpop.f32.mrf.mxu0
  %v4365 = vadd.f32 0.0, %v4364
  %4366 = vmatmul.bf16.gmra.mxu0 %v3814
  %v4367 = vpop.f32.mrf.mxu0
  %v4368 = vadd.f32 0.0, %v4367
  %v4369 = vpop.f32.mrf.mxu0
  %4370 = vdwg.mxu0
  %4371 = vmatpush.bf16.msra.mxu0 %v4228
  %4372 = vmatpush.bf16.msra.mxu0 %v4225
  %4373 = vmatpush.bf16.msra.mxu0 %v4222
  %4374 = vmatpush.bf16.msra.mxu0 %v4219
  %4375 = vmatpush.bf16.msra.mxu0 %v4216
  %4376 = vmatpush.bf16.msra.mxu0 %v4213
  %4377 = vmatpush.bf16.msra.mxu0 %v4210
  %4378 = vmatpush.bf16.msra.mxu0 %v4207
  %4379 = vmatmul.bf16.gmra.mxu0 %v3807
  %v4380 = vpop.f32.mrf.mxu0
  %v4381 = vadd.f32 %v4358, %v4380
  %v4382 = vpop.f32.mrf.mxu0
  %v4383 = vadd.f32 %v4360, %v4382
  %4384 = vmatmul.bf16.gmra.mxu0 %v3811
  %v4385 = vpop.f32.mrf.mxu0
  %v4386 = vadd.f32 %v4363, %v4385
  %v4387 = vpop.f32.mrf.mxu0
  %v4388 = vadd.f32 %v4365, %v4387
  %4389 = vmatmul.bf16.gmra.mxu0 %v3815
  %v4390 = vpop.f32.mrf.mxu0
  %v4391 = vadd.f32 %v4368, %v4390
  %v4392 = vpop.f32.mrf.mxu0
  %4393 = vdwg.mxu0
  %4394 = vmatpush.bf16.msra.mxu0 %v4252
  %4395 = vmatpush.bf16.msra.mxu0 %v4249
  %4396 = vmatpush.bf16.msra.mxu0 %v4246
  %4397 = vmatpush.bf16.msra.mxu0 %v4243
  %4398 = vmatpush.bf16.msra.mxu0 %v4240
  %4399 = vmatpush.bf16.msra.mxu0 %v4237
  %4400 = vmatpush.bf16.msra.mxu0 %v4234
  %4401 = vmatpush.bf16.msra.mxu0 %v4231
  %4402 = vmatmul.bf16.gmra.mxu0 %v3808
  %v4403 = vpop.f32.mrf.mxu0
  %v4404 = vadd.f32 %v4381, %v4403
  %v4405 = vpop.f32.mrf.mxu0
  %v4406 = vadd.f32 %v4383, %v4405
  %4407 = vmatmul.bf16.gmra.mxu0 %v3812
  %v4408 = vpop.f32.mrf.mxu0
  %v4409 = vadd.f32 %v4386, %v4408
  %v4410 = vpop.f32.mrf.mxu0
  %v4411 = vadd.f32 %v4388, %v4410
  %4412 = vmatmul.bf16.gmra.mxu0 %v3816
  %v4413 = vpop.f32.mrf.mxu0
  %v4414 = vadd.f32 %v4391, %v4413
  %v4415 = vpop.f32.mrf.mxu0
  %4416 = vdwg.mxu0
  %4417 = vmatpush.bf16.msra.mxu0 0
  %4418 = vmatpush.bf16.msra.mxu0 0
  %4419 = vmatpush.bf16.msra.mxu0 0
  %4420 = vmatpush.bf16.msra.mxu0 0
  %4421 = vmatpush.bf16.msra.mxu0 0
  %4422 = vmatpush.bf16.msra.mxu0 0
  %4423 = vmatpush.bf16.msra.mxu0 %v4258
  %4424 = vmatpush.bf16.msra.mxu0 %v4255
  %4425 = vmatmul.bf16.gmra.mxu0 %v4340
  %v4426 = vpop.f32.mrf.mxu0
  %v4427 = vadd.f32 %v4404, %v4426
  %v4428 = vpop.f32.mrf.mxu0
  %v4429 = vadd.f32 %v4406, %v4428
  %4430 = vmatmul.bf16.gmra.mxu0 %v4343
  %v4431 = vpop.f32.mrf.mxu0
  %v4432 = vadd.f32 %v4409, %v4431
  %v4433 = vpop.f32.mrf.mxu0
  %v4434 = vadd.f32 %v4411, %v4433
  %4435 = vmatmul.bf16.gmra.mxu0 %v4346
  %v4436 = vpop.f32.mrf.mxu0
  %v4437 = vadd.f32 %v4414, %v4436
  %v4438 = vpop.f32.mrf.mxu0
  %4439 = vdwg.mxu0
  %4440 = vmatpush.bf16.msra.mxu0 %v4205
  %4441 = vmatpush.bf16.msra.mxu0 %v4202
  %4442 = vmatpush.bf16.msra.mxu0 %v4199
  %4443 = vmatpush.bf16.msra.mxu0 %v4196
  %4444 = vmatpush.bf16.msra.mxu0 %v4193
  %4445 = vmatpush.bf16.msra.mxu0 %v4190
  %4446 = vmatpush.bf16.msra.mxu0 %v4187
  %4447 = vmatpush.bf16.msra.mxu0 %v4184
  %4448 = vmatmul.bf16.gmra.mxu0 %v3806
  %v4449 = vpop.f32.mrf.mxu0
  %v4450 = vadd.f32 0.0, %v4449
  %v4451 = vpop.f32.mrf.mxu0
  %v4452 = vadd.f32 0.0, %v4451
  %4453 = vmatmul.bf16.gmra.mxu0 %v3810
  %v4454 = vpop.f32.mrf.mxu0
  %v4455 = vadd.f32 0.0, %v4454
  %v4456 = vpop.f32.mrf.mxu0
  %v4457 = vadd.f32 0.0, %v4456
  %4458 = vmatmul.bf16.gmra.mxu0 %v3814
  %v4459 = vpop.f32.mrf.mxu0
  %v4460 = vadd.f32 0.0, %v4459
  %v4461 = vpop.f32.mrf.mxu0
  %4462 = vdwg.mxu0
  %4463 = vmatpush.bf16.msra.mxu0 %v4229
  %4464 = vmatpush.bf16.msra.mxu0 %v4226
  %4465 = vmatpush.bf16.msra.mxu0 %v4223
  %4466 = vmatpush.bf16.msra.mxu0 %v4220
  %4467 = vmatpush.bf16.msra.mxu0 %v4217
  %4468 = vmatpush.bf16.msra.mxu0 %v4214
  %4469 = vmatpush.bf16.msra.mxu0 %v4211
  %4470 = vmatpush.bf16.msra.mxu0 %v4208
  %4471 = vmatmul.bf16.gmra.mxu0 %v3807
  %v4472 = vpop.f32.mrf.mxu0
  %v4473 = vadd.f32 %v4450, %v4472
  %v4474 = vpop.f32.mrf.mxu0
  %v4475 = vadd.f32 %v4452, %v4474
  %4476 = vmatmul.bf16.gmra.mxu0 %v3811
  %v4477 = vpop.f32.mrf.mxu0
  %v4478 = vadd.f32 %v4455, %v4477
  %v4479 = vpop.f32.mrf.mxu0
  %v4480 = vadd.f32 %v4457, %v4479
  %4481 = vmatmul.bf16.gmra.mxu0 %v3815
  %v4482 = vpop.f32.mrf.mxu0
  %v4483 = vadd.f32 %v4460, %v4482
  %v4484 = vpop.f32.mrf.mxu0
  %4485 = vdwg.mxu0
  %4486 = vmatpush.bf16.msra.mxu0 %v4253
  %4487 = vmatpush.bf16.msra.mxu0 %v4250
  %4488 = vmatpush.bf16.msra.mxu0 %v4247
  %4489 = vmatpush.bf16.msra.mxu0 %v4244
  %4490 = vmatpush.bf16.msra.mxu0 %v4241
  %4491 = vmatpush.bf16.msra.mxu0 %v4238
  %4492 = vmatpush.bf16.msra.mxu0 %v4235
  %4493 = vmatpush.bf16.msra.mxu0 %v4232
  %4494 = vmatmul.bf16.gmra.mxu0 %v3808
  %v4495 = vpop.f32.mrf.mxu0
  %v4496 = vadd.f32 %v4473, %v4495
  %v4497 = vpop.f32.mrf.mxu0
  %v4498 = vadd.f32 %v4475, %v4497
  %4499 = vmatmul.bf16.gmra.mxu0 %v3812
  %v4500 = vpop.f32.mrf.mxu0
  %v4501 = vadd.f32 %v4478, %v4500
  %v4502 = vpop.f32.mrf.mxu0
  %v4503 = vadd.f32 %v4480, %v4502
  %4504 = vmatmul.bf16.gmra.mxu0 %v3816
  %v4505 = vpop.f32.mrf.mxu0
  %v4506 = vadd.f32 %v4483, %v4505
  %v4507 = vpop.f32.mrf.mxu0
  %4508 = vdwg.mxu0
  %4509 = vmatpush.bf16.msra.mxu0 0
  %4510 = vmatpush.bf16.msra.mxu0 0
  %4511 = vmatpush.bf16.msra.mxu0 0
  %4512 = vmatpush.bf16.msra.mxu0 0
  %4513 = vmatpush.bf16.msra.mxu0 0
  %4514 = vmatpush.bf16.msra.mxu0 0
  %4515 = vmatpush.bf16.msra.mxu0 %v4259
  %4516 = vmatpush.bf16.msra.mxu0 %v4256
  %4517 = vmatmul.bf16.gmra.mxu0 %v4340
  %v4518 = vpop.f32.mrf.mxu0
  %v4519 = vadd.f32 %v4496, %v4518
  %v4520 = vpop.f32.mrf.mxu0
  %v4521 = vadd.f32 %v4498, %v4520
  %4522 = vmatmul.bf16.gmra.mxu0 %v4343
  %v4523 = vpop.f32.mrf.mxu0
  %v4524 = vadd.f32 %v4501, %v4523
  %v4525 = vpop.f32.mrf.mxu0
  %v4526 = vadd.f32 %v4503, %v4525
  %4527 = vmatmul.bf16.gmra.mxu0 %v4346
  %v4528 = vpop.f32.mrf.mxu0
  %v4529 = vadd.f32 %v4506, %v4528
  %v4530 = vpop.f32.mrf.mxu0
  %4531 = vdwg.mxu0
  %4532 = vmatpush.bf16.msra.mxu0 %v4206
  %4533 = vmatpush.bf16.msra.mxu0 %v4203
  %4534 = vmatpush.bf16.msra.mxu0 %v4200
  %4535 = vmatpush.bf16.msra.mxu0 %v4197
  %4536 = vmatpush.bf16.msra.mxu0 %v4194
  %4537 = vmatpush.bf16.msra.mxu0 %v4191
  %4538 = vmatpush.bf16.msra.mxu0 %v4188
  %4539 = vmatpush.bf16.msra.mxu0 %v4185
  %4540 = vmatmul.bf16.gmra.mxu0 %v3806
  %v4541 = vpop.f32.mrf.mxu0
  %v4542 = vadd.f32 0.0, %v4541
  %v4543 = vpop.f32.mrf.mxu0
  %v4544 = vadd.f32 0.0, %v4543
  %4545 = vmatmul.bf16.gmra.mxu0 %v3810
  %v4546 = vpop.f32.mrf.mxu0
  %v4547 = vadd.f32 0.0, %v4546
  %v4548 = vpop.f32.mrf.mxu0
  %v4549 = vadd.f32 0.0, %v4548
  %4550 = vmatmul.bf16.gmra.mxu0 %v3814
  %v4551 = vpop.f32.mrf.mxu0
  %v4552 = vadd.f32 0.0, %v4551
  %v4553 = vpop.f32.mrf.mxu0
  %4554 = vdwg.mxu0
  %4555 = vmatpush.bf16.msra.mxu0 %v4230
  %4556 = vmatpush.bf16.msra.mxu0 %v4227
  %4557 = vmatpush.bf16.msra.mxu0 %v4224
  %4558 = vmatpush.bf16.msra.mxu0 %v4221
  %4559 = vmatpush.bf16.msra.mxu0 %v4218
  %4560 = vmatpush.bf16.msra.mxu0 %v4215
  %4561 = vmatpush.bf16.msra.mxu0 %v4212
  %4562 = vmatpush.bf16.msra.mxu0 %v4209
  %4563 = vmatmul.bf16.gmra.mxu0 %v3807
  %v4564 = vpop.f32.mrf.mxu0
  %v4565 = vadd.f32 %v4542, %v4564
  %v4566 = vpop.f32.mrf.mxu0
  %v4567 = vadd.f32 %v4544, %v4566
  %4568 = vmatmul.bf16.gmra.mxu0 %v3811
  %v4569 = vpop.f32.mrf.mxu0
  %v4570 = vadd.f32 %v4547, %v4569
  %v4571 = vpop.f32.mrf.mxu0
  %v4572 = vadd.f32 %v4549, %v4571
  %4573 = vmatmul.bf16.gmra.mxu0 %v3815
  %v4574 = vpop.f32.mrf.mxu0
  %v4575 = vadd.f32 %v4552, %v4574
  %v4576 = vpop.f32.mrf.mxu0
  %4577 = vdwg.mxu0
  %4578 = vmatpush.bf16.msra.mxu0 %v4254
  %4579 = vmatpush.bf16.msra.mxu0 %v4251
  %4580 = vmatpush.bf16.msra.mxu0 %v4248
  %4581 = vmatpush.bf16.msra.mxu0 %v4245
  %4582 = vmatpush.bf16.msra.mxu0 %v4242
  %4583 = vmatpush.bf16.msra.mxu0 %v4239
  %4584 = vmatpush.bf16.msra.mxu0 %v4236
  %4585 = vmatpush.bf16.msra.mxu0 %v4233
  %4586 = vmatmul.bf16.gmra.mxu0 %v3808
  %v4587 = vpop.f32.mrf.mxu0
  %v4588 = vadd.f32 %v4565, %v4587
  %v4589 = vpop.f32.mrf.mxu0
  %v4590 = vadd.f32 %v4567, %v4589
  %4591 = vmatmul.bf16.gmra.mxu0 %v3812
  %v4592 = vpop.f32.mrf.mxu0
  %v4593 = vadd.f32 %v4570, %v4592
  %v4594 = vpop.f32.mrf.mxu0
  %v4595 = vadd.f32 %v4572, %v4594
  %4596 = vmatmul.bf16.gmra.mxu0 %v3816
  %v4597 = vpop.f32.mrf.mxu0
  %v4598 = vadd.f32 %v4575, %v4597
  %v4599 = vpop.f32.mrf.mxu0
  %4600 = vdwg.mxu0
  %4601 = vmatpush.bf16.msra.mxu0 0
  %4602 = vmatpush.bf16.msra.mxu0 0
  %4603 = vmatpush.bf16.msra.mxu0 0
  %4604 = vmatpush.bf16.msra.mxu0 0
  %4605 = vmatpush.bf16.msra.mxu0 0
  %4606 = vmatpush.bf16.msra.mxu0 0
  %4607 = vmatpush.bf16.msra.mxu0 %v4260
  %4608 = vmatpush.bf16.msra.mxu0 %v4257
  %4609 = vmatmul.bf16.gmra.mxu0 %v4340
  %v4610 = vpop.f32.mrf.mxu0
  %v4611 = vadd.f32 %v4588, %v4610
  %v4612 = vpop.f32.mrf.mxu0
  %v4613 = vadd.f32 %v4590, %v4612
  %4614 = vmatmul.bf16.gmra.mxu0 %v4343
  %v4615 = vpop.f32.mrf.mxu0
  %v4616 = vadd.f32 %v4593, %v4615
  %v4617 = vpop.f32.mrf.mxu0
  %v4618 = vadd.f32 %v4595, %v4617
  %4619 = vmatmul.bf16.gmra.mxu0 %v4346
  %v4620 = vpop.f32.mrf.mxu0
  %v4621 = vadd.f32 %v4598, %v4620
  %v4622 = vpop.f32.mrf.mxu0
  %4623 = vdwg.mxu0
  %v4624 = vadd.f32 %v3489, %v4427
  %v4625 = vadd.f32 %v3581, %v4519
  %v4626 = vadd.f32 %v3673, %v4611
  %v4627 = vadd.f32 %v3491, %v4429
  %v4628 = vadd.f32 %v3583, %v4521
  %v4629 = vadd.f32 %v3675, %v4613
  %v4630 = vadd.f32 %v3494, %v4432
  %v4631 = vadd.f32 %v3586, %v4524
  %v4632 = vadd.f32 %v3678, %v4616
  %v4633 = vadd.f32 %v3496, %v4434
  %v4634 = vadd.f32 %v3588, %v4526
  %v4635 = vadd.f32 %v3680, %v4618
  %v4636 = vadd.f32 %v3499, %v4437
  %v4637 = vadd.f32 %v3591, %v4529
  %v4638 = vadd.f32 %v3683, %v4621
  %v4639 = vld [vmem:[%s5] sm:$0x7]
  %v4641 = vperm.slane %v4639, 0
  %v4642 = vperm.slane %v4639, 1
  %v4643 = vperm.slane %v4639, 2
  %v4647 = vadd.f32 %v4624, %v4641
  %v4648 = vadd.f32 %v4625, %v4642
  %v4649 = vadd.f32 %v4626, %v4643
  %v4650 = vadd.f32 %v4627, %v4641
  %v4651 = vadd.f32 %v4628, %v4642
  %v4652 = vadd.f32 %v4629, %v4643
  %v4653 = vadd.f32 %v4630, %v4641
  %v4654 = vadd.f32 %v4631, %v4642
  %v4655 = vadd.f32 %v4632, %v4643
  %v4656 = vadd.f32 %v4633, %v4641
  %v4657 = vadd.f32 %v4634, %v4642
  %v4658 = vadd.f32 %v4635, %v4643
  %v4659 = vadd.f32 %v4636, %v4641
  %v4660 = vadd.f32 %v4637, %v4642
  %v4661 = vadd.f32 %v4638, %v4643
  %v4662 = vmax.f32 %v4647, 0.0
  %v4663 = vmax.f32 %v4648, 0.0
  %v4664 = vmax.f32 %v4649, 0.0
  %v4665 = vmax.f32 %v4650, 0.0
  %v4666 = vmax.f32 %v4651, 0.0
  %v4667 = vmax.f32 %v4652, 0.0
  %v4668 = vmax.f32 %v4653, 0.0
  %v4669 = vmax.f32 %v4654, 0.0
  %v4670 = vmax.f32 %v4655, 0.0
  %v4671 = vmax.f32 %v4656, 0.0
  %v4672 = vmax.f32 %v4657, 0.0
  %v4673 = vmax.f32 %v4658, 0.0
  %v4674 = vmax.f32 %v4659, 0.0
  %v4675 = vmax.f32 %v4660, 0.0
  %v4676 = vmax.f32 %v4661, 0.0
  %v4677 = vpack.c.bf16 %v4665, %v4662
  %v4678 = vpack.c.bf16 %v4666, %v4663
  %v4679 = vpack.c.bf16 %v4667, %v4664
  %v4680 = vpack.c.bf16 %v4671, %v4668
  %v4681 = vpack.c.bf16 %v4672, %v4669
  %v4682 = vpack.c.bf16 %v4673, %v4670
  %v4683 = vpack.c.bf16 %v4674, %v4674
  %v4684 = vpack.c.bf16 %v4675, %v4675
  %v4685 = vpack.c.bf16 %v4676, %v4676
  %v4686 = vld [vmem:[%s6] sm:$0xf]
  %v4687 = vld [vmem:[%s6 + $0x4] sm:$0xf]
  %v4688 = vld [vmem:[%s6 + $0x8] sm:$0xf]
  %v4689 = vld [vmem:[%s6 + $0xc] sm:$0xf]
  %v4690 = vld [vmem:[%s6 + $0x10] sm:$0xf]
  %v4691 = vld [vmem:[%s6 + $0x14] sm:$0xf]
  %v4692 = vld [vmem:[%s6 + $0x18] sm:$0xf]
  %v4693 = vld [vmem:[%s6 + $0x1c] sm:$0xf]
  %v4694 = vld [vmem:[%s6 + $0x20] sm:$0xf]
  %v4695 = vld [vmem:[%s6 + $0x24] sm:$0xf]
  %v4696 = vld [vmem:[%s6 + $0x28] sm:$0xf]
  %v4697 = vld [vmem:[%s6 + $0x2c] sm:$0xf]
  %v4698 = vld [vmem:[%s6 + $0x30] sm:$0xf]
  %v4699 = vld [vmem:[%s6 + $0x34] sm:$0xf]
  %v4700 = vld [vmem:[%s6 + $0x38] sm:$0xf]
  %v4701 = vld [vmem:[%s6 + $0x3c] sm:$0xf]
  %v4702 = vld [vmem:[%s6 + $0x40] sm:$0xf]
  %v4703 = vld [vmem:[%s6 + $0x44] sm:$0xf]
  %v4704 = vld [vmem:[%s6 + $0x48] sm:$0xf]
  %v4705 = vld [vmem:[%s6 + $0x4c] sm:$0xf]
  %v4706 = vld [vmem:[%s6 + $0x50] sm:$0xf]
  %v4707 = vld [vmem:[%s6 + $0x54] sm:$0xf]
  %v4708 = vld [vmem:[%s6 + $0x58] sm:$0xf]
  %v4709 = vld [vmem:[%s6 + $0x5c] sm:$0xf]
  %v4710 = vld [vmem:[%s6 + $0x60] sm:$0xf]
  %v4711 = vld [vmem:[%s6 + $0x64] sm:$0xf]
  %v4712 = vld [vmem:[%s6 + $0x68] sm:$0xf]
  %v4713 = vld [vmem:[%s6 + $0x6c] sm:$0xf]
  %v4714 = vld [vmem:[%s6 + $0x70] sm:$0xf]
  %v4715 = vld [vmem:[%s6 + $0x74] sm:$0xf]
  %v4716 = vld [vmem:[%s6 + $0x78] sm:$0xf]
  %v4717 = vld [vmem:[%s6 + $0x7c] sm:$0xf]
  %v4718 = vld [vmem:[%s6 + $0x80] sm:$0xf]
  %v4719 = vld [vmem:[%s6 + $0x84] sm:$0xf]
  %v4720 = vld [vmem:[%s6 + $0x88] sm:$0xf]
  %v4721 = vld [vmem:[%s6 + $0x8c] sm:$0xf]
  %v4722 = vld [vmem:[%s6 + $0x90] sm:$0xf]
  %v4723 = vld [vmem:[%s6 + $0x94] sm:$0xf]
  %v4724 = vld [vmem:[%s6 + $0x98] sm:$0xf]
  %v4725 = vld [vmem:[%s6 + $0x9c] sm:$0xf]
  %v4766 = vunpack.c.l.b16 %v4686
  %v4767 = vunpack.c.l.b16 %v4687
  %v4768 = vunpack.c.l.b16 %v4688
  %v4769 = vunpack.c.l.b16 %v4689
  %v4770 = vunpack.c.l.b16 %v4690
  %v4771 = vunpack.c.l.b16 %v4691
  %v4772 = vunpack.c.l.b16 %v4692
  %v4773 = vunpack.c.l.b16 %v4693
  %v4774 = vunpack.c.l.b16 %v4694
  %v4775 = vunpack.c.l.b16 %v4695
  %v4776 = vunpack.c.l.b16 %v4696
  %v4777 = vunpack.c.l.b16 %v4697
  %v4778 = vunpack.c.l.b16 %v4698
  %v4779 = vunpack.c.l.b16 %v4699
  %v4780 = vunpack.c.l.b16 %v4700
  %v4781 = vunpack.c.l.b16 %v4701
  %v4782 = vunpack.c.l.b16 %v4702
  %v4783 = vunpack.c.l.b16 %v4703
  %v4784 = vunpack.c.l.b16 %v4704
  %v4785 = vunpack.c.l.b16 %v4705
  %v4786 = vunpack.c.l.b16 %v4706
  %v4787 = vunpack.c.l.b16 %v4707
  %v4788 = vunpack.c.l.b16 %v4708
  %v4789 = vunpack.c.l.b16 %v4709
  %v4790 = vunpack.c.l.b16 %v4710
  %v4791 = vunpack.c.l.b16 %v4711
  %v4792 = vunpack.c.l.b16 %v4712
  %v4793 = vunpack.c.l.b16 %v4713
  %v4794 = vunpack.c.l.b16 %v4714
  %v4795 = vunpack.c.l.b16 %v4715
  %v4796 = vunpack.c.l.b16 %v4716
  %v4797 = vunpack.c.l.b16 %v4717
  %v4798 = vunpack.c.l.b16 %v4718
  %v4799 = vunpack.c.l.b16 %v4719
  %v4800 = vunpack.c.l.b16 %v4720
  %v4801 = vunpack.c.l.b16 %v4721
  %v4802 = vunpack.c.l.b16 %v4722
  %v4803 = vunpack.c.l.b16 %v4723
  %v4804 = vunpack.c.l.b16 %v4724
  %v4805 = vunpack.c.l.b16 %v4725
  %v4806 = vpack.c.b16 %v4767, %v4766
  %v4807 = vpack.c.b16 %v4769, %v4768
  %v4808 = vpack.c.b16 %v4771, %v4770
  %v4809 = vpack.c.b16 %v4773, %v4772
  %v4810 = vpack.c.b16 %v4775, %v4774
  %v4811 = vpack.c.b16 %v4777, %v4776
  %v4812 = vpack.c.b16 %v4779, %v4778
  %v4813 = vpack.c.b16 %v4781, %v4780
  %v4814 = vpack.c.b16 %v4783, %v4782
  %v4815 = vpack.c.b16 %v4785, %v4784
  %v4816 = vpack.c.b16 %v4787, %v4786
  %v4817 = vpack.c.b16 %v4789, %v4788
  %v4818 = vpack.c.b16 %v4791, %v4790
  %v4819 = vpack.c.b16 %v4793, %v4792
  %v4820 = vpack.c.b16 %v4795, %v4794
  %v4821 = vpack.c.b16 %v4797, %v4796
  %v4822 = vpack.c.b16 %v4799, %v4798
  %v4823 = vpack.c.b16 %v4801, %v4800
  %v4824 = vpack.c.b16 %v4803, %v4802
  %v4825 = vpack.c.b16 %v4805, %v4804
  %vm4846 = vcmask 523264
  %v4848 = vsel %vm4846, %v4679, 0
  %v4851 = vsel %vm4846, %v4682, 0
  %v4854 = vsel %vm4846, %v4685, 0
  %4856 = vmatpush.bf16.msra.mxu0 %v4813
  %4857 = vmatpush.bf16.msra.mxu0 %v4812
  %4858 = vmatpush.bf16.msra.mxu0 %v4811
  %4859 = vmatpush.bf16.msra.mxu0 %v4810
  %4860 = vmatpush.bf16.msra.mxu0 %v4809
  %4861 = vmatpush.bf16.msra.mxu0 %v4808
  %4862 = vmatpush.bf16.msra.mxu0 %v4807
  %4863 = vmatpush.bf16.msra.mxu0 %v4806
  %4864 = vmatmul.bf16.gmra.mxu0 %v4677
  %v4865 = vpop.f32.mrf.mxu0
  %v4866 = vadd.f32 0.0, %v4865
  %v4867 = vpop.f32.mrf.mxu0
  %v4868 = vadd.f32 0.0, %v4867
  %4869 = vmatmul.bf16.gmra.mxu0 %v4680
  %v4870 = vpop.f32.mrf.mxu0
  %v4871 = vadd.f32 0.0, %v4870
  %v4872 = vpop.f32.mrf.mxu0
  %v4873 = vadd.f32 0.0, %v4872
  %4874 = vmatmul.bf16.gmra.mxu0 %v4683
  %v4875 = vpop.f32.mrf.mxu0
  %v4876 = vadd.f32 0.0, %v4875
  %v4877 = vpop.f32.mrf.mxu0
  %4878 = vdwg.mxu0
  %4879 = vmatpush.bf16.msra.mxu0 %v4821
  %4880 = vmatpush.bf16.msra.mxu0 %v4820
  %4881 = vmatpush.bf16.msra.mxu0 %v4819
  %4882 = vmatpush.bf16.msra.mxu0 %v4818
  %4883 = vmatpush.bf16.msra.mxu0 %v4817
  %4884 = vmatpush.bf16.msra.mxu0 %v4816
  %4885 = vmatpush.bf16.msra.mxu0 %v4815
  %4886 = vmatpush.bf16.msra.mxu0 %v4814
  %4887 = vmatmul.bf16.gmra.mxu0 %v4678
  %v4888 = vpop.f32.mrf.mxu0
  %v4889 = vadd.f32 %v4866, %v4888
  %v4890 = vpop.f32.mrf.mxu0
  %v4891 = vadd.f32 %v4868, %v4890
  %4892 = vmatmul.bf16.gmra.mxu0 %v4681
  %v4893 = vpop.f32.mrf.mxu0
  %v4894 = vadd.f32 %v4871, %v4893
  %v4895 = vpop.f32.mrf.mxu0
  %v4896 = vadd.f32 %v4873, %v4895
  %4897 = vmatmul.bf16.gmra.mxu0 %v4684
  %v4898 = vpop.f32.mrf.mxu0
  %v4899 = vadd.f32 %v4876, %v4898
  %v4900 = vpop.f32.mrf.mxu0
  %4901 = vdwg.mxu0
  %4902 = vmatpush.bf16.msra.mxu0 0
  %4903 = vmatpush.bf16.msra.mxu0 0
  %4904 = vmatpush.bf16.msra.mxu0 0
  %4905 = vmatpush.bf16.msra.mxu0 0
  %4906 = vmatpush.bf16.msra.mxu0 %v4825
  %4907 = vmatpush.bf16.msra.mxu0 %v4824
  %4908 = vmatpush.bf16.msra.mxu0 %v4823
  %4909 = vmatpush.bf16.msra.mxu0 %v4822
  %4910 = vmatmul.bf16.gmra.mxu0 %v4848
  %v4911 = vpop.f32.mrf.mxu0
  %v4912 = vadd.f32 %v4889, %v4911
  %v4913 = vpop.f32.mrf.mxu0
  %v4914 = vadd.f32 %v4891, %v4913
  %4915 = vmatmul.bf16.gmra.mxu0 %v4851
  %v4916 = vpop.f32.mrf.mxu0
  %v4917 = vadd.f32 %v4894, %v4916
  %v4918 = vpop.f32.mrf.mxu0
  %v4919 = vadd.f32 %v4896, %v4918
  %4920 = vmatmul.bf16.gmra.mxu0 %v4854
  %v4921 = vpop.f32.mrf.mxu0
  %v4922 = vadd.f32 %v4899, %v4921
  %v4923 = vpop.f32.mrf.mxu0
  %4924 = vdwg.mxu0
  %v4925 = vld [vmem:[%s7] sm:$0xf]
  %v4926 = vld [vmem:[%s7 + $0x4] sm:$0xf]
  %v4927 = vpack.c.bf16 %v4914, %v4912
  %v4928 = vpack.c.bf16 %v4919, %v4917
  %v4929 = vpack.c.bf16 %v4922, %v4922
  %v4932 = vunpack.c.l.b16 %v4925
  %v4933 = vunpack.c.l.b16 %v4926
  %v4934 = vpack.c.b16 %v4933, %v4932
  %vm4935 = vcmask 326656
  %v4937 = vsel %vm4935, %v4934, 0
  %vm4939 = vcmask 1043456
  %v4941 = vsel %vm4939, %v4929, 0
  %4943 = vmatpush.bf16.msra.mxu0 0
  %4944 = vmatpush.bf16.msra.mxu0 0
  %4945 = vmatpush.bf16.msra.mxu0 0
  %4946 = vmatpush.bf16.msra.mxu0 0
  %4947 = vmatpush.bf16.msra.mxu0 0
  %4948 = vmatpush.bf16.msra.mxu0 %v4941
  %4949 = vmatpush.bf16.msra.mxu0 %v4928
  %4950 = vmatpush.bf16.msra.mxu0 %v4927
  %4951 = vmatmul.bf16.gmra.mxu0 %v4937
  %v4952 = vpop.f32.mrf.mxu0
  %v4953 = vadd.f32 0.0, %v4952
  %v4954 = vpop.f32.mrf.mxu0
  %v4955 = vadd.f32 0.0, %v4954
  %4956 = vdwg.mxu0
  %4957 = vst [vmem:[%s8] sm:$0xff] %v4953
  %4958 = vst [vmem:[%s8 + $0x8] sm:$0xff] %v4955
  // Predicated region
  $region34: #{simple_cnn_forward.1} parent=0 // pred_check
    _
  $region35: #{simple_cnn_forward.1} parent=0 // pred_check_branch
    %4960 = sbr.rel (0) target = $region37
  $region36: #{simple_cnn_forward.1} parent=0 // pred_region
    _
  $region37: #{simple_cnn_forward.1} parent=0 // pred_fallthru
    _
  // Predicated region
  $region38: #{simple_cnn_forward.1} parent=0 // pred_check
    _
  $region39: #{simple_cnn_forward.1} parent=0 // pred_check_branch
    %4962 = sbr.rel (0) target = $region41
  $region40: #{simple_cnn_forward.1} parent=0 // pred_region
    _
  $region41: #{simple_cnn_forward.1} parent=0 // pred_fallthru
    _

</llo_original>
